<compile_context>
chip_gen: v5e
topology: v5e:2x2
jax: 0.10.0
libtpu: 0.0.40
codegen_flags: <defaults>
</compile_context>

<pallas_src>
import math

import jax
import jax.numpy as jnp
from jax import lax
from jax.experimental import pallas as pl
from jax.experimental.pallas import tpu as pltpu


# ----------------------------------------------------------------------------
# Fused kernel: LSTM stack (PyTorch gate order i, f, g, o) + attention + head
# ----------------------------------------------------------------------------
def _talstm_kernel(x_ref, wih0_ref, wihr_ref, whh_ref, b_ref, wout_ref, bout_ref,
                   out_ref, xp_scr, rflat_scr, rattn_scr, h_scr, c_scr):
    """Shapes:
      x_ref    : (T*B, D)            time-major flattened input (row = t*B + b)
      wih0_ref : (D, 4H)             layer-0 input weights
      wihr_ref : (max(L-1,1), H, 4H) input weights of layers 1..L-1
      whh_ref  : (L, H, 4H)          recurrent weights
      b_ref    : (L, 1, 4H)          combined b_ih + b_hh
      wout_ref : (1, T)              output head weights (pre-transposed row)
      bout_ref : (1, 1) SMEM         output head bias
      out_ref  : (B, 1)
      xp_scr   : (T*B, 4H)  hoisted input projection for the current layer
      rflat_scr: (T*B, H)   current-layer output, t-major (next layer's input)
      rattn_scr: (B*T, H)   last-layer output, b-major (attention input)
      h_scr/c_scr: (B, H)   recurrent state
    """
    B, H = h_scr.shape
    TB = x_ref.shape[0]
    T = TB // B
    L = whh_ref.shape[0]

    def run_layer(layer, is_last):
        whh_l = whh_ref[layer]                    # (H, 4H), loop-invariant load
        h_scr[...] = jnp.zeros_like(h_scr)
        c_scr[...] = jnp.zeros_like(c_scr)

        def step(t, carry):
            row = t * B
            gates = xp_scr[pl.ds(row, B), :] + jnp.dot(
                h_scr[...], whh_l, preferred_element_type=jnp.float32)   # (B, 4H)
            sig = jax.nn.sigmoid(gates)           # one full-width EUP pass: i, f, o
            th = jnp.tanh(gates)                  # one full-width EUP pass: g
            i_g = sig[:, 0 * H:1 * H]
            f_g = sig[:, 1 * H:2 * H]
            g_g = th[:, 2 * H:3 * H]
            o_g = sig[:, 3 * H:4 * H]
            c_new = f_g * c_scr[...] + i_g * g_g
            h_new = o_g * jnp.tanh(c_new)
            c_scr[...] = c_new
            h_scr[...] = h_new
            if is_last:
                # b-major rows so the attention reads per-batch contiguously
                for bb in range(B):
                    rattn_scr[pl.ds(bb * T + t, 1), :] = h_new[bb:bb + 1, :]
            else:
                rflat_scr[pl.ds(row, B), :] = h_new     # t-major for next layer
            return carry

        lax.fori_loop(0, T, step, 0, unroll=True)

    # ---- LSTM stack: input projection hoisted out of the serial recurrence ----
    xp_scr[...] = jnp.dot(x_ref[...], wih0_ref[...],
                          preferred_element_type=jnp.float32) + b_ref[0]
    run_layer(0, is_last=(L == 1))
    for l in range(1, L):
        xp_scr[...] = jnp.dot(rflat_scr[...], wihr_ref[l - 1],
                              preferred_element_type=jnp.float32) + b_ref[l]
        run_layer(l, is_last=(l == L - 1))

    # ---- attention + output head (per batch element; B is tiny & static) ----
    #   scores = r r^T / sqrt(H); alpha = softmax(scores)
    #   ctx[q] = sum_k alpha[q,k] * (sum_h r[k,h])   (algebraically == matmul+sum)
    #   out    = w_out^T @ alpha @ rs + b_out
    inv_sqrt_h = 1.0 / math.sqrt(H)
    wout_row = wout_ref[...]                       # (1, T), loop-invariant load
    bias = bout_ref[0, 0]
    for bb in range(B):
        r_b = rattn_scr[pl.ds(bb * T, T), :]       # (T, H)
        scores = lax.dot_general(
            r_b, r_b, (((1,), (1,)), ((), ())),
            preferred_element_type=jnp.float32) * inv_sqrt_h          # (T, T)
        m = jnp.max(scores, axis=-1, keepdims=True)
        e = jnp.exp(scores - m)
        alpha = e * pl.reciprocal(jnp.sum(e, axis=-1, keepdims=True), approx=True)
        rs = jnp.sum(r_b, axis=-1, keepdims=True)                     # (T, 1)
        wa = jnp.dot(wout_row, alpha, preferred_element_type=jnp.float32)  # (1, T)
        out_ref[pl.ds(bb, 1), :] = (
            jnp.dot(wa, rs, preferred_element_type=jnp.float32) + bias)    # (1, 1)


# ----------------------------------------------------------------------------
# Parameter init (deterministic, PyTorch-style uniform ranges), stacked layout
# ----------------------------------------------------------------------------
def init_params(key, dim, hidden, num_layers, seqlen):
    k = 1.0 / math.sqrt(hidden)
    keys = jax.random.split(key, num_layers + 1)
    wihs, whhs, bs = [], [], []
    for l in range(num_layers):
        in_dim = dim if l == 0 else hidden
        ks = jax.random.split(keys[l], 4)
        wihs.append(jax.random.uniform(ks[0], (in_dim, 4 * hidden), jnp.float32, -k, k))
        whhs.append(jax.random.uniform(ks[1], (hidden, 4 * hidden), jnp.float32, -k, k))
        b_ih = jax.random.uniform(ks[2], (4 * hidden,), jnp.float32, -k, k)
        b_hh = jax.random.uniform(ks[3], (4 * hidden,), jnp.float32, -k, k)
        bs.append((b_ih + b_hh)[None, :])
    wih0 = wihs[0]
    if num_layers > 1:
        wih_rest = jnp.stack(wihs[1:], axis=0)
    else:
        wih_rest = jnp.zeros((1, hidden, 4 * hidden), jnp.float32)   # dummy, unread
    whh = jnp.stack(whhs, axis=0)
    b = jnp.stack(bs, axis=0)
    k_out = 1.0 / math.sqrt(seqlen)
    ko = jax.random.split(keys[-1], 2)
    w_out = jax.random.uniform(ko[0], (seqlen, 1), jnp.float32, -k_out, k_out)
    b_out = jax.random.uniform(ko[1], (1, 1), jnp.float32, -k_out, k_out)
    return dict(wih0=wih0, wih_rest=wih_rest, whh=whh, b=b, w_out=w_out, b_out=b_out)


# ----------------------------------------------------------------------------
# Full forward (Two_linear=False branch) — single pallas_call
# ----------------------------------------------------------------------------
@jax.jit
def talstm_forward(x, params):
    """x: (B, T, D) batch-first -> (B, 1)."""
    B, T, D = x.shape
    L, H = params['whh'].shape[0], params['whh'].shape[1]

    # Only layout shuffles left: flatten the tiny raw input to time-major rows
    # and present the head weights as a lane-major row vector.
    x_flat = jnp.transpose(x.astype(jnp.float32), (1, 0, 2)).reshape(T * B, D)
    w_out_row = jnp.transpose(params['w_out'], (1, 0))               # (1, T)

    lstm_flops = (2 * T * B * (D + (L - 1) * H) * 4 * H        # hoisted projections
                  + 2 * L * T * B * H * 4 * H)                 # recurrent matmuls
    attn_flops = B * (2 * T * T * H + 2 * T * T + 4 * T)
    transcendentals = L * T * B * 9 * H + B * T * T
    bytes_accessed = 4 * (x_flat.size + params['wih0'].size + params['wih_rest'].size
                          + params['whh'].size + params['b'].size
                          + params['w_out'].size + params['b_out'].size + B)

    return pl.pallas_call(
        _talstm_kernel,
        out_shape=jax.ShapeDtypeStruct((B, 1), jnp.float32),
        in_specs=[pl.BlockSpec(memory_space=pltpu.MemorySpace.VMEM)] * 6
                 + [pl.BlockSpec(memory_space=pltpu.MemorySpace.SMEM)],
        out_specs=pl.BlockSpec(memory_space=pltpu.MemorySpace.VMEM),
        scratch_shapes=[
            pltpu.VMEM((T * B, 4 * H), jnp.float32),   # xp_scr
            pltpu.VMEM((T * B, H), jnp.float32),       # rflat_scr
            pltpu.VMEM((B * T, H), jnp.float32),       # rattn_scr
            pltpu.VMEM((B, H), jnp.float32),           # h state
            pltpu.VMEM((B, H), jnp.float32),           # c state
        ],
        cost_estimate=pl.CostEstimate(
            flops=int(lstm_flops + attn_flops),
            transcendentals=int(transcendentals),
            bytes_accessed=int(bytes_accessed)),
    )(x_flat, params['wih0'], params['wih_rest'], params['whh'], params['b'],
      w_out_row, params['b_out'])


# ----------------------------------------------------------------------------
# Pure-JAX reference (same math as the PyTorch module) for a correctness check
# ----------------------------------------------------------------------------
def ref_forward(x, params):
    B, T, _ = x.shape
    L, H = params['whh'].shape[0], params['whh'].shape[1]
    h_seq = x.astype(jnp.float32)
    for l in range(L):
        wih = params['wih0'] if l == 0 else params['wih_rest'][l - 1]
        whh = params['whh'][l]
        b = params['b'][l]
        h = jnp.zeros((B, H), jnp.float32)
        c = jnp.zeros((B, H), jnp.float32)
        outs = []
        for t in range(T):
            gates = h_seq[:, t] @ wih + h @ whh + b
            i = jax.nn.sigmoid(gates[:, :H])
            f = jax.nn.sigmoid(gates[:, H:2 * H])
            g = jnp.tanh(gates[:, 2 * H:3 * H])
            o = jax.nn.sigmoid(gates[:, 3 * H:])
            c = f * c + i * g
            h = o * jnp.tanh(c)
            outs.append(h)
        h_seq = jnp.stack(outs, axis=1)
    r = h_seq
    scores = jnp.einsum('bqh,bkh->bqk', r, r) / math.sqrt(H)
    alpha = jax.nn.softmax(scores, axis=-1)
    ctx = jnp.einsum('bqk,bkh->bqh', alpha, r).sum(axis=2)
    return ctx @ params['w_out'] + params['b_out']


if __name__ == "__main__":
    # Small shapes consistent with the module: batch=2, seqlen=8, dim=16,
    # hidden_size=32, num_layer=3, Two_linear=False.
    B, T, D, H, L = 2, 8, 16, 32, 3
    key = jax.random.PRNGKey(0)
    kx, kp = jax.random.split(key)
    x = jax.random.normal(kx, (B, T, D), dtype=jnp.float32)
    params = init_params(kp, dim=D, hidden=H, num_layers=L, seqlen=T)

    out = talstm_forward(x, params)
    jax.block_until_ready(out)

    ref = ref_forward(x, params)
    assert out.shape == (B, 1), out.shape
    assert jnp.allclose(out, ref, atol=2e-3, rtol=2e-3), (out, ref)

    print("KERNEL_OK")
</pallas_src>

<mosaic_0001>
module attributes {stable_mosaic.version = 11 : i64} {
  func.func @_talstm_kernel(%arg0: memref<16x16xf32, #tpu.memory_space<vmem>>, %arg1: memref<16x128xf32, #tpu.memory_space<vmem>>, %arg2: memref<2x32x128xf32, #tpu.memory_space<vmem>>, %arg3: memref<3x32x128xf32, #tpu.memory_space<vmem>>, %arg4: memref<3x1x128xf32, #tpu.memory_space<vmem>>, %arg5: memref<1x8xf32, #tpu.memory_space<vmem>>, %arg6: memref<1x1xf32, #tpu.memory_space<smem>>, %arg7: memref<2x1xf32, #tpu.memory_space<vmem>>, %arg8: memref<16x128xf32, #tpu.memory_space<vmem>>, %arg9: memref<16x32xf32, #tpu.memory_space<vmem>>, %arg10: memref<16x32xf32, #tpu.memory_space<vmem>>, %arg11: memref<2x32xf32, #tpu.memory_space<vmem>>, %arg12: memref<2x32xf32, #tpu.memory_space<vmem>>) attributes {dimension_semantics = [], scalar_prefetch = 0 : i64, scratch_operands = 5 : i64, tpu.core_type = #tpu.core_type<tc>} {
    %c0 = arith.constant 0 : index
    %c0_0 = arith.constant 0 : index
    %0 = vector.load %arg0[%c0, %c0_0] : memref<16x16xf32, #tpu.memory_space<vmem>>, vector<16x16xf32>
    %c0_1 = arith.constant 0 : index
    %c0_2 = arith.constant 0 : index
    %1 = vector.load %arg1[%c0_1, %c0_2] : memref<16x128xf32, #tpu.memory_space<vmem>>, vector<16x128xf32>
    %cst = arith.constant dense<0.000000e+00> : vector<16x128xf32>
    %2 = tpu.matmul %0, %1, %cst {dimension_numbers = #tpu.dot_dimension_numbers<[1], [0], [0], [1], [0, 0, 1, 1], [], []>} : vector<16x16xf32>, vector<16x128xf32>, vector<16x128xf32> -> vector<16x128xf32>
    %c0_3 = arith.constant 0 : index
    %c0_4 = arith.constant 0 : index
    %c0_5 = arith.constant 0 : index
    %3 = vector.load %arg4[%c0_3, %c0_4, %c0_5] : memref<3x1x128xf32, #tpu.memory_space<vmem>>, vector<1x1x128xf32>
    %4 = vector.shape_cast %3 : vector<1x1x128xf32> to vector<1x128xf32>
    %5 = vector.broadcast %4 : vector<1x128xf32> to vector<16x128xf32>
    %6 = arith.addf %2, %5 : vector<16x128xf32>
    %c0_6 = arith.constant 0 : index
    %c0_7 = arith.constant 0 : index
    %7 = vector.load %arg8[%c0_6, %c0_7] : memref<16x128xf32, #tpu.memory_space<vmem>>, vector<16x128xf32>
    tpu.vector_store %arg8[%c0_6, %c0_7], %6 {strides = array<i32>} : memref<16x128xf32, #tpu.memory_space<vmem>>, vector<16x128xf32>,
    %c0_8 = arith.constant 0 : index
    %c0_9 = arith.constant 0 : index
    %c0_10 = arith.constant 0 : index
    %8 = vector.load %arg3[%c0_8, %c0_9, %c0_10] : memref<3x32x128xf32, #tpu.memory_space<vmem>>, vector<1x32x128xf32>
    %9 = vector.shape_cast %8 : vector<1x32x128xf32> to vector<32x128xf32>
    %cst_11 = arith.constant 0.000000e+00 : f32
    %10 = vector.broadcast %cst_11 : f32 to vector<2x32xf32>
    %c0_12 = arith.constant 0 : index
    %c0_13 = arith.constant 0 : index
    %11 = vector.load %arg11[%c0_12, %c0_13] : memref<2x32xf32, #tpu.memory_space<vmem>>, vector<2x32xf32>
    tpu.vector_store %arg11[%c0_12, %c0_13], %10 {strides = array<i32>} : memref<2x32xf32, #tpu.memory_space<vmem>>, vector<2x32xf32>,
    %cst_14 = arith.constant 0.000000e+00 : f32
    %12 = vector.broadcast %cst_14 : f32 to vector<2x32xf32>
    %c0_15 = arith.constant 0 : index
    %c0_16 = arith.constant 0 : index
    %13 = vector.load %arg12[%c0_15, %c0_16] : memref<2x32xf32, #tpu.memory_space<vmem>>, vector<2x32xf32>
    tpu.vector_store %arg12[%c0_15, %c0_16], %12 {strides = array<i32>} : memref<2x32xf32, #tpu.memory_space<vmem>>, vector<2x32xf32>,
    %c0_i32 = arith.constant 0 : i32
    %c2_i32 = arith.constant 2 : i32
    %14 = arith.muli %c0_i32, %c2_i32 : i32
    %15 = arith.index_cast %14 : i32 to index
    %c0_17 = arith.constant 0 : index
    %16 = vector.load %arg8[%15, %c0_17] : memref<16x128xf32, #tpu.memory_space<vmem>>, vector<2x128xf32>
    %c0_18 = arith.constant 0 : index
    %c0_19 = arith.constant 0 : index
    %17 = vector.load %arg11[%c0_18, %c0_19] : memref<2x32xf32, #tpu.memory_space<vmem>>, vector<2x32xf32>
    %cst_20 = arith.constant dense<0.000000e+00> : vector<2x128xf32>
    %18 = tpu.matmul %17, %9, %cst_20 {dimension_numbers = #tpu.dot_dimension_numbers<[1], [0], [0], [1], [0, 0, 1, 1], [], []>} : vector<2x32xf32>, vector<32x128xf32>, vector<2x128xf32> -> vector<2x128xf32>
    %19 = arith.addf %16, %18 : vector<2x128xf32>
    %20 = arith.negf %19 : vector<2x128xf32>
    %21 = math.exp %20 : vector<2x128xf32>
    %cst_21 = arith.constant 1.000000e+00 : f32
    %22 = vector.broadcast %cst_21 : f32 to vector<2x128xf32>
    %23 = arith.addf %22, %21 : vector<2x128xf32>
    %24 = arith.divf %22, %23 : vector<2x128xf32>
    %25 = math.tanh %19 : vector<2x128xf32>
    %26 = vector.extract_strided_slice %24 {offsets = [0, 0], sizes = [2, 32], strides = [1, 1]} : vector<2x128xf32> to vector<2x32xf32>
    %27 = vector.extract_strided_slice %24 {offsets = [0, 32], sizes = [2, 32], strides = [1, 1]} : vector<2x128xf32> to vector<2x32xf32>
    %28 = vector.extract_strided_slice %25 {offsets = [0, 64], sizes = [2, 32], strides = [1, 1]} : vector<2x128xf32> to vector<2x32xf32>
    %29 = vector.extract_strided_slice %24 {offsets = [0, 96], sizes = [2, 32], strides = [1, 1]} : vector<2x128xf32> to vector<2x32xf32>
    %c0_22 = arith.constant 0 : index
    %c0_23 = arith.constant 0 : index
    %30 = vector.load %arg12[%c0_22, %c0_23] : memref<2x32xf32, #tpu.memory_space<vmem>>, vector<2x32xf32>
    %31 = arith.mulf %27, %30 : vector<2x32xf32>
    %32 = arith.mulf %26, %28 : vector<2x32xf32>
    %33 = arith.addf %31, %32 : vector<2x32xf32>
    %34 = math.tanh %33 : vector<2x32xf32>
    %35 = arith.mulf %29, %34 : vector<2x32xf32>
    %c0_24 = arith.constant 0 : index
    %c0_25 = arith.constant 0 : index
    %36 = vector.load %arg12[%c0_24, %c0_25] : memref<2x32xf32, #tpu.memory_space<vmem>>, vector<2x32xf32>
    tpu.vector_store %arg12[%c0_24, %c0_25], %33 {strides = array<i32>} : memref<2x32xf32, #tpu.memory_space<vmem>>, vector<2x32xf32>,
    %c0_26 = arith.constant 0 : index
    %c0_27 = arith.constant 0 : index
    %37 = vector.load %arg11[%c0_26, %c0_27] : memref<2x32xf32, #tpu.memory_space<vmem>>, vector<2x32xf32>
    tpu.vector_store %arg11[%c0_26, %c0_27], %35 {strides = array<i32>} : memref<2x32xf32, #tpu.memory_space<vmem>>, vector<2x32xf32>,
    %38 = arith.index_cast %14 : i32 to index
    %c0_28 = arith.constant 0 : index
    %39 = vector.load %arg9[%38, %c0_28] : memref<16x32xf32, #tpu.memory_space<vmem>>, vector<2x32xf32>
    tpu.vector_store %arg9[%38, %c0_28], %35 {strides = array<i32>} : memref<16x32xf32, #tpu.memory_space<vmem>>, vector<2x32xf32>,
    %c1_i32 = arith.constant 1 : i32
    %c2_i32_29 = arith.constant 2 : i32
    %40 = arith.muli %c1_i32, %c2_i32_29 : i32
    %41 = arith.index_cast %40 : i32 to index
    %c0_30 = arith.constant 0 : index
    %42 = vector.load %arg8[%41, %c0_30] : memref<16x128xf32, #tpu.memory_space<vmem>>, vector<2x128xf32>
    %c0_31 = arith.constant 0 : index
    %c0_32 = arith.constant 0 : index
    %43 = vector.load %arg11[%c0_31, %c0_32] : memref<2x32xf32, #tpu.memory_space<vmem>>, vector<2x32xf32>
    %cst_33 = arith.constant dense<0.000000e+00> : vector<2x128xf32>
    %44 = tpu.matmul %43, %9, %cst_33 {dimension_numbers = #tpu.dot_dimension_numbers<[1], [0], [0], [1], [0, 0, 1, 1], [], []>} : vector<2x32xf32>, vector<32x128xf32>, vector<2x128xf32> -> vector<2x128xf32>
    %45 = arith.addf %42, %44 : vector<2x128xf32>
    %46 = arith.negf %45 : vector<2x128xf32>
    %47 = math.exp %46 : vector<2x128xf32>
    %cst_34 = arith.constant 1.000000e+00 : f32
    %48 = vector.broadcast %cst_34 : f32 to vector<2x128xf32>
    %49 = arith.addf %48, %47 : vector<2x128xf32>
    %50 = arith.divf %48, %49 : vector<2x128xf32>
    %51 = math.tanh %45 : vector<2x128xf32>
    %52 = vector.extract_strided_slice %50 {offsets = [0, 0], sizes = [2, 32], strides = [1, 1]} : vector<2x128xf32> to vector<2x32xf32>
    %53 = vector.extract_strided_slice %50 {offsets = [0, 32], sizes = [2, 32], strides = [1, 1]} : vector<2x128xf32> to vector<2x32xf32>
    %54 = vector.extract_strided_slice %51 {offsets = [0, 64], sizes = [2, 32], strides = [1, 1]} : vector<2x128xf32> to vector<2x32xf32>
    %55 = vector.extract_strided_slice %50 {offsets = [0, 96], sizes = [2, 32], strides = [1, 1]} : vector<2x128xf32> to vector<2x32xf32>
    %c0_35 = arith.constant 0 : index
    %c0_36 = arith.constant 0 : index
    %56 = vector.load %arg12[%c0_35, %c0_36] : memref<2x32xf32, #tpu.memory_space<vmem>>, vector<2x32xf32>
    %57 = arith.mulf %53, %56 : vector<2x32xf32>
    %58 = arith.mulf %52, %54 : vector<2x32xf32>
    %59 = arith.addf %57, %58 : vector<2x32xf32>
    %60 = math.tanh %59 : vector<2x32xf32>
    %61 = arith.mulf %55, %60 : vector<2x32xf32>
    %c0_37 = arith.constant 0 : index
    %c0_38 = arith.constant 0 : index
    %62 = vector.load %arg12[%c0_37, %c0_38] : memref<2x32xf32, #tpu.memory_space<vmem>>, vector<2x32xf32>
    tpu.vector_store %arg12[%c0_37, %c0_38], %59 {strides = array<i32>} : memref<2x32xf32, #tpu.memory_space<vmem>>, vector<2x32xf32>,
    %c0_39 = arith.constant 0 : index
    %c0_40 = arith.constant 0 : index
    %63 = vector.load %arg11[%c0_39, %c0_40] : memref<2x32xf32, #tpu.memory_space<vmem>>, vector<2x32xf32>
    tpu.vector_store %arg11[%c0_39, %c0_40], %61 {strides = array<i32>} : memref<2x32xf32, #tpu.memory_space<vmem>>, vector<2x32xf32>,
    %64 = arith.index_cast %40 : i32 to index
    %c0_41 = arith.constant 0 : index
    %65 = vector.load %arg9[%64, %c0_41] : memref<16x32xf32, #tpu.memory_space<vmem>>, vector<2x32xf32>
    tpu.vector_store %arg9[%64, %c0_41], %61 {strides = array<i32>} : memref<16x32xf32, #tpu.memory_space<vmem>>, vector<2x32xf32>,
    %c2_i32_42 = arith.constant 2 : i32
    %c2_i32_43 = arith.constant 2 : i32
    %66 = arith.muli %c2_i32_42, %c2_i32_43 : i32
    %67 = arith.index_cast %66 : i32 to index
    %c0_44 = arith.constant 0 : index
    %68 = vector.load %arg8[%67, %c0_44] : memref<16x128xf32, #tpu.memory_space<vmem>>, vector<2x128xf32>
    %c0_45 = arith.constant 0 : index
    %c0_46 = arith.constant 0 : index
    %69 = vector.load %arg11[%c0_45, %c0_46] : memref<2x32xf32, #tpu.memory_space<vmem>>, vector<2x32xf32>
    %cst_47 = arith.constant dense<0.000000e+00> : vector<2x128xf32>
    %70 = tpu.matmul %69, %9, %cst_47 {dimension_numbers = #tpu.dot_dimension_numbers<[1], [0], [0], [1], [0, 0, 1, 1], [], []>} : vector<2x32xf32>, vector<32x128xf32>, vector<2x128xf32> -> vector<2x128xf32>
    %71 = arith.addf %68, %70 : vector<2x128xf32>
    %72 = arith.negf %71 : vector<2x128xf32>
    %73 = math.exp %72 : vector<2x128xf32>
    %cst_48 = arith.constant 1.000000e+00 : f32
    %74 = vector.broadcast %cst_48 : f32 to vector<2x128xf32>
    %75 = arith.addf %74, %73 : vector<2x128xf32>
    %76 = arith.divf %74, %75 : vector<2x128xf32>
    %77 = math.tanh %71 : vector<2x128xf32>
    %78 = vector.extract_strided_slice %76 {offsets = [0, 0], sizes = [2, 32], strides = [1, 1]} : vector<2x128xf32> to vector<2x32xf32>
    %79 = vector.extract_strided_slice %76 {offsets = [0, 32], sizes = [2, 32], strides = [1, 1]} : vector<2x128xf32> to vector<2x32xf32>
    %80 = vector.extract_strided_slice %77 {offsets = [0, 64], sizes = [2, 32], strides = [1, 1]} : vector<2x128xf32> to vector<2x32xf32>
    %81 = vector.extract_strided_slice %76 {offsets = [0, 96], sizes = [2, 32], strides = [1, 1]} : vector<2x128xf32> to vector<2x32xf32>
    %c0_49 = arith.constant 0 : index
    %c0_50 = arith.constant 0 : index
    %82 = vector.load %arg12[%c0_49, %c0_50] : memref<2x32xf32, #tpu.memory_space<vmem>>, vector<2x32xf32>
    %83 = arith.mulf %79, %82 : vector<2x32xf32>
    %84 = arith.mulf %78, %80 : vector<2x32xf32>
    %85 = arith.addf %83, %84 : vector<2x32xf32>
    %86 = math.tanh %85 : vector<2x32xf32>
    %87 = arith.mulf %81, %86 : vector<2x32xf32>
    %c0_51 = arith.constant 0 : index
    %c0_52 = arith.constant 0 : index
    %88 = vector.load %arg12[%c0_51, %c0_52] : memref<2x32xf32, #tpu.memory_space<vmem>>, vector<2x32xf32>
    tpu.vector_store %arg12[%c0_51, %c0_52], %85 {strides = array<i32>} : memref<2x32xf32, #tpu.memory_space<vmem>>, vector<2x32xf32>,
    %c0_53 = arith.constant 0 : index
    %c0_54 = arith.constant 0 : index
    %89 = vector.load %arg11[%c0_53, %c0_54] : memref<2x32xf32, #tpu.memory_space<vmem>>, vector<2x32xf32>
    tpu.vector_store %arg11[%c0_53, %c0_54], %87 {strides = array<i32>} : memref<2x32xf32, #tpu.memory_space<vmem>>, vector<2x32xf32>,
    %90 = arith.index_cast %66 : i32 to index
    %c0_55 = arith.constant 0 : index
    %91 = vector.load %arg9[%90, %c0_55] : memref<16x32xf32, #tpu.memory_space<vmem>>, vector<2x32xf32>
    tpu.vector_store %arg9[%90, %c0_55], %87 {strides = array<i32>} : memref<16x32xf32, #tpu.memory_space<vmem>>, vector<2x32xf32>,
    %c3_i32 = arith.constant 3 : i32
    %c2_i32_56 = arith.constant 2 : i32
    %92 = arith.muli %c3_i32, %c2_i32_56 : i32
    %93 = arith.index_cast %92 : i32 to index
    %c0_57 = arith.constant 0 : index
    %94 = vector.load %arg8[%93, %c0_57] : memref<16x128xf32, #tpu.memory_space<vmem>>, vector<2x128xf32>
    %c0_58 = arith.constant 0 : index
    %c0_59 = arith.constant 0 : index
    %95 = vector.load %arg11[%c0_58, %c0_59] : memref<2x32xf32, #tpu.memory_space<vmem>>, vector<2x32xf32>
    %cst_60 = arith.constant dense<0.000000e+00> : vector<2x128xf32>
    %96 = tpu.matmul %95, %9, %cst_60 {dimension_numbers = #tpu.dot_dimension_numbers<[1], [0], [0], [1], [0, 0, 1, 1], [], []>} : vector<2x32xf32>, vector<32x128xf32>, vector<2x128xf32> -> vector<2x128xf32>
    %97 = arith.addf %94, %96 : vector<2x128xf32>
    %98 = arith.negf %97 : vector<2x128xf32>
    %99 = math.exp %98 : vector<2x128xf32>
    %cst_61 = arith.constant 1.000000e+00 : f32
    %100 = vector.broadcast %cst_61 : f32 to vector<2x128xf32>
    %101 = arith.addf %100, %99 : vector<2x128xf32>
    %102 = arith.divf %100, %101 : vector<2x128xf32>
    %103 = math.tanh %97 : vector<2x128xf32>
    %104 = vector.extract_strided_slice %102 {offsets = [0, 0], sizes = [2, 32], strides = [1, 1]} : vector<2x128xf32> to vector<2x32xf32>
    %105 = vector.extract_strided_slice %102 {offsets = [0, 32], sizes = [2, 32], strides = [1, 1]} : vector<2x128xf32> to vector<2x32xf32>
    %106 = vector.extract_strided_slice %103 {offsets = [0, 64], sizes = [2, 32], strides = [1, 1]} : vector<2x128xf32> to vector<2x32xf32>
    %107 = vector.extract_strided_slice %102 {offsets = [0, 96], sizes = [2, 32], strides = [1, 1]} : vector<2x128xf32> to vector<2x32xf32>
    %c0_62 = arith.constant 0 : index
    %c0_63 = arith.constant 0 : index
    %108 = vector.load %arg12[%c0_62, %c0_63] : memref<2x32xf32, #tpu.memory_space<vmem>>, vector<2x32xf32>
    %109 = arith.mulf %105, %108 : vector<2x32xf32>
    %110 = arith.mulf %104, %106 : vector<2x32xf32>
    %111 = arith.addf %109, %110 : vector<2x32xf32>
    %112 = math.tanh %111 : vector<2x32xf32>
    %113 = arith.mulf %107, %112 : vector<2x32xf32>
    %c0_64 = arith.constant 0 : index
    %c0_65 = arith.constant 0 : index
    %114 = vector.load %arg12[%c0_64, %c0_65] : memref<2x32xf32, #tpu.memory_space<vmem>>, vector<2x32xf32>
    tpu.vector_store %arg12[%c0_64, %c0_65], %111 {strides = array<i32>} : memref<2x32xf32, #tpu.memory_space<vmem>>, vector<2x32xf32>,
    %c0_66 = arith.constant 0 : index
    %c0_67 = arith.constant 0 : index
    %115 = vector.load %arg11[%c0_66, %c0_67] : memref<2x32xf32, #tpu.memory_space<vmem>>, vector<2x32xf32>
    tpu.vector_store %arg11[%c0_66, %c0_67], %113 {strides = array<i32>} : memref<2x32xf32, #tpu.memory_space<vmem>>, vector<2x32xf32>,
    %116 = arith.index_cast %92 : i32 to index
    %c0_68 = arith.constant 0 : index
    %117 = vector.load %arg9[%116, %c0_68] : memref<16x32xf32, #tpu.memory_space<vmem>>, vector<2x32xf32>
    tpu.vector_store %arg9[%116, %c0_68], %113 {strides = array<i32>} : memref<16x32xf32, #tpu.memory_space<vmem>>, vector<2x32xf32>,
    %c4_i32 = arith.constant 4 : i32
    %c2_i32_69 = arith.constant 2 : i32
    %118 = arith.muli %c4_i32, %c2_i32_69 : i32
    %119 = arith.index_cast %118 : i32 to index
    %c0_70 = arith.constant 0 : index
    %120 = vector.load %arg8[%119, %c0_70] : memref<16x128xf32, #tpu.memory_space<vmem>>, vector<2x128xf32>
    %c0_71 = arith.constant 0 : index
    %c0_72 = arith.constant 0 : index
    %121 = vector.load %arg11[%c0_71, %c0_72] : memref<2x32xf32, #tpu.memory_space<vmem>>, vector<2x32xf32>
    %cst_73 = arith.constant dense<0.000000e+00> : vector<2x128xf32>
    %122 = tpu.matmul %121, %9, %cst_73 {dimension_numbers = #tpu.dot_dimension_numbers<[1], [0], [0], [1], [0, 0, 1, 1], [], []>} : vector<2x32xf32>, vector<32x128xf32>, vector<2x128xf32> -> vector<2x128xf32>
    %123 = arith.addf %120, %122 : vector<2x128xf32>
    %124 = arith.negf %123 : vector<2x128xf32>
    %125 = math.exp %124 : vector<2x128xf32>
    %cst_74 = arith.constant 1.000000e+00 : f32
    %126 = vector.broadcast %cst_74 : f32 to vector<2x128xf32>
    %127 = arith.addf %126, %125 : vector<2x128xf32>
    %128 = arith.divf %126, %127 : vector<2x128xf32>
    %129 = math.tanh %123 : vector<2x128xf32>
    %130 = vector.extract_strided_slice %128 {offsets = [0, 0], sizes = [2, 32], strides = [1, 1]} : vector<2x128xf32> to vector<2x32xf32>
    %131 = vector.extract_strided_slice %128 {offsets = [0, 32], sizes = [2, 32], strides = [1, 1]} : vector<2x128xf32> to vector<2x32xf32>
    %132 = vector.extract_strided_slice %129 {offsets = [0, 64], sizes = [2, 32], strides = [1, 1]} : vector<2x128xf32> to vector<2x32xf32>
    %133 = vector.extract_strided_slice %128 {offsets = [0, 96], sizes = [2, 32], strides = [1, 1]} : vector<2x128xf32> to vector<2x32xf32>
    %c0_75 = arith.constant 0 : index
    %c0_76 = arith.constant 0 : index
    %134 = vector.load %arg12[%c0_75, %c0_76] : memref<2x32xf32, #tpu.memory_space<vmem>>, vector<2x32xf32>
    %135 = arith.mulf %131, %134 : vector<2x32xf32>
    %136 = arith.mulf %130, %132 : vector<2x32xf32>
    %137 = arith.addf %135, %136 : vector<2x32xf32>
    %138 = math.tanh %137 : vector<2x32xf32>
    %139 = arith.mulf %133, %138 : vector<2x32xf32>
    %c0_77 = arith.constant 0 : index
    %c0_78 = arith.constant 0 : index
    %140 = vector.load %arg12[%c0_77, %c0_78] : memref<2x32xf32, #tpu.memory_space<vmem>>, vector<2x32xf32>
    tpu.vector_store %arg12[%c0_77, %c0_78], %137 {strides = array<i32>} : memref<2x32xf32, #tpu.memory_space<vmem>>, vector<2x32xf32>,
    %c0_79 = arith.constant 0 : index
    %c0_80 = arith.constant 0 : index
    %141 = vector.load %arg11[%c0_79, %c0_80] : memref<2x32xf32, #tpu.memory_space<vmem>>, vector<2x32xf32>
    tpu.vector_store %arg11[%c0_79, %c0_80], %139 {strides = array<i32>} : memref<2x32xf32, #tpu.memory_space<vmem>>, vector<2x32xf32>,
    %142 = arith.index_cast %118 : i32 to index
    %c0_81 = arith.constant 0 : index
    %143 = vector.load %arg9[%142, %c0_81] : memref<16x32xf32, #tpu.memory_space<vmem>>, vector<2x32xf32>
    tpu.vector_store %arg9[%142, %c0_81], %139 {strides = array<i32>} : memref<16x32xf32, #tpu.memory_space<vmem>>, vector<2x32xf32>,
    %c5_i32 = arith.constant 5 : i32
    %c2_i32_82 = arith.constant 2 : i32
    %144 = arith.muli %c5_i32, %c2_i32_82 : i32
    %145 = arith.index_cast %144 : i32 to index
    %c0_83 = arith.constant 0 : index
    %146 = vector.load %arg8[%145, %c0_83] : memref<16x128xf32, #tpu.memory_space<vmem>>, vector<2x128xf32>
    %c0_84 = arith.constant 0 : index
    %c0_85 = arith.constant 0 : index
    %147 = vector.load %arg11[%c0_84, %c0_85] : memref<2x32xf32, #tpu.memory_space<vmem>>, vector<2x32xf32>
    %cst_86 = arith.constant dense<0.000000e+00> : vector<2x128xf32>
    %148 = tpu.matmul %147, %9, %cst_86 {dimension_numbers = #tpu.dot_dimension_numbers<[1], [0], [0], [1], [0, 0, 1, 1], [], []>} : vector<2x32xf32>, vector<32x128xf32>, vector<2x128xf32> -> vector<2x128xf32>
    %149 = arith.addf %146, %148 : vector<2x128xf32>
    %150 = arith.negf %149 : vector<2x128xf32>
    %151 = math.exp %150 : vector<2x128xf32>
    %cst_87 = arith.constant 1.000000e+00 : f32
    %152 = vector.broadcast %cst_87 : f32 to vector<2x128xf32>
    %153 = arith.addf %152, %151 : vector<2x128xf32>
    %154 = arith.divf %152, %153 : vector<2x128xf32>
    %155 = math.tanh %149 : vector<2x128xf32>
    %156 = vector.extract_strided_slice %154 {offsets = [0, 0], sizes = [2, 32], strides = [1, 1]} : vector<2x128xf32> to vector<2x32xf32>
    %157 = vector.extract_strided_slice %154 {offsets = [0, 32], sizes = [2, 32], strides = [1, 1]} : vector<2x128xf32> to vector<2x32xf32>
    %158 = vector.extract_strided_slice %155 {offsets = [0, 64], sizes = [2, 32], strides = [1, 1]} : vector<2x128xf32> to vector<2x32xf32>
    %159 = vector.extract_strided_slice %154 {offsets = [0, 96], sizes = [2, 32], strides = [1, 1]} : vector<2x128xf32> to vector<2x32xf32>
    %c0_88 = arith.constant 0 : index
    %c0_89 = arith.constant 0 : index
    %160 = vector.load %arg12[%c0_88, %c0_89] : memref<2x32xf32, #tpu.memory_space<vmem>>, vector<2x32xf32>
    %161 = arith.mulf %157, %160 : vector<2x32xf32>
    %162 = arith.mulf %156, %158 : vector<2x32xf32>
    %163 = arith.addf %161, %162 : vector<2x32xf32>
    %164 = math.tanh %163 : vector<2x32xf32>
    %165 = arith.mulf %159, %164 : vector<2x32xf32>
    %c0_90 = arith.constant 0 : index
    %c0_91 = arith.constant 0 : index
    %166 = vector.load %arg12[%c0_90, %c0_91] : memref<2x32xf32, #tpu.memory_space<vmem>>, vector<2x32xf32>
    tpu.vector_store %arg12[%c0_90, %c0_91], %163 {strides = array<i32>} : memref<2x32xf32, #tpu.memory_space<vmem>>, vector<2x32xf32>,
    %c0_92 = arith.constant 0 : index
    %c0_93 = arith.constant 0 : index
    %167 = vector.load %arg11[%c0_92, %c0_93] : memref<2x32xf32, #tpu.memory_space<vmem>>, vector<2x32xf32>
    tpu.vector_store %arg11[%c0_92, %c0_93], %165 {strides = array<i32>} : memref<2x32xf32, #tpu.memory_space<vmem>>, vector<2x32xf32>,
    %168 = arith.index_cast %144 : i32 to index
    %c0_94 = arith.constant 0 : index
    %169 = vector.load %arg9[%168, %c0_94] : memref<16x32xf32, #tpu.memory_space<vmem>>, vector<2x32xf32>
    tpu.vector_store %arg9[%168, %c0_94], %165 {strides = array<i32>} : memref<16x32xf32, #tpu.memory_space<vmem>>, vector<2x32xf32>,
    %c6_i32 = arith.constant 6 : i32
    %c2_i32_95 = arith.constant 2 : i32
    %170 = arith.muli %c6_i32, %c2_i32_95 : i32
    %171 = arith.index_cast %170 : i32 to index
    %c0_96 = arith.constant 0 : index
    %172 = vector.load %arg8[%171, %c0_96] : memref<16x128xf32, #tpu.memory_space<vmem>>, vector<2x128xf32>
    %c0_97 = arith.constant 0 : index
    %c0_98 = arith.constant 0 : index
    %173 = vector.load %arg11[%c0_97, %c0_98] : memref<2x32xf32, #tpu.memory_space<vmem>>, vector<2x32xf32>
    %cst_99 = arith.constant dense<0.000000e+00> : vector<2x128xf32>
    %174 = tpu.matmul %173, %9, %cst_99 {dimension_numbers = #tpu.dot_dimension_numbers<[1], [0], [0], [1], [0, 0, 1, 1], [], []>} : vector<2x32xf32>, vector<32x128xf32>, vector<2x128xf32> -> vector<2x128xf32>
    %175 = arith.addf %172, %174 : vector<2x128xf32>
    %176 = arith.negf %175 : vector<2x128xf32>
    %177 = math.exp %176 : vector<2x128xf32>
    %cst_100 = arith.constant 1.000000e+00 : f32
    %178 = vector.broadcast %cst_100 : f32 to vector<2x128xf32>
    %179 = arith.addf %178, %177 : vector<2x128xf32>
    %180 = arith.divf %178, %179 : vector<2x128xf32>
    %181 = math.tanh %175 : vector<2x128xf32>
    %182 = vector.extract_strided_slice %180 {offsets = [0, 0], sizes = [2, 32], strides = [1, 1]} : vector<2x128xf32> to vector<2x32xf32>
    %183 = vector.extract_strided_slice %180 {offsets = [0, 32], sizes = [2, 32], strides = [1, 1]} : vector<2x128xf32> to vector<2x32xf32>
    %184 = vector.extract_strided_slice %181 {offsets = [0, 64], sizes = [2, 32], strides = [1, 1]} : vector<2x128xf32> to vector<2x32xf32>
    %185 = vector.extract_strided_slice %180 {offsets = [0, 96], sizes = [2, 32], strides = [1, 1]} : vector<2x128xf32> to vector<2x32xf32>
    %c0_101 = arith.constant 0 : index
    %c0_102 = arith.constant 0 : index
    %186 = vector.load %arg12[%c0_101, %c0_102] : memref<2x32xf32, #tpu.memory_space<vmem>>, vector<2x32xf32>
    %187 = arith.mulf %183, %186 : vector<2x32xf32>
    %188 = arith.mulf %182, %184 : vector<2x32xf32>
    %189 = arith.addf %187, %188 : vector<2x32xf32>
    %190 = math.tanh %189 : vector<2x32xf32>
    %191 = arith.mulf %185, %190 : vector<2x32xf32>
    %c0_103 = arith.constant 0 : index
    %c0_104 = arith.constant 0 : index
    %192 = vector.load %arg12[%c0_103, %c0_104] : memref<2x32xf32, #tpu.memory_space<vmem>>, vector<2x32xf32>
    tpu.vector_store %arg12[%c0_103, %c0_104], %189 {strides = array<i32>} : memref<2x32xf32, #tpu.memory_space<vmem>>, vector<2x32xf32>,
    %c0_105 = arith.constant 0 : index
    %c0_106 = arith.constant 0 : index
    %193 = vector.load %arg11[%c0_105, %c0_106] : memref<2x32xf32, #tpu.memory_space<vmem>>, vector<2x32xf32>
    tpu.vector_store %arg11[%c0_105, %c0_106], %191 {strides = array<i32>} : memref<2x32xf32, #tpu.memory_space<vmem>>, vector<2x32xf32>,
    %194 = arith.index_cast %170 : i32 to index
    %c0_107 = arith.constant 0 : index
    %195 = vector.load %arg9[%194, %c0_107] : memref<16x32xf32, #tpu.memory_space<vmem>>, vector<2x32xf32>
    tpu.vector_store %arg9[%194, %c0_107], %191 {strides = array<i32>} : memref<16x32xf32, #tpu.memory_space<vmem>>, vector<2x32xf32>,
    %c7_i32 = arith.constant 7 : i32
    %c2_i32_108 = arith.constant 2 : i32
    %196 = arith.muli %c7_i32, %c2_i32_108 : i32
    %197 = arith.index_cast %196 : i32 to index
    %c0_109 = arith.constant 0 : index
    %198 = vector.load %arg8[%197, %c0_109] : memref<16x128xf32, #tpu.memory_space<vmem>>, vector<2x128xf32>
    %c0_110 = arith.constant 0 : index
    %c0_111 = arith.constant 0 : index
    %199 = vector.load %arg11[%c0_110, %c0_111] : memref<2x32xf32, #tpu.memory_space<vmem>>, vector<2x32xf32>
    %cst_112 = arith.constant dense<0.000000e+00> : vector<2x128xf32>
    %200 = tpu.matmul %199, %9, %cst_112 {dimension_numbers = #tpu.dot_dimension_numbers<[1], [0], [0], [1], [0, 0, 1, 1], [], []>} : vector<2x32xf32>, vector<32x128xf32>, vector<2x128xf32> -> vector<2x128xf32>
    %201 = arith.addf %198, %200 : vector<2x128xf32>
    %202 = arith.negf %201 : vector<2x128xf32>
    %203 = math.exp %202 : vector<2x128xf32>
    %cst_113 = arith.constant 1.000000e+00 : f32
    %204 = vector.broadcast %cst_113 : f32 to vector<2x128xf32>
    %205 = arith.addf %204, %203 : vector<2x128xf32>
    %206 = arith.divf %204, %205 : vector<2x128xf32>
    %207 = math.tanh %201 : vector<2x128xf32>
    %208 = vector.extract_strided_slice %206 {offsets = [0, 0], sizes = [2, 32], strides = [1, 1]} : vector<2x128xf32> to vector<2x32xf32>
    %209 = vector.extract_strided_slice %206 {offsets = [0, 32], sizes = [2, 32], strides = [1, 1]} : vector<2x128xf32> to vector<2x32xf32>
    %210 = vector.extract_strided_slice %207 {offsets = [0, 64], sizes = [2, 32], strides = [1, 1]} : vector<2x128xf32> to vector<2x32xf32>
    %211 = vector.extract_strided_slice %206 {offsets = [0, 96], sizes = [2, 32], strides = [1, 1]} : vector<2x128xf32> to vector<2x32xf32>
    %c0_114 = arith.constant 0 : index
    %c0_115 = arith.constant 0 : index
    %212 = vector.load %arg12[%c0_114, %c0_115] : memref<2x32xf32, #tpu.memory_space<vmem>>, vector<2x32xf32>
    %213 = arith.mulf %209, %212 : vector<2x32xf32>
    %214 = arith.mulf %208, %210 : vector<2x32xf32>
    %215 = arith.addf %213, %214 : vector<2x32xf32>
    %216 = math.tanh %215 : vector<2x32xf32>
    %217 = arith.mulf %211, %216 : vector<2x32xf32>
    %c0_116 = arith.constant 0 : index
    %c0_117 = arith.constant 0 : index
    %218 = vector.load %arg12[%c0_116, %c0_117] : memref<2x32xf32, #tpu.memory_space<vmem>>, vector<2x32xf32>
    tpu.vector_store %arg12[%c0_116, %c0_117], %215 {strides = array<i32>} : memref<2x32xf32, #tpu.memory_space<vmem>>, vector<2x32xf32>,
    %c0_118 = arith.constant 0 : index
    %c0_119 = arith.constant 0 : index
    %219 = vector.load %arg11[%c0_118, %c0_119] : memref<2x32xf32, #tpu.memory_space<vmem>>, vector<2x32xf32>
    tpu.vector_store %arg11[%c0_118, %c0_119], %217 {strides = array<i32>} : memref<2x32xf32, #tpu.memory_space<vmem>>, vector<2x32xf32>,
    %220 = arith.index_cast %196 : i32 to index
    %c0_120 = arith.constant 0 : index
    %221 = vector.load %arg9[%220, %c0_120] : memref<16x32xf32, #tpu.memory_space<vmem>>, vector<2x32xf32>
    tpu.vector_store %arg9[%220, %c0_120], %217 {strides = array<i32>} : memref<16x32xf32, #tpu.memory_space<vmem>>, vector<2x32xf32>,
    %c8_i32 = arith.constant 8 : i32
    %c0_121 = arith.constant 0 : index
    %c0_122 = arith.constant 0 : index
    %222 = vector.load %arg9[%c0_121, %c0_122] : memref<16x32xf32, #tpu.memory_space<vmem>>, vector<16x32xf32>
    %c0_123 = arith.constant 0 : index
    %c0_124 = arith.constant 0 : index
    %c0_125 = arith.constant 0 : index
    %223 = vector.load %arg2[%c0_123, %c0_124, %c0_125] : memref<2x32x128xf32, #tpu.memory_space<vmem>>, vector<1x32x128xf32>
    %224 = vector.shape_cast %223 : vector<1x32x128xf32> to vector<32x128xf32>
    %cst_126 = arith.constant dense<0.000000e+00> : vector<16x128xf32>
    %225 = tpu.matmul %222, %224, %cst_126 {dimension_numbers = #tpu.dot_dimension_numbers<[1], [0], [0], [1], [0, 0, 1, 1], [], []>} : vector<16x32xf32>, vector<32x128xf32>, vector<16x128xf32> -> vector<16x128xf32>
    %c1 = arith.constant 1 : index
    %c0_127 = arith.constant 0 : index
    %c0_128 = arith.constant 0 : index
    %226 = vector.load %arg4[%c1, %c0_127, %c0_128] : memref<3x1x128xf32, #tpu.memory_space<vmem>>, vector<1x1x128xf32>
    %227 = vector.shape_cast %226 : vector<1x1x128xf32> to vector<1x128xf32>
    %228 = vector.broadcast %227 : vector<1x128xf32> to vector<16x128xf32>
    %229 = arith.addf %225, %228 : vector<16x128xf32>
    %c0_129 = arith.constant 0 : index
    %c0_130 = arith.constant 0 : index
    %230 = vector.load %arg8[%c0_129, %c0_130] : memref<16x128xf32, #tpu.memory_space<vmem>>, vector<16x128xf32>
    tpu.vector_store %arg8[%c0_129, %c0_130], %229 {strides = array<i32>} : memref<16x128xf32, #tpu.memory_space<vmem>>, vector<16x128xf32>,
    %c1_131 = arith.constant 1 : index
    %c0_132 = arith.constant 0 : index
    %c0_133 = arith.constant 0 : index
    %231 = vector.load %arg3[%c1_131, %c0_132, %c0_133] : memref<3x32x128xf32, #tpu.memory_space<vmem>>, vector<1x32x128xf32>
    %232 = vector.shape_cast %231 : vector<1x32x128xf32> to vector<32x128xf32>
    %cst_134 = arith.constant 0.000000e+00 : f32
    %233 = vector.broadcast %cst_134 : f32 to vector<2x32xf32>
    %c0_135 = arith.constant 0 : index
    %c0_136 = arith.constant 0 : index
    %234 = vector.load %arg11[%c0_135, %c0_136] : memref<2x32xf32, #tpu.memory_space<vmem>>, vector<2x32xf32>
    tpu.vector_store %arg11[%c0_135, %c0_136], %233 {strides = array<i32>} : memref<2x32xf32, #tpu.memory_space<vmem>>, vector<2x32xf32>,
    %cst_137 = arith.constant 0.000000e+00 : f32
    %235 = vector.broadcast %cst_137 : f32 to vector<2x32xf32>
    %c0_138 = arith.constant 0 : index
    %c0_139 = arith.constant 0 : index
    %236 = vector.load %arg12[%c0_138, %c0_139] : memref<2x32xf32, #tpu.memory_space<vmem>>, vector<2x32xf32>
    tpu.vector_store %arg12[%c0_138, %c0_139], %235 {strides = array<i32>} : memref<2x32xf32, #tpu.memory_space<vmem>>, vector<2x32xf32>,
    %c0_i32_140 = arith.constant 0 : i32
    %c2_i32_141 = arith.constant 2 : i32
    %237 = arith.muli %c0_i32_140, %c2_i32_141 : i32
    %238 = arith.index_cast %237 : i32 to index
    %c0_142 = arith.constant 0 : index
    %239 = vector.load %arg8[%238, %c0_142] : memref<16x128xf32, #tpu.memory_space<vmem>>, vector<2x128xf32>
    %c0_143 = arith.constant 0 : index
    %c0_144 = arith.constant 0 : index
    %240 = vector.load %arg11[%c0_143, %c0_144] : memref<2x32xf32, #tpu.memory_space<vmem>>, vector<2x32xf32>
    %cst_145 = arith.constant dense<0.000000e+00> : vector<2x128xf32>
    %241 = tpu.matmul %240, %232, %cst_145 {dimension_numbers = #tpu.dot_dimension_numbers<[1], [0], [0], [1], [0, 0, 1, 1], [], []>} : vector<2x32xf32>, vector<32x128xf32>, vector<2x128xf32> -> vector<2x128xf32>
    %242 = arith.addf %239, %241 : vector<2x128xf32>
    %243 = arith.negf %242 : vector<2x128xf32>
    %244 = math.exp %243 : vector<2x128xf32>
    %cst_146 = arith.constant 1.000000e+00 : f32
    %245 = vector.broadcast %cst_146 : f32 to vector<2x128xf32>
    %246 = arith.addf %245, %244 : vector<2x128xf32>
    %247 = arith.divf %245, %246 : vector<2x128xf32>
    %248 = math.tanh %242 : vector<2x128xf32>
    %249 = vector.extract_strided_slice %247 {offsets = [0, 0], sizes = [2, 32], strides = [1, 1]} : vector<2x128xf32> to vector<2x32xf32>
    %250 = vector.extract_strided_slice %247 {offsets = [0, 32], sizes = [2, 32], strides = [1, 1]} : vector<2x128xf32> to vector<2x32xf32>
    %251 = vector.extract_strided_slice %248 {offsets = [0, 64], sizes = [2, 32], strides = [1, 1]} : vector<2x128xf32> to vector<2x32xf32>
    %252 = vector.extract_strided_slice %247 {offsets = [0, 96], sizes = [2, 32], strides = [1, 1]} : vector<2x128xf32> to vector<2x32xf32>
    %c0_147 = arith.constant 0 : index
    %c0_148 = arith.constant 0 : index
    %253 = vector.load %arg12[%c0_147, %c0_148] : memref<2x32xf32, #tpu.memory_space<vmem>>, vector<2x32xf32>
    %254 = arith.mulf %250, %253 : vector<2x32xf32>
    %255 = arith.mulf %249, %251 : vector<2x32xf32>
    %256 = arith.addf %254, %255 : vector<2x32xf32>
    %257 = math.tanh %256 : vector<2x32xf32>
    %258 = arith.mulf %252, %257 : vector<2x32xf32>
    %c0_149 = arith.constant 0 : index
    %c0_150 = arith.constant 0 : index
    %259 = vector.load %arg12[%c0_149, %c0_150] : memref<2x32xf32, #tpu.memory_space<vmem>>, vector<2x32xf32>
    tpu.vector_store %arg12[%c0_149, %c0_150], %256 {strides = array<i32>} : memref<2x32xf32, #tpu.memory_space<vmem>>, vector<2x32xf32>,
    %c0_151 = arith.constant 0 : index
    %c0_152 = arith.constant 0 : index
    %260 = vector.load %arg11[%c0_151, %c0_152] : memref<2x32xf32, #tpu.memory_space<vmem>>, vector<2x32xf32>
    tpu.vector_store %arg11[%c0_151, %c0_152], %258 {strides = array<i32>} : memref<2x32xf32, #tpu.memory_space<vmem>>, vector<2x32xf32>,
    %261 = arith.index_cast %237 : i32 to index
    %c0_153 = arith.constant 0 : index
    %262 = vector.load %arg9[%261, %c0_153] : memref<16x32xf32, #tpu.memory_space<vmem>>, vector<2x32xf32>
    tpu.vector_store %arg9[%261, %c0_153], %258 {strides = array<i32>} : memref<16x32xf32, #tpu.memory_space<vmem>>, vector<2x32xf32>,
    %c1_i32_154 = arith.constant 1 : i32
    %c2_i32_155 = arith.constant 2 : i32
    %263 = arith.muli %c1_i32_154, %c2_i32_155 : i32
    %264 = arith.index_cast %263 : i32 to index
    %c0_156 = arith.constant 0 : index
    %265 = vector.load %arg8[%264, %c0_156] : memref<16x128xf32, #tpu.memory_space<vmem>>, vector<2x128xf32>
    %c0_157 = arith.constant 0 : index
    %c0_158 = arith.constant 0 : index
    %266 = vector.load %arg11[%c0_157, %c0_158] : memref<2x32xf32, #tpu.memory_space<vmem>>, vector<2x32xf32>
    %cst_159 = arith.constant dense<0.000000e+00> : vector<2x128xf32>
    %267 = tpu.matmul %266, %232, %cst_159 {dimension_numbers = #tpu.dot_dimension_numbers<[1], [0], [0], [1], [0, 0, 1, 1], [], []>} : vector<2x32xf32>, vector<32x128xf32>, vector<2x128xf32> -> vector<2x128xf32>
    %268 = arith.addf %265, %267 : vector<2x128xf32>
    %269 = arith.negf %268 : vector<2x128xf32>
    %270 = math.exp %269 : vector<2x128xf32>
    %cst_160 = arith.constant 1.000000e+00 : f32
    %271 = vector.broadcast %cst_160 : f32 to vector<2x128xf32>
    %272 = arith.addf %271, %270 : vector<2x128xf32>
    %273 = arith.divf %271, %272 : vector<2x128xf32>
    %274 = math.tanh %268 : vector<2x128xf32>
    %275 = vector.extract_strided_slice %273 {offsets = [0, 0], sizes = [2, 32], strides = [1, 1]} : vector<2x128xf32> to vector<2x32xf32>
    %276 = vector.extract_strided_slice %273 {offsets = [0, 32], sizes = [2, 32], strides = [1, 1]} : vector<2x128xf32> to vector<2x32xf32>
    %277 = vector.extract_strided_slice %274 {offsets = [0, 64], sizes = [2, 32], strides = [1, 1]} : vector<2x128xf32> to vector<2x32xf32>
    %278 = vector.extract_strided_slice %273 {offsets = [0, 96], sizes = [2, 32], strides = [1, 1]} : vector<2x128xf32> to vector<2x32xf32>
    %c0_161 = arith.constant 0 : index
    %c0_162 = arith.constant 0 : index
    %279 = vector.load %arg12[%c0_161, %c0_162] : memref<2x32xf32, #tpu.memory_space<vmem>>, vector<2x32xf32>
    %280 = arith.mulf %276, %279 : vector<2x32xf32>
    %281 = arith.mulf %275, %277 : vector<2x32xf32>
    %282 = arith.addf %280, %281 : vector<2x32xf32>
    %283 = math.tanh %282 : vector<2x32xf32>
    %284 = arith.mulf %278, %283 : vector<2x32xf32>
    %c0_163 = arith.constant 0 : index
    %c0_164 = arith.constant 0 : index
    %285 = vector.load %arg12[%c0_163, %c0_164] : memref<2x32xf32, #tpu.memory_space<vmem>>, vector<2x32xf32>
    tpu.vector_store %arg12[%c0_163, %c0_164], %282 {strides = array<i32>} : memref<2x32xf32, #tpu.memory_space<vmem>>, vector<2x32xf32>,
    %c0_165 = arith.constant 0 : index
    %c0_166 = arith.constant 0 : index
    %286 = vector.load %arg11[%c0_165, %c0_166] : memref<2x32xf32, #tpu.memory_space<vmem>>, vector<2x32xf32>
    tpu.vector_store %arg11[%c0_165, %c0_166], %284 {strides = array<i32>} : memref<2x32xf32, #tpu.memory_space<vmem>>, vector<2x32xf32>,
    %287 = arith.index_cast %263 : i32 to index
    %c0_167 = arith.constant 0 : index
    %288 = vector.load %arg9[%287, %c0_167] : memref<16x32xf32, #tpu.memory_space<vmem>>, vector<2x32xf32>
    tpu.vector_store %arg9[%287, %c0_167], %284 {strides = array<i32>} : memref<16x32xf32, #tpu.memory_space<vmem>>, vector<2x32xf32>,
    %c2_i32_168 = arith.constant 2 : i32
    %c2_i32_169 = arith.constant 2 : i32
    %289 = arith.muli %c2_i32_168, %c2_i32_169 : i32
    %290 = arith.index_cast %289 : i32 to index
    %c0_170 = arith.constant 0 : index
    %291 = vector.load %arg8[%290, %c0_170] : memref<16x128xf32, #tpu.memory_space<vmem>>, vector<2x128xf32>
    %c0_171 = arith.constant 0 : index
    %c0_172 = arith.constant 0 : index
    %292 = vector.load %arg11[%c0_171, %c0_172] : memref<2x32xf32, #tpu.memory_space<vmem>>, vector<2x32xf32>
    %cst_173 = arith.constant dense<0.000000e+00> : vector<2x128xf32>
    %293 = tpu.matmul %292, %232, %cst_173 {dimension_numbers = #tpu.dot_dimension_numbers<[1], [0], [0], [1], [0, 0, 1, 1], [], []>} : vector<2x32xf32>, vector<32x128xf32>, vector<2x128xf32> -> vector<2x128xf32>
    %294 = arith.addf %291, %293 : vector<2x128xf32>
    %295 = arith.negf %294 : vector<2x128xf32>
    %296 = math.exp %295 : vector<2x128xf32>
    %cst_174 = arith.constant 1.000000e+00 : f32
    %297 = vector.broadcast %cst_174 : f32 to vector<2x128xf32>
    %298 = arith.addf %297, %296 : vector<2x128xf32>
    %299 = arith.divf %297, %298 : vector<2x128xf32>
    %300 = math.tanh %294 : vector<2x128xf32>
    %301 = vector.extract_strided_slice %299 {offsets = [0, 0], sizes = [2, 32], strides = [1, 1]} : vector<2x128xf32> to vector<2x32xf32>
    %302 = vector.extract_strided_slice %299 {offsets = [0, 32], sizes = [2, 32], strides = [1, 1]} : vector<2x128xf32> to vector<2x32xf32>
    %303 = vector.extract_strided_slice %300 {offsets = [0, 64], sizes = [2, 32], strides = [1, 1]} : vector<2x128xf32> to vector<2x32xf32>
    %304 = vector.extract_strided_slice %299 {offsets = [0, 96], sizes = [2, 32], strides = [1, 1]} : vector<2x128xf32> to vector<2x32xf32>
    %c0_175 = arith.constant 0 : index
    %c0_176 = arith.constant 0 : index
    %305 = vector.load %arg12[%c0_175, %c0_176] : memref<2x32xf32, #tpu.memory_space<vmem>>, vector<2x32xf32>
    %306 = arith.mulf %302, %305 : vector<2x32xf32>
    %307 = arith.mulf %301, %303 : vector<2x32xf32>
    %308 = arith.addf %306, %307 : vector<2x32xf32>
    %309 = math.tanh %308 : vector<2x32xf32>
    %310 = arith.mulf %304, %309 : vector<2x32xf32>
    %c0_177 = arith.constant 0 : index
    %c0_178 = arith.constant 0 : index
    %311 = vector.load %arg12[%c0_177, %c0_178] : memref<2x32xf32, #tpu.memory_space<vmem>>, vector<2x32xf32>
    tpu.vector_store %arg12[%c0_177, %c0_178], %308 {strides = array<i32>} : memref<2x32xf32, #tpu.memory_space<vmem>>, vector<2x32xf32>,
    %c0_179 = arith.constant 0 : index
    %c0_180 = arith.constant 0 : index
    %312 = vector.load %arg11[%c0_179, %c0_180] : memref<2x32xf32, #tpu.memory_space<vmem>>, vector<2x32xf32>
    tpu.vector_store %arg11[%c0_179, %c0_180], %310 {strides = array<i32>} : memref<2x32xf32, #tpu.memory_space<vmem>>, vector<2x32xf32>,
    %313 = arith.index_cast %289 : i32 to index
    %c0_181 = arith.constant 0 : index
    %314 = vector.load %arg9[%313, %c0_181] : memref<16x32xf32, #tpu.memory_space<vmem>>, vector<2x32xf32>
    tpu.vector_store %arg9[%313, %c0_181], %310 {strides = array<i32>} : memref<16x32xf32, #tpu.memory_space<vmem>>, vector<2x32xf32>,
    %c3_i32_182 = arith.constant 3 : i32
    %c2_i32_183 = arith.constant 2 : i32
    %315 = arith.muli %c3_i32_182, %c2_i32_183 : i32
    %316 = arith.index_cast %315 : i32 to index
    %c0_184 = arith.constant 0 : index
    %317 = vector.load %arg8[%316, %c0_184] : memref<16x128xf32, #tpu.memory_space<vmem>>, vector<2x128xf32>
    %c0_185 = arith.constant 0 : index
    %c0_186 = arith.constant 0 : index
    %318 = vector.load %arg11[%c0_185, %c0_186] : memref<2x32xf32, #tpu.memory_space<vmem>>, vector<2x32xf32>
    %cst_187 = arith.constant dense<0.000000e+00> : vector<2x128xf32>
    %319 = tpu.matmul %318, %232, %cst_187 {dimension_numbers = #tpu.dot_dimension_numbers<[1], [0], [0], [1], [0, 0, 1, 1], [], []>} : vector<2x32xf32>, vector<32x128xf32>, vector<2x128xf32> -> vector<2x128xf32>
    %320 = arith.addf %317, %319 : vector<2x128xf32>
    %321 = arith.negf %320 : vector<2x128xf32>
    %322 = math.exp %321 : vector<2x128xf32>
    %cst_188 = arith.constant 1.000000e+00 : f32
    %323 = vector.broadcast %cst_188 : f32 to vector<2x128xf32>
    %324 = arith.addf %323, %322 : vector<2x128xf32>
    %325 = arith.divf %323, %324 : vector<2x128xf32>
    %326 = math.tanh %320 : vector<2x128xf32>
    %327 = vector.extract_strided_slice %325 {offsets = [0, 0], sizes = [2, 32], strides = [1, 1]} : vector<2x128xf32> to vector<2x32xf32>
    %328 = vector.extract_strided_slice %325 {offsets = [0, 32], sizes = [2, 32], strides = [1, 1]} : vector<2x128xf32> to vector<2x32xf32>
    %329 = vector.extract_strided_slice %326 {offsets = [0, 64], sizes = [2, 32], strides = [1, 1]} : vector<2x128xf32> to vector<2x32xf32>
    %330 = vector.extract_strided_slice %325 {offsets = [0, 96], sizes = [2, 32], strides = [1, 1]} : vector<2x128xf32> to vector<2x32xf32>
    %c0_189 = arith.constant 0 : index
    %c0_190 = arith.constant 0 : index
    %331 = vector.load %arg12[%c0_189, %c0_190] : memref<2x32xf32, #tpu.memory_space<vmem>>, vector<2x32xf32>
    %332 = arith.mulf %328, %331 : vector<2x32xf32>
    %333 = arith.mulf %327, %329 : vector<2x32xf32>
    %334 = arith.addf %332, %333 : vector<2x32xf32>
    %335 = math.tanh %334 : vector<2x32xf32>
    %336 = arith.mulf %330, %335 : vector<2x32xf32>
    %c0_191 = arith.constant 0 : index
    %c0_192 = arith.constant 0 : index
    %337 = vector.load %arg12[%c0_191, %c0_192] : memref<2x32xf32, #tpu.memory_space<vmem>>, vector<2x32xf32>
    tpu.vector_store %arg12[%c0_191, %c0_192], %334 {strides = array<i32>} : memref<2x32xf32, #tpu.memory_space<vmem>>, vector<2x32xf32>,
    %c0_193 = arith.constant 0 : index
    %c0_194 = arith.constant 0 : index
    %338 = vector.load %arg11[%c0_193, %c0_194] : memref<2x32xf32, #tpu.memory_space<vmem>>, vector<2x32xf32>
    tpu.vector_store %arg11[%c0_193, %c0_194], %336 {strides = array<i32>} : memref<2x32xf32, #tpu.memory_space<vmem>>, vector<2x32xf32>,
    %339 = arith.index_cast %315 : i32 to index
    %c0_195 = arith.constant 0 : index
    %340 = vector.load %arg9[%339, %c0_195] : memref<16x32xf32, #tpu.memory_space<vmem>>, vector<2x32xf32>
    tpu.vector_store %arg9[%339, %c0_195], %336 {strides = array<i32>} : memref<16x32xf32, #tpu.memory_space<vmem>>, vector<2x32xf32>,
    %c4_i32_196 = arith.constant 4 : i32
    %c2_i32_197 = arith.constant 2 : i32
    %341 = arith.muli %c4_i32_196, %c2_i32_197 : i32
    %342 = arith.index_cast %341 : i32 to index
    %c0_198 = arith.constant 0 : index
    %343 = vector.load %arg8[%342, %c0_198] : memref<16x128xf32, #tpu.memory_space<vmem>>, vector<2x128xf32>
    %c0_199 = arith.constant 0 : index
    %c0_200 = arith.constant 0 : index
    %344 = vector.load %arg11[%c0_199, %c0_200] : memref<2x32xf32, #tpu.memory_space<vmem>>, vector<2x32xf32>
    %cst_201 = arith.constant dense<0.000000e+00> : vector<2x128xf32>
    %345 = tpu.matmul %344, %232, %cst_201 {dimension_numbers = #tpu.dot_dimension_numbers<[1], [0], [0], [1], [0, 0, 1, 1], [], []>} : vector<2x32xf32>, vector<32x128xf32>, vector<2x128xf32> -> vector<2x128xf32>
    %346 = arith.addf %343, %345 : vector<2x128xf32>
    %347 = arith.negf %346 : vector<2x128xf32>
    %348 = math.exp %347 : vector<2x128xf32>
    %cst_202 = arith.constant 1.000000e+00 : f32
    %349 = vector.broadcast %cst_202 : f32 to vector<2x128xf32>
    %350 = arith.addf %349, %348 : vector<2x128xf32>
    %351 = arith.divf %349, %350 : vector<2x128xf32>
    %352 = math.tanh %346 : vector<2x128xf32>
    %353 = vector.extract_strided_slice %351 {offsets = [0, 0], sizes = [2, 32], strides = [1, 1]} : vector<2x128xf32> to vector<2x32xf32>
    %354 = vector.extract_strided_slice %351 {offsets = [0, 32], sizes = [2, 32], strides = [1, 1]} : vector<2x128xf32> to vector<2x32xf32>
    %355 = vector.extract_strided_slice %352 {offsets = [0, 64], sizes = [2, 32], strides = [1, 1]} : vector<2x128xf32> to vector<2x32xf32>
    %356 = vector.extract_strided_slice %351 {offsets = [0, 96], sizes = [2, 32], strides = [1, 1]} : vector<2x128xf32> to vector<2x32xf32>
    %c0_203 = arith.constant 0 : index
    %c0_204 = arith.constant 0 : index
    %357 = vector.load %arg12[%c0_203, %c0_204] : memref<2x32xf32, #tpu.memory_space<vmem>>, vector<2x32xf32>
    %358 = arith.mulf %354, %357 : vector<2x32xf32>
    %359 = arith.mulf %353, %355 : vector<2x32xf32>
    %360 = arith.addf %358, %359 : vector<2x32xf32>
    %361 = math.tanh %360 : vector<2x32xf32>
    %362 = arith.mulf %356, %361 : vector<2x32xf32>
    %c0_205 = arith.constant 0 : index
    %c0_206 = arith.constant 0 : index
    %363 = vector.load %arg12[%c0_205, %c0_206] : memref<2x32xf32, #tpu.memory_space<vmem>>, vector<2x32xf32>
    tpu.vector_store %arg12[%c0_205, %c0_206], %360 {strides = array<i32>} : memref<2x32xf32, #tpu.memory_space<vmem>>, vector<2x32xf32>,
    %c0_207 = arith.constant 0 : index
    %c0_208 = arith.constant 0 : index
    %364 = vector.load %arg11[%c0_207, %c0_208] : memref<2x32xf32, #tpu.memory_space<vmem>>, vector<2x32xf32>
    tpu.vector_store %arg11[%c0_207, %c0_208], %362 {strides = array<i32>} : memref<2x32xf32, #tpu.memory_space<vmem>>, vector<2x32xf32>,
    %365 = arith.index_cast %341 : i32 to index
    %c0_209 = arith.constant 0 : index
    %366 = vector.load %arg9[%365, %c0_209] : memref<16x32xf32, #tpu.memory_space<vmem>>, vector<2x32xf32>
    tpu.vector_store %arg9[%365, %c0_209], %362 {strides = array<i32>} : memref<16x32xf32, #tpu.memory_space<vmem>>, vector<2x32xf32>,
    %c5_i32_210 = arith.constant 5 : i32
    %c2_i32_211 = arith.constant 2 : i32
    %367 = arith.muli %c5_i32_210, %c2_i32_211 : i32
    %368 = arith.index_cast %367 : i32 to index
    %c0_212 = arith.constant 0 : index
    %369 = vector.load %arg8[%368, %c0_212] : memref<16x128xf32, #tpu.memory_space<vmem>>, vector<2x128xf32>
    %c0_213 = arith.constant 0 : index
    %c0_214 = arith.constant 0 : index
    %370 = vector.load %arg11[%c0_213, %c0_214] : memref<2x32xf32, #tpu.memory_space<vmem>>, vector<2x32xf32>
    %cst_215 = arith.constant dense<0.000000e+00> : vector<2x128xf32>
    %371 = tpu.matmul %370, %232, %cst_215 {dimension_numbers = #tpu.dot_dimension_numbers<[1], [0], [0], [1], [0, 0, 1, 1], [], []>} : vector<2x32xf32>, vector<32x128xf32>, vector<2x128xf32> -> vector<2x128xf32>
    %372 = arith.addf %369, %371 : vector<2x128xf32>
    %373 = arith.negf %372 : vector<2x128xf32>
    %374 = math.exp %373 : vector<2x128xf32>
    %cst_216 = arith.constant 1.000000e+00 : f32
    %375 = vector.broadcast %cst_216 : f32 to vector<2x128xf32>
    %376 = arith.addf %375, %374 : vector<2x128xf32>
    %377 = arith.divf %375, %376 : vector<2x128xf32>
    %378 = math.tanh %372 : vector<2x128xf32>
    %379 = vector.extract_strided_slice %377 {offsets = [0, 0], sizes = [2, 32], strides = [1, 1]} : vector<2x128xf32> to vector<2x32xf32>
    %380 = vector.extract_strided_slice %377 {offsets = [0, 32], sizes = [2, 32], strides = [1, 1]} : vector<2x128xf32> to vector<2x32xf32>
    %381 = vector.extract_strided_slice %378 {offsets = [0, 64], sizes = [2, 32], strides = [1, 1]} : vector<2x128xf32> to vector<2x32xf32>
    %382 = vector.extract_strided_slice %377 {offsets = [0, 96], sizes = [2, 32], strides = [1, 1]} : vector<2x128xf32> to vector<2x32xf32>
    %c0_217 = arith.constant 0 : index
    %c0_218 = arith.constant 0 : index
    %383 = vector.load %arg12[%c0_217, %c0_218] : memref<2x32xf32, #tpu.memory_space<vmem>>, vector<2x32xf32>
    %384 = arith.mulf %380, %383 : vector<2x32xf32>
    %385 = arith.mulf %379, %381 : vector<2x32xf32>
    %386 = arith.addf %384, %385 : vector<2x32xf32>
    %387 = math.tanh %386 : vector<2x32xf32>
    %388 = arith.mulf %382, %387 : vector<2x32xf32>
    %c0_219 = arith.constant 0 : index
    %c0_220 = arith.constant 0 : index
    %389 = vector.load %arg12[%c0_219, %c0_220] : memref<2x32xf32, #tpu.memory_space<vmem>>, vector<2x32xf32>
    tpu.vector_store %arg12[%c0_219, %c0_220], %386 {strides = array<i32>} : memref<2x32xf32, #tpu.memory_space<vmem>>, vector<2x32xf32>,
    %c0_221 = arith.constant 0 : index
    %c0_222 = arith.constant 0 : index
    %390 = vector.load %arg11[%c0_221, %c0_222] : memref<2x32xf32, #tpu.memory_space<vmem>>, vector<2x32xf32>
    tpu.vector_store %arg11[%c0_221, %c0_222], %388 {strides = array<i32>} : memref<2x32xf32, #tpu.memory_space<vmem>>, vector<2x32xf32>,
    %391 = arith.index_cast %367 : i32 to index
    %c0_223 = arith.constant 0 : index
    %392 = vector.load %arg9[%391, %c0_223] : memref<16x32xf32, #tpu.memory_space<vmem>>, vector<2x32xf32>
    tpu.vector_store %arg9[%391, %c0_223], %388 {strides = array<i32>} : memref<16x32xf32, #tpu.memory_space<vmem>>, vector<2x32xf32>,
    %c6_i32_224 = arith.constant 6 : i32
    %c2_i32_225 = arith.constant 2 : i32
    %393 = arith.muli %c6_i32_224, %c2_i32_225 : i32
    %394 = arith.index_cast %393 : i32 to index
    %c0_226 = arith.constant 0 : index
    %395 = vector.load %arg8[%394, %c0_226] : memref<16x128xf32, #tpu.memory_space<vmem>>, vector<2x128xf32>
    %c0_227 = arith.constant 0 : index
    %c0_228 = arith.constant 0 : index
    %396 = vector.load %arg11[%c0_227, %c0_228] : memref<2x32xf32, #tpu.memory_space<vmem>>, vector<2x32xf32>
    %cst_229 = arith.constant dense<0.000000e+00> : vector<2x128xf32>
    %397 = tpu.matmul %396, %232, %cst_229 {dimension_numbers = #tpu.dot_dimension_numbers<[1], [0], [0], [1], [0, 0, 1, 1], [], []>} : vector<2x32xf32>, vector<32x128xf32>, vector<2x128xf32> -> vector<2x128xf32>
    %398 = arith.addf %395, %397 : vector<2x128xf32>
    %399 = arith.negf %398 : vector<2x128xf32>
    %400 = math.exp %399 : vector<2x128xf32>
    %cst_230 = arith.constant 1.000000e+00 : f32
    %401 = vector.broadcast %cst_230 : f32 to vector<2x128xf32>
    %402 = arith.addf %401, %400 : vector<2x128xf32>
    %403 = arith.divf %401, %402 : vector<2x128xf32>
    %404 = math.tanh %398 : vector<2x128xf32>
    %405 = vector.extract_strided_slice %403 {offsets = [0, 0], sizes = [2, 32], strides = [1, 1]} : vector<2x128xf32> to vector<2x32xf32>
    %406 = vector.extract_strided_slice %403 {offsets = [0, 32], sizes = [2, 32], strides = [1, 1]} : vector<2x128xf32> to vector<2x32xf32>
    %407 = vector.extract_strided_slice %404 {offsets = [0, 64], sizes = [2, 32], strides = [1, 1]} : vector<2x128xf32> to vector<2x32xf32>
    %408 = vector.extract_strided_slice %403 {offsets = [0, 96], sizes = [2, 32], strides = [1, 1]} : vector<2x128xf32> to vector<2x32xf32>
    %c0_231 = arith.constant 0 : index
    %c0_232 = arith.constant 0 : index
    %409 = vector.load %arg12[%c0_231, %c0_232] : memref<2x32xf32, #tpu.memory_space<vmem>>, vector<2x32xf32>
    %410 = arith.mulf %406, %409 : vector<2x32xf32>
    %411 = arith.mulf %405, %407 : vector<2x32xf32>
    %412 = arith.addf %410, %411 : vector<2x32xf32>
    %413 = math.tanh %412 : vector<2x32xf32>
    %414 = arith.mulf %408, %413 : vector<2x32xf32>
    %c0_233 = arith.constant 0 : index
    %c0_234 = arith.constant 0 : index
    %415 = vector.load %arg12[%c0_233, %c0_234] : memref<2x32xf32, #tpu.memory_space<vmem>>, vector<2x32xf32>
    tpu.vector_store %arg12[%c0_233, %c0_234], %412 {strides = array<i32>} : memref<2x32xf32, #tpu.memory_space<vmem>>, vector<2x32xf32>,
    %c0_235 = arith.constant 0 : index
    %c0_236 = arith.constant 0 : index
    %416 = vector.load %arg11[%c0_235, %c0_236] : memref<2x32xf32, #tpu.memory_space<vmem>>, vector<2x32xf32>
    tpu.vector_store %arg11[%c0_235, %c0_236], %414 {strides = array<i32>} : memref<2x32xf32, #tpu.memory_space<vmem>>, vector<2x32xf32>,
    %417 = arith.index_cast %393 : i32 to index
    %c0_237 = arith.constant 0 : index
    %418 = vector.load %arg9[%417, %c0_237] : memref<16x32xf32, #tpu.memory_space<vmem>>, vector<2x32xf32>
    tpu.vector_store %arg9[%417, %c0_237], %414 {strides = array<i32>} : memref<16x32xf32, #tpu.memory_space<vmem>>, vector<2x32xf32>,
    %c7_i32_238 = arith.constant 7 : i32
    %c2_i32_239 = arith.constant 2 : i32
    %419 = arith.muli %c7_i32_238, %c2_i32_239 : i32
    %420 = arith.index_cast %419 : i32 to index
    %c0_240 = arith.constant 0 : index
    %421 = vector.load %arg8[%420, %c0_240] : memref<16x128xf32, #tpu.memory_space<vmem>>, vector<2x128xf32>
    %c0_241 = arith.constant 0 : index
    %c0_242 = arith.constant 0 : index
    %422 = vector.load %arg11[%c0_241, %c0_242] : memref<2x32xf32, #tpu.memory_space<vmem>>, vector<2x32xf32>
    %cst_243 = arith.constant dense<0.000000e+00> : vector<2x128xf32>
    %423 = tpu.matmul %422, %232, %cst_243 {dimension_numbers = #tpu.dot_dimension_numbers<[1], [0], [0], [1], [0, 0, 1, 1], [], []>} : vector<2x32xf32>, vector<32x128xf32>, vector<2x128xf32> -> vector<2x128xf32>
    %424 = arith.addf %421, %423 : vector<2x128xf32>
    %425 = arith.negf %424 : vector<2x128xf32>
    %426 = math.exp %425 : vector<2x128xf32>
    %cst_244 = arith.constant 1.000000e+00 : f32
    %427 = vector.broadcast %cst_244 : f32 to vector<2x128xf32>
    %428 = arith.addf %427, %426 : vector<2x128xf32>
    %429 = arith.divf %427, %428 : vector<2x128xf32>
    %430 = math.tanh %424 : vector<2x128xf32>
    %431 = vector.extract_strided_slice %429 {offsets = [0, 0], sizes = [2, 32], strides = [1, 1]} : vector<2x128xf32> to vector<2x32xf32>
    %432 = vector.extract_strided_slice %429 {offsets = [0, 32], sizes = [2, 32], strides = [1, 1]} : vector<2x128xf32> to vector<2x32xf32>
    %433 = vector.extract_strided_slice %430 {offsets = [0, 64], sizes = [2, 32], strides = [1, 1]} : vector<2x128xf32> to vector<2x32xf32>
    %434 = vector.extract_strided_slice %429 {offsets = [0, 96], sizes = [2, 32], strides = [1, 1]} : vector<2x128xf32> to vector<2x32xf32>
    %c0_245 = arith.constant 0 : index
    %c0_246 = arith.constant 0 : index
    %435 = vector.load %arg12[%c0_245, %c0_246] : memref<2x32xf32, #tpu.memory_space<vmem>>, vector<2x32xf32>
    %436 = arith.mulf %432, %435 : vector<2x32xf32>
    %437 = arith.mulf %431, %433 : vector<2x32xf32>
    %438 = arith.addf %436, %437 : vector<2x32xf32>
    %439 = math.tanh %438 : vector<2x32xf32>
    %440 = arith.mulf %434, %439 : vector<2x32xf32>
    %c0_247 = arith.constant 0 : index
    %c0_248 = arith.constant 0 : index
    %441 = vector.load %arg12[%c0_247, %c0_248] : memref<2x32xf32, #tpu.memory_space<vmem>>, vector<2x32xf32>
    tpu.vector_store %arg12[%c0_247, %c0_248], %438 {strides = array<i32>} : memref<2x32xf32, #tpu.memory_space<vmem>>, vector<2x32xf32>,
    %c0_249 = arith.constant 0 : index
    %c0_250 = arith.constant 0 : index
    %442 = vector.load %arg11[%c0_249, %c0_250] : memref<2x32xf32, #tpu.memory_space<vmem>>, vector<2x32xf32>
    tpu.vector_store %arg11[%c0_249, %c0_250], %440 {strides = array<i32>} : memref<2x32xf32, #tpu.memory_space<vmem>>, vector<2x32xf32>,
    %443 = arith.index_cast %419 : i32 to index
    %c0_251 = arith.constant 0 : index
    %444 = vector.load %arg9[%443, %c0_251] : memref<16x32xf32, #tpu.memory_space<vmem>>, vector<2x32xf32>
    tpu.vector_store %arg9[%443, %c0_251], %440 {strides = array<i32>} : memref<16x32xf32, #tpu.memory_space<vmem>>, vector<2x32xf32>,
    %c8_i32_252 = arith.constant 8 : i32
    %c0_253 = arith.constant 0 : index
    %c0_254 = arith.constant 0 : index
    %445 = vector.load %arg9[%c0_253, %c0_254] : memref<16x32xf32, #tpu.memory_space<vmem>>, vector<16x32xf32>
    %c1_255 = arith.constant 1 : index
    %c0_256 = arith.constant 0 : index
    %c0_257 = arith.constant 0 : index
    %446 = vector.load %arg2[%c1_255, %c0_256, %c0_257] : memref<2x32x128xf32, #tpu.memory_space<vmem>>, vector<1x32x128xf32>
    %447 = vector.shape_cast %446 : vector<1x32x128xf32> to vector<32x128xf32>
    %cst_258 = arith.constant dense<0.000000e+00> : vector<16x128xf32>
    %448 = tpu.matmul %445, %447, %cst_258 {dimension_numbers = #tpu.dot_dimension_numbers<[1], [0], [0], [1], [0, 0, 1, 1], [], []>} : vector<16x32xf32>, vector<32x128xf32>, vector<16x128xf32> -> vector<16x128xf32>
    %c2 = arith.constant 2 : index
    %c0_259 = arith.constant 0 : index
    %c0_260 = arith.constant 0 : index
    %449 = vector.load %arg4[%c2, %c0_259, %c0_260] : memref<3x1x128xf32, #tpu.memory_space<vmem>>, vector<1x1x128xf32>
    %450 = vector.shape_cast %449 : vector<1x1x128xf32> to vector<1x128xf32>
    %451 = vector.broadcast %450 : vector<1x128xf32> to vector<16x128xf32>
    %452 = arith.addf %448, %451 : vector<16x128xf32>
    %c0_261 = arith.constant 0 : index
    %c0_262 = arith.constant 0 : index
    %453 = vector.load %arg8[%c0_261, %c0_262] : memref<16x128xf32, #tpu.memory_space<vmem>>, vector<16x128xf32>
    tpu.vector_store %arg8[%c0_261, %c0_262], %452 {strides = array<i32>} : memref<16x128xf32, #tpu.memory_space<vmem>>, vector<16x128xf32>,
    %c2_263 = arith.constant 2 : index
    %c0_264 = arith.constant 0 : index
    %c0_265 = arith.constant 0 : index
    %454 = vector.load %arg3[%c2_263, %c0_264, %c0_265] : memref<3x32x128xf32, #tpu.memory_space<vmem>>, vector<1x32x128xf32>
    %455 = vector.shape_cast %454 : vector<1x32x128xf32> to vector<32x128xf32>
    %cst_266 = arith.constant 0.000000e+00 : f32
    %456 = vector.broadcast %cst_266 : f32 to vector<2x32xf32>
    %c0_267 = arith.constant 0 : index
    %c0_268 = arith.constant 0 : index
    %457 = vector.load %arg11[%c0_267, %c0_268] : memref<2x32xf32, #tpu.memory_space<vmem>>, vector<2x32xf32>
    tpu.vector_store %arg11[%c0_267, %c0_268], %456 {strides = array<i32>} : memref<2x32xf32, #tpu.memory_space<vmem>>, vector<2x32xf32>,
    %cst_269 = arith.constant 0.000000e+00 : f32
    %458 = vector.broadcast %cst_269 : f32 to vector<2x32xf32>
    %c0_270 = arith.constant 0 : index
    %c0_271 = arith.constant 0 : index
    %459 = vector.load %arg12[%c0_270, %c0_271] : memref<2x32xf32, #tpu.memory_space<vmem>>, vector<2x32xf32>
    tpu.vector_store %arg12[%c0_270, %c0_271], %458 {strides = array<i32>} : memref<2x32xf32, #tpu.memory_space<vmem>>, vector<2x32xf32>,
    %c0_i32_272 = arith.constant 0 : i32
    %c2_i32_273 = arith.constant 2 : i32
    %460 = arith.muli %c0_i32_272, %c2_i32_273 : i32
    %461 = arith.index_cast %460 : i32 to index
    %c0_274 = arith.constant 0 : index
    %462 = vector.load %arg8[%461, %c0_274] : memref<16x128xf32, #tpu.memory_space<vmem>>, vector<2x128xf32>
    %c0_275 = arith.constant 0 : index
    %c0_276 = arith.constant 0 : index
    %463 = vector.load %arg11[%c0_275, %c0_276] : memref<2x32xf32, #tpu.memory_space<vmem>>, vector<2x32xf32>
    %cst_277 = arith.constant dense<0.000000e+00> : vector<2x128xf32>
    %464 = tpu.matmul %463, %455, %cst_277 {dimension_numbers = #tpu.dot_dimension_numbers<[1], [0], [0], [1], [0, 0, 1, 1], [], []>} : vector<2x32xf32>, vector<32x128xf32>, vector<2x128xf32> -> vector<2x128xf32>
    %465 = arith.addf %462, %464 : vector<2x128xf32>
    %466 = arith.negf %465 : vector<2x128xf32>
    %467 = math.exp %466 : vector<2x128xf32>
    %cst_278 = arith.constant 1.000000e+00 : f32
    %468 = vector.broadcast %cst_278 : f32 to vector<2x128xf32>
    %469 = arith.addf %468, %467 : vector<2x128xf32>
    %470 = arith.divf %468, %469 : vector<2x128xf32>
    %471 = math.tanh %465 : vector<2x128xf32>
    %472 = vector.extract_strided_slice %470 {offsets = [0, 0], sizes = [2, 32], strides = [1, 1]} : vector<2x128xf32> to vector<2x32xf32>
    %473 = vector.extract_strided_slice %470 {offsets = [0, 32], sizes = [2, 32], strides = [1, 1]} : vector<2x128xf32> to vector<2x32xf32>
    %474 = vector.extract_strided_slice %471 {offsets = [0, 64], sizes = [2, 32], strides = [1, 1]} : vector<2x128xf32> to vector<2x32xf32>
    %475 = vector.extract_strided_slice %470 {offsets = [0, 96], sizes = [2, 32], strides = [1, 1]} : vector<2x128xf32> to vector<2x32xf32>
    %c0_279 = arith.constant 0 : index
    %c0_280 = arith.constant 0 : index
    %476 = vector.load %arg12[%c0_279, %c0_280] : memref<2x32xf32, #tpu.memory_space<vmem>>, vector<2x32xf32>
    %477 = arith.mulf %473, %476 : vector<2x32xf32>
    %478 = arith.mulf %472, %474 : vector<2x32xf32>
    %479 = arith.addf %477, %478 : vector<2x32xf32>
    %480 = math.tanh %479 : vector<2x32xf32>
    %481 = arith.mulf %475, %480 : vector<2x32xf32>
    %c0_281 = arith.constant 0 : index
    %c0_282 = arith.constant 0 : index
    %482 = vector.load %arg12[%c0_281, %c0_282] : memref<2x32xf32, #tpu.memory_space<vmem>>, vector<2x32xf32>
    tpu.vector_store %arg12[%c0_281, %c0_282], %479 {strides = array<i32>} : memref<2x32xf32, #tpu.memory_space<vmem>>, vector<2x32xf32>,
    %c0_283 = arith.constant 0 : index
    %c0_284 = arith.constant 0 : index
    %483 = vector.load %arg11[%c0_283, %c0_284] : memref<2x32xf32, #tpu.memory_space<vmem>>, vector<2x32xf32>
    tpu.vector_store %arg11[%c0_283, %c0_284], %481 {strides = array<i32>} : memref<2x32xf32, #tpu.memory_space<vmem>>, vector<2x32xf32>,
    %484 = vector.extract_strided_slice %481 {offsets = [0, 0], sizes = [1, 32], strides = [1, 1]} : vector<2x32xf32> to vector<1x32xf32>
    %c0_i32_285 = arith.constant 0 : i32
    %485 = arith.addi %c0_i32_285, %c0_i32_272 : i32
    %486 = arith.index_cast %485 : i32 to index
    %c0_286 = arith.constant 0 : index
    %487 = vector.load %arg10[%486, %c0_286] : memref<16x32xf32, #tpu.memory_space<vmem>>, vector<1x32xf32>
    tpu.vector_store %arg10[%486, %c0_286], %484 {strides = array<i32>} : memref<16x32xf32, #tpu.memory_space<vmem>>, vector<1x32xf32>,
    %488 = vector.extract_strided_slice %481 {offsets = [1, 0], sizes = [1, 32], strides = [1, 1]} : vector<2x32xf32> to vector<1x32xf32>
    %c8_i32_287 = arith.constant 8 : i32
    %489 = arith.addi %c8_i32_287, %c0_i32_272 : i32
    %490 = arith.index_cast %489 : i32 to index
    %c0_288 = arith.constant 0 : index
    %491 = vector.load %arg10[%490, %c0_288] : memref<16x32xf32, #tpu.memory_space<vmem>>, vector<1x32xf32>
    tpu.vector_store %arg10[%490, %c0_288], %488 {strides = array<i32>} : memref<16x32xf32, #tpu.memory_space<vmem>>, vector<1x32xf32>,
    %c1_i32_289 = arith.constant 1 : i32
    %c2_i32_290 = arith.constant 2 : i32
    %492 = arith.muli %c1_i32_289, %c2_i32_290 : i32
    %493 = arith.index_cast %492 : i32 to index
    %c0_291 = arith.constant 0 : index
    %494 = vector.load %arg8[%493, %c0_291] : memref<16x128xf32, #tpu.memory_space<vmem>>, vector<2x128xf32>
    %c0_292 = arith.constant 0 : index
    %c0_293 = arith.constant 0 : index
    %495 = vector.load %arg11[%c0_292, %c0_293] : memref<2x32xf32, #tpu.memory_space<vmem>>, vector<2x32xf32>
    %cst_294 = arith.constant dense<0.000000e+00> : vector<2x128xf32>
    %496 = tpu.matmul %495, %455, %cst_294 {dimension_numbers = #tpu.dot_dimension_numbers<[1], [0], [0], [1], [0, 0, 1, 1], [], []>} : vector<2x32xf32>, vector<32x128xf32>, vector<2x128xf32> -> vector<2x128xf32>
    %497 = arith.addf %494, %496 : vector<2x128xf32>
    %498 = arith.negf %497 : vector<2x128xf32>
    %499 = math.exp %498 : vector<2x128xf32>
    %cst_295 = arith.constant 1.000000e+00 : f32
    %500 = vector.broadcast %cst_295 : f32 to vector<2x128xf32>
    %501 = arith.addf %500, %499 : vector<2x128xf32>
    %502 = arith.divf %500, %501 : vector<2x128xf32>
    %503 = math.tanh %497 : vector<2x128xf32>
    %504 = vector.extract_strided_slice %502 {offsets = [0, 0], sizes = [2, 32], strides = [1, 1]} : vector<2x128xf32> to vector<2x32xf32>
    %505 = vector.extract_strided_slice %502 {offsets = [0, 32], sizes = [2, 32], strides = [1, 1]} : vector<2x128xf32> to vector<2x32xf32>
    %506 = vector.extract_strided_slice %503 {offsets = [0, 64], sizes = [2, 32], strides = [1, 1]} : vector<2x128xf32> to vector<2x32xf32>
    %507 = vector.extract_strided_slice %502 {offsets = [0, 96], sizes = [2, 32], strides = [1, 1]} : vector<2x128xf32> to vector<2x32xf32>
    %c0_296 = arith.constant 0 : index
    %c0_297 = arith.constant 0 : index
    %508 = vector.load %arg12[%c0_296, %c0_297] : memref<2x32xf32, #tpu.memory_space<vmem>>, vector<2x32xf32>
    %509 = arith.mulf %505, %508 : vector<2x32xf32>
    %510 = arith.mulf %504, %506 : vector<2x32xf32>
    %511 = arith.addf %509, %510 : vector<2x32xf32>
    %512 = math.tanh %511 : vector<2x32xf32>
    %513 = arith.mulf %507, %512 : vector<2x32xf32>
    %c0_298 = arith.constant 0 : index
    %c0_299 = arith.constant 0 : index
    %514 = vector.load %arg12[%c0_298, %c0_299] : memref<2x32xf32, #tpu.memory_space<vmem>>, vector<2x32xf32>
    tpu.vector_store %arg12[%c0_298, %c0_299], %511 {strides = array<i32>} : memref<2x32xf32, #tpu.memory_space<vmem>>, vector<2x32xf32>,
    %c0_300 = arith.constant 0 : index
    %c0_301 = arith.constant 0 : index
    %515 = vector.load %arg11[%c0_300, %c0_301] : memref<2x32xf32, #tpu.memory_space<vmem>>, vector<2x32xf32>
    tpu.vector_store %arg11[%c0_300, %c0_301], %513 {strides = array<i32>} : memref<2x32xf32, #tpu.memory_space<vmem>>, vector<2x32xf32>,
    %516 = vector.extract_strided_slice %513 {offsets = [0, 0], sizes = [1, 32], strides = [1, 1]} : vector<2x32xf32> to vector<1x32xf32>
    %c0_i32_302 = arith.constant 0 : i32
    %517 = arith.addi %c0_i32_302, %c1_i32_289 : i32
    %518 = arith.index_cast %517 : i32 to index
    %c0_303 = arith.constant 0 : index
    %519 = vector.load %arg10[%518, %c0_303] : memref<16x32xf32, #tpu.memory_space<vmem>>, vector<1x32xf32>
    tpu.vector_store %arg10[%518, %c0_303], %516 {strides = array<i32>} : memref<16x32xf32, #tpu.memory_space<vmem>>, vector<1x32xf32>,
    %520 = vector.extract_strided_slice %513 {offsets = [1, 0], sizes = [1, 32], strides = [1, 1]} : vector<2x32xf32> to vector<1x32xf32>
    %c8_i32_304 = arith.constant 8 : i32
    %521 = arith.addi %c8_i32_304, %c1_i32_289 : i32
    %522 = arith.index_cast %521 : i32 to index
    %c0_305 = arith.constant 0 : index
    %523 = vector.load %arg10[%522, %c0_305] : memref<16x32xf32, #tpu.memory_space<vmem>>, vector<1x32xf32>
    tpu.vector_store %arg10[%522, %c0_305], %520 {strides = array<i32>} : memref<16x32xf32, #tpu.memory_space<vmem>>, vector<1x32xf32>,
    %c2_i32_306 = arith.constant 2 : i32
    %c2_i32_307 = arith.constant 2 : i32
    %524 = arith.muli %c2_i32_306, %c2_i32_307 : i32
    %525 = arith.index_cast %524 : i32 to index
    %c0_308 = arith.constant 0 : index
    %526 = vector.load %arg8[%525, %c0_308] : memref<16x128xf32, #tpu.memory_space<vmem>>, vector<2x128xf32>
    %c0_309 = arith.constant 0 : index
    %c0_310 = arith.constant 0 : index
    %527 = vector.load %arg11[%c0_309, %c0_310] : memref<2x32xf32, #tpu.memory_space<vmem>>, vector<2x32xf32>
    %cst_311 = arith.constant dense<0.000000e+00> : vector<2x128xf32>
    %528 = tpu.matmul %527, %455, %cst_311 {dimension_numbers = #tpu.dot_dimension_numbers<[1], [0], [0], [1], [0, 0, 1, 1], [], []>} : vector<2x32xf32>, vector<32x128xf32>, vector<2x128xf32> -> vector<2x128xf32>
    %529 = arith.addf %526, %528 : vector<2x128xf32>
    %530 = arith.negf %529 : vector<2x128xf32>
    %531 = math.exp %530 : vector<2x128xf32>
    %cst_312 = arith.constant 1.000000e+00 : f32
    %532 = vector.broadcast %cst_312 : f32 to vector<2x128xf32>
    %533 = arith.addf %532, %531 : vector<2x128xf32>
    %534 = arith.divf %532, %533 : vector<2x128xf32>
    %535 = math.tanh %529 : vector<2x128xf32>
    %536 = vector.extract_strided_slice %534 {offsets = [0, 0], sizes = [2, 32], strides = [1, 1]} : vector<2x128xf32> to vector<2x32xf32>
    %537 = vector.extract_strided_slice %534 {offsets = [0, 32], sizes = [2, 32], strides = [1, 1]} : vector<2x128xf32> to vector<2x32xf32>
    %538 = vector.extract_strided_slice %535 {offsets = [0, 64], sizes = [2, 32], strides = [1, 1]} : vector<2x128xf32> to vector<2x32xf32>
    %539 = vector.extract_strided_slice %534 {offsets = [0, 96], sizes = [2, 32], strides = [1, 1]} : vector<2x128xf32> to vector<2x32xf32>
    %c0_313 = arith.constant 0 : index
    %c0_314 = arith.constant 0 : index
    %540 = vector.load %arg12[%c0_313, %c0_314] : memref<2x32xf32, #tpu.memory_space<vmem>>, vector<2x32xf32>
    %541 = arith.mulf %537, %540 : vector<2x32xf32>
    %542 = arith.mulf %536, %538 : vector<2x32xf32>
    %543 = arith.addf %541, %542 : vector<2x32xf32>
    %544 = math.tanh %543 : vector<2x32xf32>
    %545 = arith.mulf %539, %544 : vector<2x32xf32>
    %c0_315 = arith.constant 0 : index
    %c0_316 = arith.constant 0 : index
    %546 = vector.load %arg12[%c0_315, %c0_316] : memref<2x32xf32, #tpu.memory_space<vmem>>, vector<2x32xf32>
    tpu.vector_store %arg12[%c0_315, %c0_316], %543 {strides = array<i32>} : memref<2x32xf32, #tpu.memory_space<vmem>>, vector<2x32xf32>,
    %c0_317 = arith.constant 0 : index
    %c0_318 = arith.constant 0 : index
    %547 = vector.load %arg11[%c0_317, %c0_318] : memref<2x32xf32, #tpu.memory_space<vmem>>, vector<2x32xf32>
    tpu.vector_store %arg11[%c0_317, %c0_318], %545 {strides = array<i32>} : memref<2x32xf32, #tpu.memory_space<vmem>>, vector<2x32xf32>,
    %548 = vector.extract_strided_slice %545 {offsets = [0, 0], sizes = [1, 32], strides = [1, 1]} : vector<2x32xf32> to vector<1x32xf32>
    %c0_i32_319 = arith.constant 0 : i32
    %549 = arith.addi %c0_i32_319, %c2_i32_306 : i32
    %550 = arith.index_cast %549 : i32 to index
    %c0_320 = arith.constant 0 : index
    %551 = vector.load %arg10[%550, %c0_320] : memref<16x32xf32, #tpu.memory_space<vmem>>, vector<1x32xf32>
    tpu.vector_store %arg10[%550, %c0_320], %548 {strides = array<i32>} : memref<16x32xf32, #tpu.memory_space<vmem>>, vector<1x32xf32>,
    %552 = vector.extract_strided_slice %545 {offsets = [1, 0], sizes = [1, 32], strides = [1, 1]} : vector<2x32xf32> to vector<1x32xf32>
    %c8_i32_321 = arith.constant 8 : i32
    %553 = arith.addi %c8_i32_321, %c2_i32_306 : i32
    %554 = arith.index_cast %553 : i32 to index
    %c0_322 = arith.constant 0 : index
    %555 = vector.load %arg10[%554, %c0_322] : memref<16x32xf32, #tpu.memory_space<vmem>>, vector<1x32xf32>
    tpu.vector_store %arg10[%554, %c0_322], %552 {strides = array<i32>} : memref<16x32xf32, #tpu.memory_space<vmem>>, vector<1x32xf32>,
    %c3_i32_323 = arith.constant 3 : i32
    %c2_i32_324 = arith.constant 2 : i32
    %556 = arith.muli %c3_i32_323, %c2_i32_324 : i32
    %557 = arith.index_cast %556 : i32 to index
    %c0_325 = arith.constant 0 : index
    %558 = vector.load %arg8[%557, %c0_325] : memref<16x128xf32, #tpu.memory_space<vmem>>, vector<2x128xf32>
    %c0_326 = arith.constant 0 : index
    %c0_327 = arith.constant 0 : index
    %559 = vector.load %arg11[%c0_326, %c0_327] : memref<2x32xf32, #tpu.memory_space<vmem>>, vector<2x32xf32>
    %cst_328 = arith.constant dense<0.000000e+00> : vector<2x128xf32>
    %560 = tpu.matmul %559, %455, %cst_328 {dimension_numbers = #tpu.dot_dimension_numbers<[1], [0], [0], [1], [0, 0, 1, 1], [], []>} : vector<2x32xf32>, vector<32x128xf32>, vector<2x128xf32> -> vector<2x128xf32>
    %561 = arith.addf %558, %560 : vector<2x128xf32>
    %562 = arith.negf %561 : vector<2x128xf32>
    %563 = math.exp %562 : vector<2x128xf32>
    %cst_329 = arith.constant 1.000000e+00 : f32
    %564 = vector.broadcast %cst_329 : f32 to vector<2x128xf32>
    %565 = arith.addf %564, %563 : vector<2x128xf32>
    %566 = arith.divf %564, %565 : vector<2x128xf32>
    %567 = math.tanh %561 : vector<2x128xf32>
    %568 = vector.extract_strided_slice %566 {offsets = [0, 0], sizes = [2, 32], strides = [1, 1]} : vector<2x128xf32> to vector<2x32xf32>
    %569 = vector.extract_strided_slice %566 {offsets = [0, 32], sizes = [2, 32], strides = [1, 1]} : vector<2x128xf32> to vector<2x32xf32>
    %570 = vector.extract_strided_slice %567 {offsets = [0, 64], sizes = [2, 32], strides = [1, 1]} : vector<2x128xf32> to vector<2x32xf32>
    %571 = vector.extract_strided_slice %566 {offsets = [0, 96], sizes = [2, 32], strides = [1, 1]} : vector<2x128xf32> to vector<2x32xf32>
    %c0_330 = arith.constant 0 : index
    %c0_331 = arith.constant 0 : index
    %572 = vector.load %arg12[%c0_330, %c0_331] : memref<2x32xf32, #tpu.memory_space<vmem>>, vector<2x32xf32>
    %573 = arith.mulf %569, %572 : vector<2x32xf32>
    %574 = arith.mulf %568, %570 : vector<2x32xf32>
    %575 = arith.addf %573, %574 : vector<2x32xf32>
    %576 = math.tanh %575 : vector<2x32xf32>
    %577 = arith.mulf %571, %576 : vector<2x32xf32>
    %c0_332 = arith.constant 0 : index
    %c0_333 = arith.constant 0 : index
    %578 = vector.load %arg12[%c0_332, %c0_333] : memref<2x32xf32, #tpu.memory_space<vmem>>, vector<2x32xf32>
    tpu.vector_store %arg12[%c0_332, %c0_333], %575 {strides = array<i32>} : memref<2x32xf32, #tpu.memory_space<vmem>>, vector<2x32xf32>,
    %c0_334 = arith.constant 0 : index
    %c0_335 = arith.constant 0 : index
    %579 = vector.load %arg11[%c0_334, %c0_335] : memref<2x32xf32, #tpu.memory_space<vmem>>, vector<2x32xf32>
    tpu.vector_store %arg11[%c0_334, %c0_335], %577 {strides = array<i32>} : memref<2x32xf32, #tpu.memory_space<vmem>>, vector<2x32xf32>,
    %580 = vector.extract_strided_slice %577 {offsets = [0, 0], sizes = [1, 32], strides = [1, 1]} : vector<2x32xf32> to vector<1x32xf32>
    %c0_i32_336 = arith.constant 0 : i32
    %581 = arith.addi %c0_i32_336, %c3_i32_323 : i32
    %582 = arith.index_cast %581 : i32 to index
    %c0_337 = arith.constant 0 : index
    %583 = vector.load %arg10[%582, %c0_337] : memref<16x32xf32, #tpu.memory_space<vmem>>, vector<1x32xf32>
    tpu.vector_store %arg10[%582, %c0_337], %580 {strides = array<i32>} : memref<16x32xf32, #tpu.memory_space<vmem>>, vector<1x32xf32>,
    %584 = vector.extract_strided_slice %577 {offsets = [1, 0], sizes = [1, 32], strides = [1, 1]} : vector<2x32xf32> to vector<1x32xf32>
    %c8_i32_338 = arith.constant 8 : i32
    %585 = arith.addi %c8_i32_338, %c3_i32_323 : i32
    %586 = arith.index_cast %585 : i32 to index
    %c0_339 = arith.constant 0 : index
    %587 = vector.load %arg10[%586, %c0_339] : memref<16x32xf32, #tpu.memory_space<vmem>>, vector<1x32xf32>
    tpu.vector_store %arg10[%586, %c0_339], %584 {strides = array<i32>} : memref<16x32xf32, #tpu.memory_space<vmem>>, vector<1x32xf32>,
    %c4_i32_340 = arith.constant 4 : i32
    %c2_i32_341 = arith.constant 2 : i32
    %588 = arith.muli %c4_i32_340, %c2_i32_341 : i32
    %589 = arith.index_cast %588 : i32 to index
    %c0_342 = arith.constant 0 : index
    %590 = vector.load %arg8[%589, %c0_342] : memref<16x128xf32, #tpu.memory_space<vmem>>, vector<2x128xf32>
    %c0_343 = arith.constant 0 : index
    %c0_344 = arith.constant 0 : index
    %591 = vector.load %arg11[%c0_343, %c0_344] : memref<2x32xf32, #tpu.memory_space<vmem>>, vector<2x32xf32>
    %cst_345 = arith.constant dense<0.000000e+00> : vector<2x128xf32>
    %592 = tpu.matmul %591, %455, %cst_345 {dimension_numbers = #tpu.dot_dimension_numbers<[1], [0], [0], [1], [0, 0, 1, 1], [], []>} : vector<2x32xf32>, vector<32x128xf32>, vector<2x128xf32> -> vector<2x128xf32>
    %593 = arith.addf %590, %592 : vector<2x128xf32>
    %594 = arith.negf %593 : vector<2x128xf32>
    %595 = math.exp %594 : vector<2x128xf32>
    %cst_346 = arith.constant 1.000000e+00 : f32
    %596 = vector.broadcast %cst_346 : f32 to vector<2x128xf32>
    %597 = arith.addf %596, %595 : vector<2x128xf32>
    %598 = arith.divf %596, %597 : vector<2x128xf32>
    %599 = math.tanh %593 : vector<2x128xf32>
    %600 = vector.extract_strided_slice %598 {offsets = [0, 0], sizes = [2, 32], strides = [1, 1]} : vector<2x128xf32> to vector<2x32xf32>
    %601 = vector.extract_strided_slice %598 {offsets = [0, 32], sizes = [2, 32], strides = [1, 1]} : vector<2x128xf32> to vector<2x32xf32>
    %602 = vector.extract_strided_slice %599 {offsets = [0, 64], sizes = [2, 32], strides = [1, 1]} : vector<2x128xf32> to vector<2x32xf32>
    %603 = vector.extract_strided_slice %598 {offsets = [0, 96], sizes = [2, 32], strides = [1, 1]} : vector<2x128xf32> to vector<2x32xf32>
    %c0_347 = arith.constant 0 : index
    %c0_348 = arith.constant 0 : index
    %604 = vector.load %arg12[%c0_347, %c0_348] : memref<2x32xf32, #tpu.memory_space<vmem>>, vector<2x32xf32>
    %605 = arith.mulf %601, %604 : vector<2x32xf32>
    %606 = arith.mulf %600, %602 : vector<2x32xf32>
    %607 = arith.addf %605, %606 : vector<2x32xf32>
    %608 = math.tanh %607 : vector<2x32xf32>
    %609 = arith.mulf %603, %608 : vector<2x32xf32>
    %c0_349 = arith.constant 0 : index
    %c0_350 = arith.constant 0 : index
    %610 = vector.load %arg12[%c0_349, %c0_350] : memref<2x32xf32, #tpu.memory_space<vmem>>, vector<2x32xf32>
    tpu.vector_store %arg12[%c0_349, %c0_350], %607 {strides = array<i32>} : memref<2x32xf32, #tpu.memory_space<vmem>>, vector<2x32xf32>,
    %c0_351 = arith.constant 0 : index
    %c0_352 = arith.constant 0 : index
    %611 = vector.load %arg11[%c0_351, %c0_352] : memref<2x32xf32, #tpu.memory_space<vmem>>, vector<2x32xf32>
    tpu.vector_store %arg11[%c0_351, %c0_352], %609 {strides = array<i32>} : memref<2x32xf32, #tpu.memory_space<vmem>>, vector<2x32xf32>,
    %612 = vector.extract_strided_slice %609 {offsets = [0, 0], sizes = [1, 32], strides = [1, 1]} : vector<2x32xf32> to vector<1x32xf32>
    %c0_i32_353 = arith.constant 0 : i32
    %613 = arith.addi %c0_i32_353, %c4_i32_340 : i32
    %614 = arith.index_cast %613 : i32 to index
    %c0_354 = arith.constant 0 : index
    %615 = vector.load %arg10[%614, %c0_354] : memref<16x32xf32, #tpu.memory_space<vmem>>, vector<1x32xf32>
    tpu.vector_store %arg10[%614, %c0_354], %612 {strides = array<i32>} : memref<16x32xf32, #tpu.memory_space<vmem>>, vector<1x32xf32>,
    %616 = vector.extract_strided_slice %609 {offsets = [1, 0], sizes = [1, 32], strides = [1, 1]} : vector<2x32xf32> to vector<1x32xf32>
    %c8_i32_355 = arith.constant 8 : i32
    %617 = arith.addi %c8_i32_355, %c4_i32_340 : i32
    %618 = arith.index_cast %617 : i32 to index
    %c0_356 = arith.constant 0 : index
    %619 = vector.load %arg10[%618, %c0_356] : memref<16x32xf32, #tpu.memory_space<vmem>>, vector<1x32xf32>
    tpu.vector_store %arg10[%618, %c0_356], %616 {strides = array<i32>} : memref<16x32xf32, #tpu.memory_space<vmem>>, vector<1x32xf32>,
    %c5_i32_357 = arith.constant 5 : i32
    %c2_i32_358 = arith.constant 2 : i32
    %620 = arith.muli %c5_i32_357, %c2_i32_358 : i32
    %621 = arith.index_cast %620 : i32 to index
    %c0_359 = arith.constant 0 : index
    %622 = vector.load %arg8[%621, %c0_359] : memref<16x128xf32, #tpu.memory_space<vmem>>, vector<2x128xf32>
    %c0_360 = arith.constant 0 : index
    %c0_361 = arith.constant 0 : index
    %623 = vector.load %arg11[%c0_360, %c0_361] : memref<2x32xf32, #tpu.memory_space<vmem>>, vector<2x32xf32>
    %cst_362 = arith.constant dense<0.000000e+00> : vector<2x128xf32>
    %624 = tpu.matmul %623, %455, %cst_362 {dimension_numbers = #tpu.dot_dimension_numbers<[1], [0], [0], [1], [0, 0, 1, 1], [], []>} : vector<2x32xf32>, vector<32x128xf32>, vector<2x128xf32> -> vector<2x128xf32>
    %625 = arith.addf %622, %624 : vector<2x128xf32>
    %626 = arith.negf %625 : vector<2x128xf32>
    %627 = math.exp %626 : vector<2x128xf32>
    %cst_363 = arith.constant 1.000000e+00 : f32
    %628 = vector.broadcast %cst_363 : f32 to vector<2x128xf32>
    %629 = arith.addf %628, %627 : vector<2x128xf32>
    %630 = arith.divf %628, %629 : vector<2x128xf32>
    %631 = math.tanh %625 : vector<2x128xf32>
    %632 = vector.extract_strided_slice %630 {offsets = [0, 0], sizes = [2, 32], strides = [1, 1]} : vector<2x128xf32> to vector<2x32xf32>
    %633 = vector.extract_strided_slice %630 {offsets = [0, 32], sizes = [2, 32], strides = [1, 1]} : vector<2x128xf32> to vector<2x32xf32>
    %634 = vector.extract_strided_slice %631 {offsets = [0, 64], sizes = [2, 32], strides = [1, 1]} : vector<2x128xf32> to vector<2x32xf32>
    %635 = vector.extract_strided_slice %630 {offsets = [0, 96], sizes = [2, 32], strides = [1, 1]} : vector<2x128xf32> to vector<2x32xf32>
    %c0_364 = arith.constant 0 : index
    %c0_365 = arith.constant 0 : index
    %636 = vector.load %arg12[%c0_364, %c0_365] : memref<2x32xf32, #tpu.memory_space<vmem>>, vector<2x32xf32>
    %637 = arith.mulf %633, %636 : vector<2x32xf32>
    %638 = arith.mulf %632, %634 : vector<2x32xf32>
    %639 = arith.addf %637, %638 : vector<2x32xf32>
    %640 = math.tanh %639 : vector<2x32xf32>
    %641 = arith.mulf %635, %640 : vector<2x32xf32>
    %c0_366 = arith.constant 0 : index
    %c0_367 = arith.constant 0 : index
    %642 = vector.load %arg12[%c0_366, %c0_367] : memref<2x32xf32, #tpu.memory_space<vmem>>, vector<2x32xf32>
    tpu.vector_store %arg12[%c0_366, %c0_367], %639 {strides = array<i32>} : memref<2x32xf32, #tpu.memory_space<vmem>>, vector<2x32xf32>,
    %c0_368 = arith.constant 0 : index
    %c0_369 = arith.constant 0 : index
    %643 = vector.load %arg11[%c0_368, %c0_369] : memref<2x32xf32, #tpu.memory_space<vmem>>, vector<2x32xf32>
    tpu.vector_store %arg11[%c0_368, %c0_369], %641 {strides = array<i32>} : memref<2x32xf32, #tpu.memory_space<vmem>>, vector<2x32xf32>,
    %644 = vector.extract_strided_slice %641 {offsets = [0, 0], sizes = [1, 32], strides = [1, 1]} : vector<2x32xf32> to vector<1x32xf32>
    %c0_i32_370 = arith.constant 0 : i32
    %645 = arith.addi %c0_i32_370, %c5_i32_357 : i32
    %646 = arith.index_cast %645 : i32 to index
    %c0_371 = arith.constant 0 : index
    %647 = vector.load %arg10[%646, %c0_371] : memref<16x32xf32, #tpu.memory_space<vmem>>, vector<1x32xf32>
    tpu.vector_store %arg10[%646, %c0_371], %644 {strides = array<i32>} : memref<16x32xf32, #tpu.memory_space<vmem>>, vector<1x32xf32>,
    %648 = vector.extract_strided_slice %641 {offsets = [1, 0], sizes = [1, 32], strides = [1, 1]} : vector<2x32xf32> to vector<1x32xf32>
    %c8_i32_372 = arith.constant 8 : i32
    %649 = arith.addi %c8_i32_372, %c5_i32_357 : i32
    %650 = arith.index_cast %649 : i32 to index
    %c0_373 = arith.constant 0 : index
    %651 = vector.load %arg10[%650, %c0_373] : memref<16x32xf32, #tpu.memory_space<vmem>>, vector<1x32xf32>
    tpu.vector_store %arg10[%650, %c0_373], %648 {strides = array<i32>} : memref<16x32xf32, #tpu.memory_space<vmem>>, vector<1x32xf32>,
    %c6_i32_374 = arith.constant 6 : i32
    %c2_i32_375 = arith.constant 2 : i32
    %652 = arith.muli %c6_i32_374, %c2_i32_375 : i32
    %653 = arith.index_cast %652 : i32 to index
    %c0_376 = arith.constant 0 : index
    %654 = vector.load %arg8[%653, %c0_376] : memref<16x128xf32, #tpu.memory_space<vmem>>, vector<2x128xf32>
    %c0_377 = arith.constant 0 : index
    %c0_378 = arith.constant 0 : index
    %655 = vector.load %arg11[%c0_377, %c0_378] : memref<2x32xf32, #tpu.memory_space<vmem>>, vector<2x32xf32>
    %cst_379 = arith.constant dense<0.000000e+00> : vector<2x128xf32>
    %656 = tpu.matmul %655, %455, %cst_379 {dimension_numbers = #tpu.dot_dimension_numbers<[1], [0], [0], [1], [0, 0, 1, 1], [], []>} : vector<2x32xf32>, vector<32x128xf32>, vector<2x128xf32> -> vector<2x128xf32>
    %657 = arith.addf %654, %656 : vector<2x128xf32>
    %658 = arith.negf %657 : vector<2x128xf32>
    %659 = math.exp %658 : vector<2x128xf32>
    %cst_380 = arith.constant 1.000000e+00 : f32
    %660 = vector.broadcast %cst_380 : f32 to vector<2x128xf32>
    %661 = arith.addf %660, %659 : vector<2x128xf32>
    %662 = arith.divf %660, %661 : vector<2x128xf32>
    %663 = math.tanh %657 : vector<2x128xf32>
    %664 = vector.extract_strided_slice %662 {offsets = [0, 0], sizes = [2, 32], strides = [1, 1]} : vector<2x128xf32> to vector<2x32xf32>
    %665 = vector.extract_strided_slice %662 {offsets = [0, 32], sizes = [2, 32], strides = [1, 1]} : vector<2x128xf32> to vector<2x32xf32>
    %666 = vector.extract_strided_slice %663 {offsets = [0, 64], sizes = [2, 32], strides = [1, 1]} : vector<2x128xf32> to vector<2x32xf32>
    %667 = vector.extract_strided_slice %662 {offsets = [0, 96], sizes = [2, 32], strides = [1, 1]} : vector<2x128xf32> to vector<2x32xf32>
    %c0_381 = arith.constant 0 : index
    %c0_382 = arith.constant 0 : index
    %668 = vector.load %arg12[%c0_381, %c0_382] : memref<2x32xf32, #tpu.memory_space<vmem>>, vector<2x32xf32>
    %669 = arith.mulf %665, %668 : vector<2x32xf32>
    %670 = arith.mulf %664, %666 : vector<2x32xf32>
    %671 = arith.addf %669, %670 : vector<2x32xf32>
    %672 = math.tanh %671 : vector<2x32xf32>
    %673 = arith.mulf %667, %672 : vector<2x32xf32>
    %c0_383 = arith.constant 0 : index
    %c0_384 = arith.constant 0 : index
    %674 = vector.load %arg12[%c0_383, %c0_384] : memref<2x32xf32, #tpu.memory_space<vmem>>, vector<2x32xf32>
    tpu.vector_store %arg12[%c0_383, %c0_384], %671 {strides = array<i32>} : memref<2x32xf32, #tpu.memory_space<vmem>>, vector<2x32xf32>,
    %c0_385 = arith.constant 0 : index
    %c0_386 = arith.constant 0 : index
    %675 = vector.load %arg11[%c0_385, %c0_386] : memref<2x32xf32, #tpu.memory_space<vmem>>, vector<2x32xf32>
    tpu.vector_store %arg11[%c0_385, %c0_386], %673 {strides = array<i32>} : memref<2x32xf32, #tpu.memory_space<vmem>>, vector<2x32xf32>,
    %676 = vector.extract_strided_slice %673 {offsets = [0, 0], sizes = [1, 32], strides = [1, 1]} : vector<2x32xf32> to vector<1x32xf32>
    %c0_i32_387 = arith.constant 0 : i32
    %677 = arith.addi %c0_i32_387, %c6_i32_374 : i32
    %678 = arith.index_cast %677 : i32 to index
    %c0_388 = arith.constant 0 : index
    %679 = vector.load %arg10[%678, %c0_388] : memref<16x32xf32, #tpu.memory_space<vmem>>, vector<1x32xf32>
    tpu.vector_store %arg10[%678, %c0_388], %676 {strides = array<i32>} : memref<16x32xf32, #tpu.memory_space<vmem>>, vector<1x32xf32>,
    %680 = vector.extract_strided_slice %673 {offsets = [1, 0], sizes = [1, 32], strides = [1, 1]} : vector<2x32xf32> to vector<1x32xf32>
    %c8_i32_389 = arith.constant 8 : i32
    %681 = arith.addi %c8_i32_389, %c6_i32_374 : i32
    %682 = arith.index_cast %681 : i32 to index
    %c0_390 = arith.constant 0 : index
    %683 = vector.load %arg10[%682, %c0_390] : memref<16x32xf32, #tpu.memory_space<vmem>>, vector<1x32xf32>
    tpu.vector_store %arg10[%682, %c0_390], %680 {strides = array<i32>} : memref<16x32xf32, #tpu.memory_space<vmem>>, vector<1x32xf32>,
    %c7_i32_391 = arith.constant 7 : i32
    %c2_i32_392 = arith.constant 2 : i32
    %684 = arith.muli %c7_i32_391, %c2_i32_392 : i32
    %685 = arith.index_cast %684 : i32 to index
    %c0_393 = arith.constant 0 : index
    %686 = vector.load %arg8[%685, %c0_393] : memref<16x128xf32, #tpu.memory_space<vmem>>, vector<2x128xf32>
    %c0_394 = arith.constant 0 : index
    %c0_395 = arith.constant 0 : index
    %687 = vector.load %arg11[%c0_394, %c0_395] : memref<2x32xf32, #tpu.memory_space<vmem>>, vector<2x32xf32>
    %cst_396 = arith.constant dense<0.000000e+00> : vector<2x128xf32>
    %688 = tpu.matmul %687, %455, %cst_396 {dimension_numbers = #tpu.dot_dimension_numbers<[1], [0], [0], [1], [0, 0, 1, 1], [], []>} : vector<2x32xf32>, vector<32x128xf32>, vector<2x128xf32> -> vector<2x128xf32>
    %689 = arith.addf %686, %688 : vector<2x128xf32>
    %690 = arith.negf %689 : vector<2x128xf32>
    %691 = math.exp %690 : vector<2x128xf32>
    %cst_397 = arith.constant 1.000000e+00 : f32
    %692 = vector.broadcast %cst_397 : f32 to vector<2x128xf32>
    %693 = arith.addf %692, %691 : vector<2x128xf32>
    %694 = arith.divf %692, %693 : vector<2x128xf32>
    %695 = math.tanh %689 : vector<2x128xf32>
    %696 = vector.extract_strided_slice %694 {offsets = [0, 0], sizes = [2, 32], strides = [1, 1]} : vector<2x128xf32> to vector<2x32xf32>
    %697 = vector.extract_strided_slice %694 {offsets = [0, 32], sizes = [2, 32], strides = [1, 1]} : vector<2x128xf32> to vector<2x32xf32>
    %698 = vector.extract_strided_slice %695 {offsets = [0, 64], sizes = [2, 32], strides = [1, 1]} : vector<2x128xf32> to vector<2x32xf32>
    %699 = vector.extract_strided_slice %694 {offsets = [0, 96], sizes = [2, 32], strides = [1, 1]} : vector<2x128xf32> to vector<2x32xf32>
    %c0_398 = arith.constant 0 : index
    %c0_399 = arith.constant 0 : index
    %700 = vector.load %arg12[%c0_398, %c0_399] : memref<2x32xf32, #tpu.memory_space<vmem>>, vector<2x32xf32>
    %701 = arith.mulf %697, %700 : vector<2x32xf32>
    %702 = arith.mulf %696, %698 : vector<2x32xf32>
    %703 = arith.addf %701, %702 : vector<2x32xf32>
    %704 = math.tanh %703 : vector<2x32xf32>
    %705 = arith.mulf %699, %704 : vector<2x32xf32>
    %c0_400 = arith.constant 0 : index
    %c0_401 = arith.constant 0 : index
    %706 = vector.load %arg12[%c0_400, %c0_401] : memref<2x32xf32, #tpu.memory_space<vmem>>, vector<2x32xf32>
    tpu.vector_store %arg12[%c0_400, %c0_401], %703 {strides = array<i32>} : memref<2x32xf32, #tpu.memory_space<vmem>>, vector<2x32xf32>,
    %c0_402 = arith.constant 0 : index
    %c0_403 = arith.constant 0 : index
    %707 = vector.load %arg11[%c0_402, %c0_403] : memref<2x32xf32, #tpu.memory_space<vmem>>, vector<2x32xf32>
    tpu.vector_store %arg11[%c0_402, %c0_403], %705 {strides = array<i32>} : memref<2x32xf32, #tpu.memory_space<vmem>>, vector<2x32xf32>,
    %708 = vector.extract_strided_slice %705 {offsets = [0, 0], sizes = [1, 32], strides = [1, 1]} : vector<2x32xf32> to vector<1x32xf32>
    %c0_i32_404 = arith.constant 0 : i32
    %709 = arith.addi %c0_i32_404, %c7_i32_391 : i32
    %710 = arith.index_cast %709 : i32 to index
    %c0_405 = arith.constant 0 : index
    %711 = vector.load %arg10[%710, %c0_405] : memref<16x32xf32, #tpu.memory_space<vmem>>, vector<1x32xf32>
    tpu.vector_store %arg10[%710, %c0_405], %708 {strides = array<i32>} : memref<16x32xf32, #tpu.memory_space<vmem>>, vector<1x32xf32>,
    %712 = vector.extract_strided_slice %705 {offsets = [1, 0], sizes = [1, 32], strides = [1, 1]} : vector<2x32xf32> to vector<1x32xf32>
    %c8_i32_406 = arith.constant 8 : i32
    %713 = arith.addi %c8_i32_406, %c7_i32_391 : i32
    %714 = arith.index_cast %713 : i32 to index
    %c0_407 = arith.constant 0 : index
    %715 = vector.load %arg10[%714, %c0_407] : memref<16x32xf32, #tpu.memory_space<vmem>>, vector<1x32xf32>
    tpu.vector_store %arg10[%714, %c0_407], %712 {strides = array<i32>} : memref<16x32xf32, #tpu.memory_space<vmem>>, vector<1x32xf32>,
    %c8_i32_408 = arith.constant 8 : i32
    %c0_409 = arith.constant 0 : index
    %c0_410 = arith.constant 0 : index
    %716 = vector.load %arg5[%c0_409, %c0_410] : memref<1x8xf32, #tpu.memory_space<vmem>>, vector<1x8xf32>
    %c0_411 = arith.constant 0 : index
    %c0_412 = arith.constant 0 : index
    %717 = memref.load %arg6[%c0_411, %c0_412] : memref<1x1xf32, #tpu.memory_space<smem>>
    %c0_413 = arith.constant 0 : index
    %c0_414 = arith.constant 0 : index
    %718 = vector.load %arg10[%c0_413, %c0_414] : memref<16x32xf32, #tpu.memory_space<vmem>>, vector<8x32xf32>
    %cst_415 = arith.constant dense<0.000000e+00> : vector<8x8xf32>
    %719 = tpu.matmul %718, %718, %cst_415 {dimension_numbers = #tpu.dot_dimension_numbers<[1], [1], [0], [0], [0, 0, 1, 0], [], []>} : vector<8x32xf32>, vector<8x32xf32>, vector<8x8xf32> -> vector<8x8xf32>
    %cst_416 = arith.constant 0.176776692 : f32
    %720 = vector.broadcast %cst_416 : f32 to vector<8x8xf32>
    %721 = arith.mulf %719, %720 : vector<8x8xf32>
    %cst_417 = arith.constant dense<0xFF800000> : vector<8xf32>
    %722 = vector.multi_reduction <maximumf>, %721, %cst_417 [1] : vector<8x8xf32> to vector<8xf32>
    %723 = vector.shape_cast %722 : vector<8xf32> to vector<8x1xf32>
    %724 = vector.broadcast %723 : vector<8x1xf32> to vector<8x8xf32>
    %725 = arith.subf %721, %724 : vector<8x8xf32>
    %726 = math.exp %725 : vector<8x8xf32>
    %cst_418 = arith.constant dense<0.000000e+00> : vector<8xf32>
    %727 = vector.multi_reduction <add>, %726, %cst_418 [1] : vector<8x8xf32> to vector<8xf32>
    %728 = vector.shape_cast %727 : vector<8xf32> to vector<8x1xf32>
    %729 = tpu.reciprocal %728 {approx = true} : vector<8x1xf32> -> vector<8x1xf32>
    %730 = vector.broadcast %729 : vector<8x1xf32> to vector<8x8xf32>
    %731 = arith.mulf %726, %730 : vector<8x8xf32>
    %cst_419 = arith.constant dense<0.000000e+00> : vector<8xf32>
    %732 = vector.multi_reduction <add>, %718, %cst_419 [1] : vector<8x32xf32> to vector<8xf32>
    %733 = vector.shape_cast %732 : vector<8xf32> to vector<8x1xf32>
    %cst_420 = arith.constant dense<0.000000e+00> : vector<1x8xf32>
    %734 = tpu.matmul %716, %731, %cst_420 {dimension_numbers = #tpu.dot_dimension_numbers<[1], [0], [0], [1], [0, 0, 1, 1], [], []>} : vector<1x8xf32>, vector<8x8xf32>, vector<1x8xf32> -> vector<1x8xf32>
    %cst_421 = arith.constant dense<0.000000e+00> : vector<1x1xf32>
    %735 = tpu.matmul %734, %733, %cst_421 {dimension_numbers = #tpu.dot_dimension_numbers<[1], [0], [0], [1], [0, 0, 1, 1], [], []>} : vector<1x8xf32>, vector<8x1xf32>, vector<1x1xf32> -> vector<1x1xf32>
    %736 = vector.broadcast %717 : f32 to vector<1x1xf32>
    %737 = arith.addf %735, %736 : vector<1x1xf32>
    %c0_422 = arith.constant 0 : index
    %c0_423 = arith.constant 0 : index
    %738 = vector.load %arg7[%c0_422, %c0_423] : memref<2x1xf32, #tpu.memory_space<vmem>>, vector<1x1xf32>
    tpu.vector_store %arg7[%c0_422, %c0_423], %737 {strides = array<i32>} : memref<2x1xf32, #tpu.memory_space<vmem>>, vector<1x1xf32>,
    %c8 = arith.constant 8 : index
    %c0_424 = arith.constant 0 : index
    %739 = vector.load %arg10[%c8, %c0_424] : memref<16x32xf32, #tpu.memory_space<vmem>>, vector<8x32xf32>
    %cst_425 = arith.constant dense<0.000000e+00> : vector<8x8xf32>
    %740 = tpu.matmul %739, %739, %cst_425 {dimension_numbers = #tpu.dot_dimension_numbers<[1], [1], [0], [0], [0, 0, 1, 0], [], []>} : vector<8x32xf32>, vector<8x32xf32>, vector<8x8xf32> -> vector<8x8xf32>
    %cst_426 = arith.constant 0.176776692 : f32
    %741 = vector.broadcast %cst_426 : f32 to vector<8x8xf32>
    %742 = arith.mulf %740, %741 : vector<8x8xf32>
    %cst_427 = arith.constant dense<0xFF800000> : vector<8xf32>
    %743 = vector.multi_reduction <maximumf>, %742, %cst_427 [1] : vector<8x8xf32> to vector<8xf32>
    %744 = vector.shape_cast %743 : vector<8xf32> to vector<8x1xf32>
    %745 = vector.broadcast %744 : vector<8x1xf32> to vector<8x8xf32>
    %746 = arith.subf %742, %745 : vector<8x8xf32>
    %747 = math.exp %746 : vector<8x8xf32>
    %cst_428 = arith.constant dense<0.000000e+00> : vector<8xf32>
    %748 = vector.multi_reduction <add>, %747, %cst_428 [1] : vector<8x8xf32> to vector<8xf32>
    %749 = vector.shape_cast %748 : vector<8xf32> to vector<8x1xf32>
    %750 = tpu.reciprocal %749 {approx = true} : vector<8x1xf32> -> vector<8x1xf32>
    %751 = vector.broadcast %750 : vector<8x1xf32> to vector<8x8xf32>
    %752 = arith.mulf %747, %751 : vector<8x8xf32>
    %cst_429 = arith.constant dense<0.000000e+00> : vector<8xf32>
    %753 = vector.multi_reduction <add>, %739, %cst_429 [1] : vector<8x32xf32> to vector<8xf32>
    %754 = vector.shape_cast %753 : vector<8xf32> to vector<8x1xf32>
    %cst_430 = arith.constant dense<0.000000e+00> : vector<1x8xf32>
    %755 = tpu.matmul %716, %752, %cst_430 {dimension_numbers = #tpu.dot_dimension_numbers<[1], [0], [0], [1], [0, 0, 1, 1], [], []>} : vector<1x8xf32>, vector<8x8xf32>, vector<1x8xf32> -> vector<1x8xf32>
    %cst_431 = arith.constant dense<0.000000e+00> : vector<1x1xf32>
    %756 = tpu.matmul %755, %754, %cst_431 {dimension_numbers = #tpu.dot_dimension_numbers<[1], [0], [0], [1], [0, 0, 1, 1], [], []>} : vector<1x8xf32>, vector<8x1xf32>, vector<1x1xf32> -> vector<1x1xf32>
    %757 = vector.broadcast %717 : f32 to vector<1x1xf32>
    %758 = arith.addf %756, %757 : vector<1x1xf32>
    %c1_432 = arith.constant 1 : index
    %c0_433 = arith.constant 0 : index
    %759 = vector.load %arg7[%c1_432, %c0_433] : memref<2x1xf32, #tpu.memory_space<vmem>>, vector<1x1xf32>
    tpu.vector_store %arg7[%c1_432, %c0_433], %758 {strides = array<i32>} : memref<2x1xf32, #tpu.memory_space<vmem>>, vector<1x1xf32>,
    return
  }
}

</mosaic_0001>

<llo_original>
// kernel: talstm_forward.1
$region0: #{talstm_forward.1}
  #allocation0 [shape = 'u32[]', space=smem, size = 0x4, offset = 0x4, fixed_abs, tag = 'smem constant byte address 0x4 - core index']
  #allocation1 [shape = 'u32[72,128]{1,0:T(1,128)}', space=vmem, size = 0x9000, scoped, tag = 'internal scratch']
  #allocation2 [shape = 'f32[16,128]{1,0:T(8,128)}', space=vmem, size = 0x2000, scoped, tag = 'scratch operand']
  #allocation3 [shape = 'f32[16,32]{1,0:T(8,128)}', space=vmem, size = 0x2000, scoped, tag = 'scratch operand']
  #allocation4 [shape = 'f32[16,32]{1,0:T(8,128)}', space=vmem, size = 0x2000, scoped, tag = 'scratch operand']
  #allocation5 [shape = 'f32[2,32]{1,0:T(2,128)}', space=vmem, size = 0x400, scoped, tag = 'scratch operand']
  #allocation6 [shape = 'f32[2,32]{1,0:T(2,128)}', space=vmem, size = 0x400, scoped, tag = 'scratch operand']
  #allocation7 [shape = 'f32[1,1]{1,0:T(1,128)S(6)}', space=smem, size = 0x200, scoped, tag = 'scoped memory for talstm_forward.1']
  %s0 = inlined_call_operand.vmem [shape: f32[16,16], index: 0, kind: input, shape index: {}]
  %s1 = inlined_call_operand.vmem [shape: f32[16,128], index: 1, kind: input, shape index: {}]
  %s2 = inlined_call_operand.hbm [shape: f32[2,32,128], index: 2, kind: input, shape index: {}]
  %s3 = inlined_call_operand.hbm [shape: f32[3,32,128], index: 3, kind: input, shape index: {}]
  %s4 = inlined_call_operand.vmem [shape: f32[3,1,128], index: 4, kind: input, shape index: {}]
  %s5 = inlined_call_operand.vmem [shape: f32[1,8], index: 5, kind: input, shape index: {}]
  %s6 = inlined_call_operand.<no memory space> [shape: f32[1,1], index: 6, kind: input, shape index: {}]
  %s7 = inlined_call_operand.vmem [shape: f32[2,1], index: 7, kind: output, shape index: {}]
  %s8 = sld [smem:[#allocation0]]
  $region46: #{talstm_forward.1} parent=0
    _
  %s10 = ssub.s32 1, %s8
  %s11 = scalar_select 0, %s10, %s8
  %12 = sst [smem:[#allocation7]] %s6
  $region1: #{talstm_forward.1} parent=0
    #allocation8 [shape = 'u8[32768]{0}', space=vmem, size = 0x8000, scoped, tag = 'input window, operand 2, single buffered']
    #allocation9 [shape = 's32[1]{0}', space=sflag, size = 0x4, scoped, tag = 'scoped memory for talstm_forward.1']
    #allocation10 [shape = 'u8[49152]{0}', space=vmem, size = 0xc000, scoped, tag = 'input window, operand 3, single buffered']
    #allocation11 [shape = 's32[1]{0}', space=sflag, size = 0x4, scoped, tag = 'scoped memory for talstm_forward.1']
    %13 = vsyncpa [#allocation9], 0
    %14 = vsyncpa [#allocation11], 0
    // Predicated region
    $region2: #{talstm_forward.1} parent=1 // pred_check
      _
    $region3: #{talstm_forward.1} parent=1 // pred_check_branch
      %16 = sbr.rel (0) target = $region5
    $region4: #{talstm_forward.1} parent=1 // pred_region
      _
    $region5: #{talstm_forward.1} parent=1 // pred_fallthru
      _
    // Predicated region
    $region6: #{talstm_forward.1} parent=1 // pred_check
      _
    $region7: #{talstm_forward.1} parent=1 // pred_check_branch
      %18 = sbr.rel (0) target = $region9
    $region8: #{talstm_forward.1} parent=1 // pred_region
      _
    $region9: #{talstm_forward.1} parent=1 // pred_fallthru
      _
    // Predicated region
    $region10: #{talstm_forward.1} parent=1 // pred_check
      _
    $region11: #{talstm_forward.1} parent=1 // pred_check_branch
      %20 = sbr.rel (0) target = $region13
    $region12: #{talstm_forward.1} parent=1 // pred_region
      %22 = vsyncadd [#allocation9], 0
      %s23 = sshll.u32 %s2, 4
      %s24 = int_to_ptr.hbm [resolvable:$true] %s23
      %s25 = sshll.u32 [#allocation8], 4
      %s26 = int_to_ptr.vmem [resolvable:$true] %s25
      %31 = dma.hbm_to_vmem [thread:$0]  %s24, 1024, %s26, [#allocation9], 128, 128, 8
    $region13: #{talstm_forward.1} parent=1 // pred_fallthru
      _
    // Predicated region
    $region14: #{talstm_forward.1} parent=1 // pred_check
      _
    $region15: #{talstm_forward.1} parent=1 // pred_check_branch
      %33 = sbr.rel (0) target = $region17
    $region16: #{talstm_forward.1} parent=1 // pred_region
      %35 = vsyncadd [#allocation11], 0
      %s36 = sshll.u32 %s3, 4
      %s37 = int_to_ptr.hbm [resolvable:$true] %s36
      %s38 = sshll.u32 [#allocation10], 4
      %s39 = int_to_ptr.vmem [resolvable:$true] %s38
      %44 = dma.hbm_to_vmem [thread:$0]  %s37, 1536, %s39, [#allocation11], 128, 128, 8
    $region17: #{talstm_forward.1} parent=1 // pred_fallthru
      _
    // Predicated region
    $region18: #{talstm_forward.1} parent=1 // pred_check
      _
    $region19: #{talstm_forward.1} parent=1 // pred_check_branch
      %46 = sbr.rel (0) target = $region21
    $region20: #{talstm_forward.1} parent=1 // pred_region
      _
    $region21: #{talstm_forward.1} parent=1 // pred_fallthru
      _
    // Predicated region
    $region22: #{talstm_forward.1} parent=1 // pred_check
      _
    $region23: #{talstm_forward.1} parent=1 // pred_check_branch
      %48 = sbr.rel (0) target = $region25
    $region24: #{talstm_forward.1} parent=1 // pred_region
      _
    $region25: #{talstm_forward.1} parent=1 // pred_fallthru
      _
    // Predicated region
    $region26: #{talstm_forward.1} parent=1 // pred_check
      _
    $region27: #{talstm_forward.1} parent=1 // pred_check_branch
      %50 = sbr.rel (0) target = $region29
    $region28: #{talstm_forward.1} parent=1 // pred_region
      _
    $region29: #{talstm_forward.1} parent=1 // pred_fallthru
      _
    // Predicated region
    $region30: #{talstm_forward.1} parent=1 // pred_check
      _
    $region31: #{talstm_forward.1} parent=1 // pred_check_branch
      %52 = sbr.rel (0) target = $region33
    $region32: #{talstm_forward.1} parent=1 // pred_region
      %54 = dma.done [#allocation9], 1024
    $region33: #{talstm_forward.1} parent=1 // pred_fallthru
      _
    // Predicated region
    $region34: #{talstm_forward.1} parent=1 // pred_check
      _
    $region35: #{talstm_forward.1} parent=1 // pred_check_branch
      %56 = sbr.rel (0) target = $region37
    $region36: #{talstm_forward.1} parent=1 // pred_region
      %58 = dma.done [#allocation11], 1536
    $region37: #{talstm_forward.1} parent=1 // pred_fallthru
      _
    %v59 = vld [vmem:[%s0] sm:$0xff]
    %v60 = vld [vmem:[%s0 + $0x8] sm:$0xff]
    %v61 = vld [vmem:[%s1] sm:$0xff]
    %v62 = vld [vmem:[%s1 + $0x8] sm:$0xff]
    %v63 = vld [vmem:[%s4] sm:$0x1]
    %v65 = vperm.slane %v63, 0
    %vm67 = vcmask 130048
    %v69 = vsel %vm67, %v59, 0
    %v72 = vsel %vm67, %v60, 0
    %74 = vmatpush.msra.mxu0 0.0
    %75 = vmatpush.msra.mxu0 0.0
    %76 = vmatpush.msra.mxu0 0.0
    %77 = vmatpush.msra.mxu0 0.0
    %78 = vmatpush.msra.mxu0 0.0
    %79 = vmatpush.msra.mxu0 0.0
    %80 = vmatpush.msra.mxu0 0.0
    %81 = vmatpush.msra.mxu0 0.0
    %82 = vmatpush.msra.mxu0 0.0
    %83 = vmatpush.msra.mxu0 0.0
    %84 = vmatpush.msra.mxu0 0.0
    %85 = vmatpush.msra.mxu0 0.0
    %86 = vmatpush.msra.mxu0 0.0
    %87 = vmatpush.msra.mxu0 0.0
    %88 = vmatpush.msra.mxu0 %v62
    %89 = vmatpush.msra.mxu0 %v61
    %90 = vmatmul.f32.gmra.mxu0 %v69
    %v91 = vpop.f32.mrf.mxu0
    %v92 = vadd.f32 %v65, %v91
    %93 = vmatmul.f32.gmra.mxu0 %v72
    %v94 = vpop.f32.mrf.mxu0
    %v95 = vadd.f32 %v65, %v94
    %96 = vdwg.mxu0
    %97 = vst [vmem:[#allocation2] sm:$0xff] %v92
    %98 = vst [vmem:[#allocation2 + $0x8] sm:$0xff] %v95
    %v99 = vld [vmem:[#allocation10] sm:$0xff]
    %v100 = vld [vmem:[#allocation10 + $0x8] sm:$0xff]
    %v101 = vld [vmem:[#allocation10 + $0x10] sm:$0xff]
    %v102 = vld [vmem:[#allocation10 + $0x18] sm:$0xff]
    %vm103 = vcmask 254976
    %104 = vst.msk [vmem:[#allocation5] sm:$0x3] %vm103, 0.0
    %105 = vst.msk [vmem:[#allocation6] sm:$0x3] %vm103, 0.0
    %v106 = vld [vmem:[#allocation2] sm:$0x3]
    %v107 = vld [vmem:[#allocation5] sm:$0x3]
    %vm108 = vcmask 261120
    %v110 = vsel %vm108, %v107, 0
    %112 = vmatpush.msra.mxu0 0.0
    %113 = vmatpush.msra.mxu0 0.0
    %114 = vmatpush.msra.mxu0 0.0
    %115 = vmatpush.msra.mxu0 0.0
    %116 = vmatpush.msra.mxu0 0.0
    %117 = vmatpush.msra.mxu0 0.0
    %118 = vmatpush.msra.mxu0 0.0
    %119 = vmatpush.msra.mxu0 0.0
    %120 = vmatpush.msra.mxu0 0.0
    %121 = vmatpush.msra.mxu0 0.0
    %122 = vmatpush.msra.mxu0 0.0
    %123 = vmatpush.msra.mxu0 0.0
    %124 = vmatpush.msra.mxu0 %v102
    %125 = vmatpush.msra.mxu0 %v101
    %126 = vmatpush.msra.mxu0 %v100
    %127 = vmatpush.msra.mxu0 %v99
    %128 = vmatmul.f32.gmra.mxu0 %v110
    %v129 = vpop.f32.mrf.mxu0
    %v130 = vadd.f32 0.0, %v129
    %131 = vdwg.mxu0
    %v132 = vadd.f32 %v106, %v130
    %v133 = vxor.u32 %v132, 2147483648
    %v134 = vmul.f32 %v133, 1.442695
    %v135 = vpow.pop %v134
    %v136 = vadd.f32 %v135, 1.0
    %v137 = vrcp.pop %v136
    %v138 = vmul.f32 %v136, %v137
    %v139 = vsub.f32 1.0, %v138
    %v140 = vmul.f32 %v137, %v139
    %v141 = vadd.f32 %v137, %v140
    %vm142 = vweird.f32 %v136
    %vm143 = vweird.f32 %v137
    %vm144 = vmor %vm142, %vm143
    %v145 = vsel %vm144, %v137, %v141
    %v146 = vand.u32 2147483647, %v136
    %vm147 = vcmp.eq.f32.partialorder %v146, 8.507059e+37
    %v148 = vand.u32 %v136, 2147483648
    %v149 = vor.u32 1.1754944e-38, %v148
    %v150 = vsel %vm147, %v149, %v145
    %v151 = vmul.f32 1.0, %v150
    %v152 = vtanh.pop %v132
    %v153 = vld [vmem:[#allocation6] sm:$0x3]
    %155 = vrot.lane.b32.xlu0 %v153, 32
    %v156 = vpop.permute.xlu0 %155
    %v158 = vmul.f32 %v151, %v156
    %160 = vrot.lane.b32.xlu0 %v152, 64
    %v161 = vpop.permute.xlu0 %160
    %v163 = vmul.f32 %v151, %v161
    %165 = vrot.lane.b32.xlu0 %v163, 32
    %v166 = vpop.permute.xlu0 %165
    %v168 = vadd.f32 %v158, %v166
    %v169 = vtanh.pop %v168
    %171 = vrot.lane.b32.xlu0 %v169, 64
    %v172 = vpop.permute.xlu0 %171
    %v174 = vmul.f32 %v151, %v172
    %176 = vrot.lane.b32.xlu0 %v168, 96
    %v177 = vpop.permute.xlu0 %176
    %179 = vst.msk [vmem:[#allocation6] sm:$0x3] %vm103, %v177
    %181 = vrot.lane.b32.xlu0 %v174, 32
    %v182 = vpop.permute.xlu0 %181
    %184 = vst.msk [vmem:[#allocation5] sm:$0x3] %vm103, %v182
    %185 = vst.msk [vmem:[#allocation3] sm:$0x3] %vm103, %v182
    %v186 = vld [vmem:[#allocation2 + $0x2] sm:$0x3]
    %v187 = vld [vmem:[#allocation5] sm:$0x3]
    %v189 = vsel %vm108, %v187, 0
    %191 = vmatpush.msra.mxu0 0.0
    %192 = vmatpush.msra.mxu0 0.0
    %193 = vmatpush.msra.mxu0 0.0
    %194 = vmatpush.msra.mxu0 0.0
    %195 = vmatpush.msra.mxu0 0.0
    %196 = vmatpush.msra.mxu0 0.0
    %197 = vmatpush.msra.mxu0 0.0
    %198 = vmatpush.msra.mxu0 0.0
    %199 = vmatpush.msra.mxu0 0.0
    %200 = vmatpush.msra.mxu0 0.0
    %201 = vmatpush.msra.mxu0 0.0
    %202 = vmatpush.msra.mxu0 0.0
    %203 = vmatpush.msra.mxu0 %v102
    %204 = vmatpush.msra.mxu0 %v101
    %205 = vmatpush.msra.mxu0 %v100
    %206 = vmatpush.msra.mxu0 %v99
    %207 = vmatmul.f32.gmra.mxu0 %v189
    %v208 = vpop.f32.mrf.mxu0
    %v209 = vadd.f32 0.0, %v208
    %210 = vdwg.mxu0
    %v211 = vadd.f32 %v186, %v209
    %v212 = vxor.u32 %v211, 2147483648
    %v213 = vmul.f32 %v212, 1.442695
    %v214 = vpow.pop %v213
    %v215 = vadd.f32 %v214, 1.0
    %v216 = vrcp.pop %v215
    %v217 = vmul.f32 %v215, %v216
    %v218 = vsub.f32 1.0, %v217
    %v219 = vmul.f32 %v216, %v218
    %v220 = vadd.f32 %v216, %v219
    %vm221 = vweird.f32 %v215
    %vm222 = vweird.f32 %v216
    %vm223 = vmor %vm221, %vm222
    %v224 = vsel %vm223, %v216, %v220
    %v225 = vand.u32 2147483647, %v215
    %vm226 = vcmp.eq.f32.partialorder %v225, 8.507059e+37
    %v227 = vand.u32 %v215, 2147483648
    %v228 = vor.u32 1.1754944e-38, %v227
    %v229 = vsel %vm226, %v228, %v224
    %v230 = vmul.f32 1.0, %v229
    %v231 = vtanh.pop %v211
    %v232 = vld [vmem:[#allocation6] sm:$0x3]
    %234 = vrot.lane.b32.xlu0 %v232, 32
    %v235 = vpop.permute.xlu0 %234
    %v237 = vmul.f32 %v230, %v235
    %239 = vrot.lane.b32.xlu0 %v231, 64
    %v240 = vpop.permute.xlu0 %239
    %v242 = vmul.f32 %v230, %v240
    %244 = vrot.lane.b32.xlu0 %v242, 32
    %v245 = vpop.permute.xlu0 %244
    %v247 = vadd.f32 %v237, %v245
    %v248 = vtanh.pop %v247
    %250 = vrot.lane.b32.xlu0 %v248, 64
    %v251 = vpop.permute.xlu0 %250
    %v253 = vmul.f32 %v230, %v251
    %255 = vrot.lane.b32.xlu0 %v247, 96
    %v256 = vpop.permute.xlu0 %255
    %258 = vst.msk [vmem:[#allocation6] sm:$0x3] %vm103, %v256
    %260 = vrot.lane.b32.xlu0 %v253, 32
    %v261 = vpop.permute.xlu0 %260
    %263 = vst.msk [vmem:[#allocation5] sm:$0x3] %vm103, %v261
    %264 = vst.msk [vmem:[#allocation3 + $0x2] sm:$0x3] %vm103, %v261
    %v265 = vld [vmem:[#allocation2 + $0x4] sm:$0x3]
    %v266 = vld [vmem:[#allocation5] sm:$0x3]
    %v268 = vsel %vm108, %v266, 0
    %270 = vmatpush.msra.mxu0 0.0
    %271 = vmatpush.msra.mxu0 0.0
    %272 = vmatpush.msra.mxu0 0.0
    %273 = vmatpush.msra.mxu0 0.0
    %274 = vmatpush.msra.mxu0 0.0
    %275 = vmatpush.msra.mxu0 0.0
    %276 = vmatpush.msra.mxu0 0.0
    %277 = vmatpush.msra.mxu0 0.0
    %278 = vmatpush.msra.mxu0 0.0
    %279 = vmatpush.msra.mxu0 0.0
    %280 = vmatpush.msra.mxu0 0.0
    %281 = vmatpush.msra.mxu0 0.0
    %282 = vmatpush.msra.mxu0 %v102
    %283 = vmatpush.msra.mxu0 %v101
    %284 = vmatpush.msra.mxu0 %v100
    %285 = vmatpush.msra.mxu0 %v99
    %286 = vmatmul.f32.gmra.mxu0 %v268
    %v287 = vpop.f32.mrf.mxu0
    %v288 = vadd.f32 0.0, %v287
    %289 = vdwg.mxu0
    %v290 = vadd.f32 %v265, %v288
    %v291 = vxor.u32 %v290, 2147483648
    %v292 = vmul.f32 %v291, 1.442695
    %v293 = vpow.pop %v292
    %v294 = vadd.f32 %v293, 1.0
    %v295 = vrcp.pop %v294
    %v296 = vmul.f32 %v294, %v295
    %v297 = vsub.f32 1.0, %v296
    %v298 = vmul.f32 %v295, %v297
    %v299 = vadd.f32 %v295, %v298
    %vm300 = vweird.f32 %v294
    %vm301 = vweird.f32 %v295
    %vm302 = vmor %vm300, %vm301
    %v303 = vsel %vm302, %v295, %v299
    %v304 = vand.u32 2147483647, %v294
    %vm305 = vcmp.eq.f32.partialorder %v304, 8.507059e+37
    %v306 = vand.u32 %v294, 2147483648
    %v307 = vor.u32 1.1754944e-38, %v306
    %v308 = vsel %vm305, %v307, %v303
    %v309 = vmul.f32 1.0, %v308
    %v310 = vtanh.pop %v290
    %v311 = vld [vmem:[#allocation6] sm:$0x3]
    %313 = vrot.lane.b32.xlu0 %v311, 32
    %v314 = vpop.permute.xlu0 %313
    %v316 = vmul.f32 %v309, %v314
    %318 = vrot.lane.b32.xlu0 %v310, 64
    %v319 = vpop.permute.xlu0 %318
    %v321 = vmul.f32 %v309, %v319
    %323 = vrot.lane.b32.xlu0 %v321, 32
    %v324 = vpop.permute.xlu0 %323
    %v326 = vadd.f32 %v316, %v324
    %v327 = vtanh.pop %v326
    %329 = vrot.lane.b32.xlu0 %v327, 64
    %v330 = vpop.permute.xlu0 %329
    %v332 = vmul.f32 %v309, %v330
    %334 = vrot.lane.b32.xlu0 %v326, 96
    %v335 = vpop.permute.xlu0 %334
    %337 = vst.msk [vmem:[#allocation6] sm:$0x3] %vm103, %v335
    %339 = vrot.lane.b32.xlu0 %v332, 32
    %v340 = vpop.permute.xlu0 %339
    %342 = vst.msk [vmem:[#allocation5] sm:$0x3] %vm103, %v340
    %343 = vst.msk [vmem:[#allocation3 + $0x4] sm:$0x3] %vm103, %v340
    %v344 = vld [vmem:[#allocation2 + $0x6] sm:$0x3]
    %v345 = vld [vmem:[#allocation5] sm:$0x3]
    %v347 = vsel %vm108, %v345, 0
    %349 = vmatpush.msra.mxu0 0.0
    %350 = vmatpush.msra.mxu0 0.0
    %351 = vmatpush.msra.mxu0 0.0
    %352 = vmatpush.msra.mxu0 0.0
    %353 = vmatpush.msra.mxu0 0.0
    %354 = vmatpush.msra.mxu0 0.0
    %355 = vmatpush.msra.mxu0 0.0
    %356 = vmatpush.msra.mxu0 0.0
    %357 = vmatpush.msra.mxu0 0.0
    %358 = vmatpush.msra.mxu0 0.0
    %359 = vmatpush.msra.mxu0 0.0
    %360 = vmatpush.msra.mxu0 0.0
    %361 = vmatpush.msra.mxu0 %v102
    %362 = vmatpush.msra.mxu0 %v101
    %363 = vmatpush.msra.mxu0 %v100
    %364 = vmatpush.msra.mxu0 %v99
    %365 = vmatmul.f32.gmra.mxu0 %v347
    %v366 = vpop.f32.mrf.mxu0
    %v367 = vadd.f32 0.0, %v366
    %368 = vdwg.mxu0
    %v369 = vadd.f32 %v344, %v367
    %v370 = vxor.u32 %v369, 2147483648
    %v371 = vmul.f32 %v370, 1.442695
    %v372 = vpow.pop %v371
    %v373 = vadd.f32 %v372, 1.0
    %v374 = vrcp.pop %v373
    %v375 = vmul.f32 %v373, %v374
    %v376 = vsub.f32 1.0, %v375
    %v377 = vmul.f32 %v374, %v376
    %v378 = vadd.f32 %v374, %v377
    %vm379 = vweird.f32 %v373
    %vm380 = vweird.f32 %v374
    %vm381 = vmor %vm379, %vm380
    %v382 = vsel %vm381, %v374, %v378
    %v383 = vand.u32 2147483647, %v373
    %vm384 = vcmp.eq.f32.partialorder %v383, 8.507059e+37
    %v385 = vand.u32 %v373, 2147483648
    %v386 = vor.u32 1.1754944e-38, %v385
    %v387 = vsel %vm384, %v386, %v382
    %v388 = vmul.f32 1.0, %v387
    %v389 = vtanh.pop %v369
    %v390 = vld [vmem:[#allocation6] sm:$0x3]
    %392 = vrot.lane.b32.xlu0 %v390, 32
    %v393 = vpop.permute.xlu0 %392
    %v395 = vmul.f32 %v388, %v393
    %397 = vrot.lane.b32.xlu0 %v389, 64
    %v398 = vpop.permute.xlu0 %397
    %v400 = vmul.f32 %v388, %v398
    %402 = vrot.lane.b32.xlu0 %v400, 32
    %v403 = vpop.permute.xlu0 %402
    %v405 = vadd.f32 %v395, %v403
    %v406 = vtanh.pop %v405
    %408 = vrot.lane.b32.xlu0 %v406, 64
    %v409 = vpop.permute.xlu0 %408
    %v411 = vmul.f32 %v388, %v409
    %413 = vrot.lane.b32.xlu0 %v405, 96
    %v414 = vpop.permute.xlu0 %413
    %416 = vst.msk [vmem:[#allocation6] sm:$0x3] %vm103, %v414
    %418 = vrot.lane.b32.xlu0 %v411, 32
    %v419 = vpop.permute.xlu0 %418
    %421 = vst.msk [vmem:[#allocation5] sm:$0x3] %vm103, %v419
    %422 = vst.msk [vmem:[#allocation3 + $0x6] sm:$0x3] %vm103, %v419
    %v423 = vld [vmem:[#allocation2 + $0x8] sm:$0x3]
    %v424 = vld [vmem:[#allocation5] sm:$0x3]
    %v426 = vsel %vm108, %v424, 0
    %428 = vmatpush.msra.mxu0 0.0
    %429 = vmatpush.msra.mxu0 0.0
    %430 = vmatpush.msra.mxu0 0.0
    %431 = vmatpush.msra.mxu0 0.0
    %432 = vmatpush.msra.mxu0 0.0
    %433 = vmatpush.msra.mxu0 0.0
    %434 = vmatpush.msra.mxu0 0.0
    %435 = vmatpush.msra.mxu0 0.0
    %436 = vmatpush.msra.mxu0 0.0
    %437 = vmatpush.msra.mxu0 0.0
    %438 = vmatpush.msra.mxu0 0.0
    %439 = vmatpush.msra.mxu0 0.0
    %440 = vmatpush.msra.mxu0 %v102
    %441 = vmatpush.msra.mxu0 %v101
    %442 = vmatpush.msra.mxu0 %v100
    %443 = vmatpush.msra.mxu0 %v99
    %444 = vmatmul.f32.gmra.mxu0 %v426
    %v445 = vpop.f32.mrf.mxu0
    %v446 = vadd.f32 0.0, %v445
    %447 = vdwg.mxu0
    %v448 = vadd.f32 %v423, %v446
    %v449 = vxor.u32 %v448, 2147483648
    %v450 = vmul.f32 %v449, 1.442695
    %v451 = vpow.pop %v450
    %v452 = vadd.f32 %v451, 1.0
    %v453 = vrcp.pop %v452
    %v454 = vmul.f32 %v452, %v453
    %v455 = vsub.f32 1.0, %v454
    %v456 = vmul.f32 %v453, %v455
    %v457 = vadd.f32 %v453, %v456
    %vm458 = vweird.f32 %v452
    %vm459 = vweird.f32 %v453
    %vm460 = vmor %vm458, %vm459
    %v461 = vsel %vm460, %v453, %v457
    %v462 = vand.u32 2147483647, %v452
    %vm463 = vcmp.eq.f32.partialorder %v462, 8.507059e+37
    %v464 = vand.u32 %v452, 2147483648
    %v465 = vor.u32 1.1754944e-38, %v464
    %v466 = vsel %vm463, %v465, %v461
    %v467 = vmul.f32 1.0, %v466
    %v468 = vtanh.pop %v448
    %v469 = vld [vmem:[#allocation6] sm:$0x3]
    %471 = vrot.lane.b32.xlu0 %v469, 32
    %v472 = vpop.permute.xlu0 %471
    %v474 = vmul.f32 %v467, %v472
    %476 = vrot.lane.b32.xlu0 %v468, 64
    %v477 = vpop.permute.xlu0 %476
    %v479 = vmul.f32 %v467, %v477
    %481 = vrot.lane.b32.xlu0 %v479, 32
    %v482 = vpop.permute.xlu0 %481
    %v484 = vadd.f32 %v474, %v482
    %v485 = vtanh.pop %v484
    %487 = vrot.lane.b32.xlu0 %v485, 64
    %v488 = vpop.permute.xlu0 %487
    %v490 = vmul.f32 %v467, %v488
    %492 = vrot.lane.b32.xlu0 %v484, 96
    %v493 = vpop.permute.xlu0 %492
    %495 = vst.msk [vmem:[#allocation6] sm:$0x3] %vm103, %v493
    %497 = vrot.lane.b32.xlu0 %v490, 32
    %v498 = vpop.permute.xlu0 %497
    %500 = vst.msk [vmem:[#allocation5] sm:$0x3] %vm103, %v498
    %501 = vst.msk [vmem:[#allocation3 + $0x8] sm:$0x3] %vm103, %v498
    %v502 = vld [vmem:[#allocation2 + $0xa] sm:$0x3]
    %v503 = vld [vmem:[#allocation5] sm:$0x3]
    %v505 = vsel %vm108, %v503, 0
    %507 = vmatpush.msra.mxu0 0.0
    %508 = vmatpush.msra.mxu0 0.0
    %509 = vmatpush.msra.mxu0 0.0
    %510 = vmatpush.msra.mxu0 0.0
    %511 = vmatpush.msra.mxu0 0.0
    %512 = vmatpush.msra.mxu0 0.0
    %513 = vmatpush.msra.mxu0 0.0
    %514 = vmatpush.msra.mxu0 0.0
    %515 = vmatpush.msra.mxu0 0.0
    %516 = vmatpush.msra.mxu0 0.0
    %517 = vmatpush.msra.mxu0 0.0
    %518 = vmatpush.msra.mxu0 0.0
    %519 = vmatpush.msra.mxu0 %v102
    %520 = vmatpush.msra.mxu0 %v101
    %521 = vmatpush.msra.mxu0 %v100
    %522 = vmatpush.msra.mxu0 %v99
    %523 = vmatmul.f32.gmra.mxu0 %v505
    %v524 = vpop.f32.mrf.mxu0
    %v525 = vadd.f32 0.0, %v524
    %526 = vdwg.mxu0
    %v527 = vadd.f32 %v502, %v525
    %v528 = vxor.u32 %v527, 2147483648
    %v529 = vmul.f32 %v528, 1.442695
    %v530 = vpow.pop %v529
    %v531 = vadd.f32 %v530, 1.0
    %v532 = vrcp.pop %v531
    %v533 = vmul.f32 %v531, %v532
    %v534 = vsub.f32 1.0, %v533
    %v535 = vmul.f32 %v532, %v534
    %v536 = vadd.f32 %v532, %v535
    %vm537 = vweird.f32 %v531
    %vm538 = vweird.f32 %v532
    %vm539 = vmor %vm537, %vm538
    %v540 = vsel %vm539, %v532, %v536
    %v541 = vand.u32 2147483647, %v531
    %vm542 = vcmp.eq.f32.partialorder %v541, 8.507059e+37
    %v543 = vand.u32 %v531, 2147483648
    %v544 = vor.u32 1.1754944e-38, %v543
    %v545 = vsel %vm542, %v544, %v540
    %v546 = vmul.f32 1.0, %v545
    %v547 = vtanh.pop %v527
    %v548 = vld [vmem:[#allocation6] sm:$0x3]
    %550 = vrot.lane.b32.xlu0 %v548, 32
    %v551 = vpop.permute.xlu0 %550
    %v553 = vmul.f32 %v546, %v551
    %555 = vrot.lane.b32.xlu0 %v547, 64
    %v556 = vpop.permute.xlu0 %555
    %v558 = vmul.f32 %v546, %v556
    %560 = vrot.lane.b32.xlu0 %v558, 32
    %v561 = vpop.permute.xlu0 %560
    %v563 = vadd.f32 %v553, %v561
    %v564 = vtanh.pop %v563
    %566 = vrot.lane.b32.xlu0 %v564, 64
    %v567 = vpop.permute.xlu0 %566
    %v569 = vmul.f32 %v546, %v567
    %571 = vrot.lane.b32.xlu0 %v563, 96
    %v572 = vpop.permute.xlu0 %571
    %574 = vst.msk [vmem:[#allocation6] sm:$0x3] %vm103, %v572
    %576 = vrot.lane.b32.xlu0 %v569, 32
    %v577 = vpop.permute.xlu0 %576
    %579 = vst.msk [vmem:[#allocation5] sm:$0x3] %vm103, %v577
    %580 = vst.msk [vmem:[#allocation3 + $0xa] sm:$0x3] %vm103, %v577
    %v581 = vld [vmem:[#allocation2 + $0xc] sm:$0x3]
    %v582 = vld [vmem:[#allocation5] sm:$0x3]
    %v584 = vsel %vm108, %v582, 0
    %586 = vmatpush.msra.mxu0 0.0
    %587 = vmatpush.msra.mxu0 0.0
    %588 = vmatpush.msra.mxu0 0.0
    %589 = vmatpush.msra.mxu0 0.0
    %590 = vmatpush.msra.mxu0 0.0
    %591 = vmatpush.msra.mxu0 0.0
    %592 = vmatpush.msra.mxu0 0.0
    %593 = vmatpush.msra.mxu0 0.0
    %594 = vmatpush.msra.mxu0 0.0
    %595 = vmatpush.msra.mxu0 0.0
    %596 = vmatpush.msra.mxu0 0.0
    %597 = vmatpush.msra.mxu0 0.0
    %598 = vmatpush.msra.mxu0 %v102
    %599 = vmatpush.msra.mxu0 %v101
    %600 = vmatpush.msra.mxu0 %v100
    %601 = vmatpush.msra.mxu0 %v99
    %602 = vmatmul.f32.gmra.mxu0 %v584
    %v603 = vpop.f32.mrf.mxu0
    %v604 = vadd.f32 0.0, %v603
    %605 = vdwg.mxu0
    %v606 = vadd.f32 %v581, %v604
    %v607 = vxor.u32 %v606, 2147483648
    %v608 = vmul.f32 %v607, 1.442695
    %v609 = vpow.pop %v608
    %v610 = vadd.f32 %v609, 1.0
    %v611 = vrcp.pop %v610
    %v612 = vmul.f32 %v610, %v611
    %v613 = vsub.f32 1.0, %v612
    %v614 = vmul.f32 %v611, %v613
    %v615 = vadd.f32 %v611, %v614
    %vm616 = vweird.f32 %v610
    %vm617 = vweird.f32 %v611
    %vm618 = vmor %vm616, %vm617
    %v619 = vsel %vm618, %v611, %v615
    %v620 = vand.u32 2147483647, %v610
    %vm621 = vcmp.eq.f32.partialorder %v620, 8.507059e+37
    %v622 = vand.u32 %v610, 2147483648
    %v623 = vor.u32 1.1754944e-38, %v622
    %v624 = vsel %vm621, %v623, %v619
    %v625 = vmul.f32 1.0, %v624
    %v626 = vtanh.pop %v606
    %v627 = vld [vmem:[#allocation6] sm:$0x3]
    %629 = vrot.lane.b32.xlu0 %v627, 32
    %v630 = vpop.permute.xlu0 %629
    %v632 = vmul.f32 %v625, %v630
    %634 = vrot.lane.b32.xlu0 %v626, 64
    %v635 = vpop.permute.xlu0 %634
    %v637 = vmul.f32 %v625, %v635
    %639 = vrot.lane.b32.xlu0 %v637, 32
    %v640 = vpop.permute.xlu0 %639
    %v642 = vadd.f32 %v632, %v640
    %v643 = vtanh.pop %v642
    %645 = vrot.lane.b32.xlu0 %v643, 64
    %v646 = vpop.permute.xlu0 %645
    %v648 = vmul.f32 %v625, %v646
    %650 = vrot.lane.b32.xlu0 %v642, 96
    %v651 = vpop.permute.xlu0 %650
    %653 = vst.msk [vmem:[#allocation6] sm:$0x3] %vm103, %v651
    %655 = vrot.lane.b32.xlu0 %v648, 32
    %v656 = vpop.permute.xlu0 %655
    %658 = vst.msk [vmem:[#allocation5] sm:$0x3] %vm103, %v656
    %659 = vst.msk [vmem:[#allocation3 + $0xc] sm:$0x3] %vm103, %v656
    %v660 = vld [vmem:[#allocation2 + $0xe] sm:$0x3]
    %v661 = vld [vmem:[#allocation5] sm:$0x3]
    %v663 = vsel %vm108, %v661, 0
    %665 = vmatpush.msra.mxu0 0.0
    %666 = vmatpush.msra.mxu0 0.0
    %667 = vmatpush.msra.mxu0 0.0
    %668 = vmatpush.msra.mxu0 0.0
    %669 = vmatpush.msra.mxu0 0.0
    %670 = vmatpush.msra.mxu0 0.0
    %671 = vmatpush.msra.mxu0 0.0
    %672 = vmatpush.msra.mxu0 0.0
    %673 = vmatpush.msra.mxu0 0.0
    %674 = vmatpush.msra.mxu0 0.0
    %675 = vmatpush.msra.mxu0 0.0
    %676 = vmatpush.msra.mxu0 0.0
    %677 = vmatpush.msra.mxu0 %v102
    %678 = vmatpush.msra.mxu0 %v101
    %679 = vmatpush.msra.mxu0 %v100
    %680 = vmatpush.msra.mxu0 %v99
    %681 = vmatmul.f32.gmra.mxu0 %v663
    %v682 = vpop.f32.mrf.mxu0
    %v683 = vadd.f32 0.0, %v682
    %684 = vdwg.mxu0
    %v685 = vadd.f32 %v660, %v683
    %v686 = vxor.u32 %v685, 2147483648
    %v687 = vmul.f32 %v686, 1.442695
    %v688 = vpow.pop %v687
    %v689 = vadd.f32 %v688, 1.0
    %v690 = vrcp.pop %v689
    %v691 = vmul.f32 %v689, %v690
    %v692 = vsub.f32 1.0, %v691
    %v693 = vmul.f32 %v690, %v692
    %v694 = vadd.f32 %v690, %v693
    %vm695 = vweird.f32 %v689
    %vm696 = vweird.f32 %v690
    %vm697 = vmor %vm695, %vm696
    %v698 = vsel %vm697, %v690, %v694
    %v699 = vand.u32 2147483647, %v689
    %vm700 = vcmp.eq.f32.partialorder %v699, 8.507059e+37
    %v701 = vand.u32 %v689, 2147483648
    %v702 = vor.u32 1.1754944e-38, %v701
    %v703 = vsel %vm700, %v702, %v698
    %v704 = vmul.f32 1.0, %v703
    %v705 = vtanh.pop %v685
    %v706 = vld [vmem:[#allocation6] sm:$0x3]
    %708 = vrot.lane.b32.xlu0 %v706, 32
    %v709 = vpop.permute.xlu0 %708
    %v711 = vmul.f32 %v704, %v709
    %713 = vrot.lane.b32.xlu0 %v705, 64
    %v714 = vpop.permute.xlu0 %713
    %v716 = vmul.f32 %v704, %v714
    %718 = vrot.lane.b32.xlu0 %v716, 32
    %v719 = vpop.permute.xlu0 %718
    %v721 = vadd.f32 %v711, %v719
    %v722 = vtanh.pop %v721
    %724 = vrot.lane.b32.xlu0 %v722, 64
    %v725 = vpop.permute.xlu0 %724
    %v727 = vmul.f32 %v704, %v725
    %729 = vrot.lane.b32.xlu0 %v721, 96
    %v730 = vpop.permute.xlu0 %729
    %732 = vst.msk [vmem:[#allocation6] sm:$0x3] %vm103, %v730
    %734 = vrot.lane.b32.xlu0 %v727, 32
    %v735 = vpop.permute.xlu0 %734
    %737 = vst.msk [vmem:[#allocation5] sm:$0x3] %vm103, %v735
    %738 = vst.msk [vmem:[#allocation3 + $0xe] sm:$0x3] %vm103, %v735
    %v739 = vld [vmem:[#allocation3] sm:$0xff]
    %v740 = vld [vmem:[#allocation3 + $0x8] sm:$0xff]
    %v741 = vld [vmem:[#allocation8] sm:$0xff]
    %v742 = vld [vmem:[#allocation8 + $0x8] sm:$0xff]
    %v743 = vld [vmem:[#allocation8 + $0x10] sm:$0xff]
    %v744 = vld [vmem:[#allocation8 + $0x18] sm:$0xff]
    %s745 = scalar_lea.vmem %s4, 1
    %v746 = vld [vmem:[%s745] sm:$0x1]
    %v748 = vperm.slane %v746, 0
    %v751 = vsel %vm108, %v739, 0
    %v754 = vsel %vm108, %v740, 0
    %756 = vmatpush.msra.mxu0 0.0
    %757 = vmatpush.msra.mxu0 0.0
    %758 = vmatpush.msra.mxu0 0.0
    %759 = vmatpush.msra.mxu0 0.0
    %760 = vmatpush.msra.mxu0 0.0
    %761 = vmatpush.msra.mxu0 0.0
    %762 = vmatpush.msra.mxu0 0.0
    %763 = vmatpush.msra.mxu0 0.0
    %764 = vmatpush.msra.mxu0 0.0
    %765 = vmatpush.msra.mxu0 0.0
    %766 = vmatpush.msra.mxu0 0.0
    %767 = vmatpush.msra.mxu0 0.0
    %768 = vmatpush.msra.mxu0 %v744
    %769 = vmatpush.msra.mxu0 %v743
    %770 = vmatpush.msra.mxu0 %v742
    %771 = vmatpush.msra.mxu0 %v741
    %772 = vmatmul.f32.gmra.mxu0 %v751
    %v773 = vpop.f32.mrf.mxu0
    %v774 = vadd.f32 %v748, %v773
    %775 = vmatmul.f32.gmra.mxu0 %v754
    %v776 = vpop.f32.mrf.mxu0
    %v777 = vadd.f32 %v748, %v776
    %778 = vdwg.mxu0
    %779 = vst [vmem:[#allocation2] sm:$0xff] %v774
    %780 = vst [vmem:[#allocation2 + $0x8] sm:$0xff] %v777
    %s781 = scalar_lea.vmem [#allocation10], 32
    %v782 = vld [vmem:[%s781] sm:$0xff]
    %v783 = vld [vmem:[%s781 + $0x8] sm:$0xff]
    %v784 = vld [vmem:[%s781 + $0x10] sm:$0xff]
    %v785 = vld [vmem:[%s781 + $0x18] sm:$0xff]
    %786 = vst.msk [vmem:[#allocation5] sm:$0x3] %vm103, 0.0
    %787 = vst.msk [vmem:[#allocation6] sm:$0x3] %vm103, 0.0
    %v788 = vld [vmem:[#allocation2] sm:$0x3]
    %v789 = vld [vmem:[#allocation5] sm:$0x3]
    %v791 = vsel %vm108, %v789, 0
    %793 = vmatpush.msra.mxu0 0.0
    %794 = vmatpush.msra.mxu0 0.0
    %795 = vmatpush.msra.mxu0 0.0
    %796 = vmatpush.msra.mxu0 0.0
    %797 = vmatpush.msra.mxu0 0.0
    %798 = vmatpush.msra.mxu0 0.0
    %799 = vmatpush.msra.mxu0 0.0
    %800 = vmatpush.msra.mxu0 0.0
    %801 = vmatpush.msra.mxu0 0.0
    %802 = vmatpush.msra.mxu0 0.0
    %803 = vmatpush.msra.mxu0 0.0
    %804 = vmatpush.msra.mxu0 0.0
    %805 = vmatpush.msra.mxu0 %v785
    %806 = vmatpush.msra.mxu0 %v784
    %807 = vmatpush.msra.mxu0 %v783
    %808 = vmatpush.msra.mxu0 %v782
    %809 = vmatmul.f32.gmra.mxu0 %v791
    %v810 = vpop.f32.mrf.mxu0
    %v811 = vadd.f32 0.0, %v810
    %812 = vdwg.mxu0
    %v813 = vadd.f32 %v788, %v811
    %v814 = vxor.u32 %v813, 2147483648
    %v815 = vmul.f32 %v814, 1.442695
    %v816 = vpow.pop %v815
    %v817 = vadd.f32 %v816, 1.0
    %v818 = vrcp.pop %v817
    %v819 = vmul.f32 %v817, %v818
    %v820 = vsub.f32 1.0, %v819
    %v821 = vmul.f32 %v818, %v820
    %v822 = vadd.f32 %v818, %v821
    %vm823 = vweird.f32 %v817
    %vm824 = vweird.f32 %v818
    %vm825 = vmor %vm823, %vm824
    %v826 = vsel %vm825, %v818, %v822
    %v827 = vand.u32 2147483647, %v817
    %vm828 = vcmp.eq.f32.partialorder %v827, 8.507059e+37
    %v829 = vand.u32 %v817, 2147483648
    %v830 = vor.u32 1.1754944e-38, %v829
    %v831 = vsel %vm828, %v830, %v826
    %v832 = vmul.f32 1.0, %v831
    %v833 = vtanh.pop %v813
    %v834 = vld [vmem:[#allocation6] sm:$0x3]
    %836 = vrot.lane.b32.xlu0 %v834, 32
    %v837 = vpop.permute.xlu0 %836
    %v839 = vmul.f32 %v832, %v837
    %841 = vrot.lane.b32.xlu0 %v833, 64
    %v842 = vpop.permute.xlu0 %841
    %v844 = vmul.f32 %v832, %v842
    %846 = vrot.lane.b32.xlu0 %v844, 32
    %v847 = vpop.permute.xlu0 %846
    %v849 = vadd.f32 %v839, %v847
    %v850 = vtanh.pop %v849
    %852 = vrot.lane.b32.xlu0 %v850, 64
    %v853 = vpop.permute.xlu0 %852
    %v855 = vmul.f32 %v832, %v853
    %857 = vrot.lane.b32.xlu0 %v849, 96
    %v858 = vpop.permute.xlu0 %857
    %860 = vst.msk [vmem:[#allocation6] sm:$0x3] %vm103, %v858
    %862 = vrot.lane.b32.xlu0 %v855, 32
    %v863 = vpop.permute.xlu0 %862
    %865 = vst.msk [vmem:[#allocation5] sm:$0x3] %vm103, %v863
    %866 = vst.msk [vmem:[#allocation3] sm:$0x3] %vm103, %v863
    %v867 = vld [vmem:[#allocation2 + $0x2] sm:$0x3]
    %v868 = vld [vmem:[#allocation5] sm:$0x3]
    %v870 = vsel %vm108, %v868, 0
    %872 = vmatpush.msra.mxu0 0.0
    %873 = vmatpush.msra.mxu0 0.0
    %874 = vmatpush.msra.mxu0 0.0
    %875 = vmatpush.msra.mxu0 0.0
    %876 = vmatpush.msra.mxu0 0.0
    %877 = vmatpush.msra.mxu0 0.0
    %878 = vmatpush.msra.mxu0 0.0
    %879 = vmatpush.msra.mxu0 0.0
    %880 = vmatpush.msra.mxu0 0.0
    %881 = vmatpush.msra.mxu0 0.0
    %882 = vmatpush.msra.mxu0 0.0
    %883 = vmatpush.msra.mxu0 0.0
    %884 = vmatpush.msra.mxu0 %v785
    %885 = vmatpush.msra.mxu0 %v784
    %886 = vmatpush.msra.mxu0 %v783
    %887 = vmatpush.msra.mxu0 %v782
    %888 = vmatmul.f32.gmra.mxu0 %v870
    %v889 = vpop.f32.mrf.mxu0
    %v890 = vadd.f32 0.0, %v889
    %891 = vdwg.mxu0
    %v892 = vadd.f32 %v867, %v890
    %v893 = vxor.u32 %v892, 2147483648
    %v894 = vmul.f32 %v893, 1.442695
    %v895 = vpow.pop %v894
    %v896 = vadd.f32 %v895, 1.0
    %v897 = vrcp.pop %v896
    %v898 = vmul.f32 %v896, %v897
    %v899 = vsub.f32 1.0, %v898
    %v900 = vmul.f32 %v897, %v899
    %v901 = vadd.f32 %v897, %v900
    %vm902 = vweird.f32 %v896
    %vm903 = vweird.f32 %v897
    %vm904 = vmor %vm902, %vm903
    %v905 = vsel %vm904, %v897, %v901
    %v906 = vand.u32 2147483647, %v896
    %vm907 = vcmp.eq.f32.partialorder %v906, 8.507059e+37
    %v908 = vand.u32 %v896, 2147483648
    %v909 = vor.u32 1.1754944e-38, %v908
    %v910 = vsel %vm907, %v909, %v905
    %v911 = vmul.f32 1.0, %v910
    %v912 = vtanh.pop %v892
    %v913 = vld [vmem:[#allocation6] sm:$0x3]
    %915 = vrot.lane.b32.xlu0 %v913, 32
    %v916 = vpop.permute.xlu0 %915
    %v918 = vmul.f32 %v911, %v916
    %920 = vrot.lane.b32.xlu0 %v912, 64
    %v921 = vpop.permute.xlu0 %920
    %v923 = vmul.f32 %v911, %v921
    %925 = vrot.lane.b32.xlu0 %v923, 32
    %v926 = vpop.permute.xlu0 %925
    %v928 = vadd.f32 %v918, %v926
    %v929 = vtanh.pop %v928
    %931 = vrot.lane.b32.xlu0 %v929, 64
    %v932 = vpop.permute.xlu0 %931
    %v934 = vmul.f32 %v911, %v932
    %936 = vrot.lane.b32.xlu0 %v928, 96
    %v937 = vpop.permute.xlu0 %936
    %939 = vst.msk [vmem:[#allocation6] sm:$0x3] %vm103, %v937
    %941 = vrot.lane.b32.xlu0 %v934, 32
    %v942 = vpop.permute.xlu0 %941
    %944 = vst.msk [vmem:[#allocation5] sm:$0x3] %vm103, %v942
    %945 = vst.msk [vmem:[#allocation3 + $0x2] sm:$0x3] %vm103, %v942
    %v946 = vld [vmem:[#allocation2 + $0x4] sm:$0x3]
    %v947 = vld [vmem:[#allocation5] sm:$0x3]
    %v949 = vsel %vm108, %v947, 0
    %951 = vmatpush.msra.mxu0 0.0
    %952 = vmatpush.msra.mxu0 0.0
    %953 = vmatpush.msra.mxu0 0.0
    %954 = vmatpush.msra.mxu0 0.0
    %955 = vmatpush.msra.mxu0 0.0
    %956 = vmatpush.msra.mxu0 0.0
    %957 = vmatpush.msra.mxu0 0.0
    %958 = vmatpush.msra.mxu0 0.0
    %959 = vmatpush.msra.mxu0 0.0
    %960 = vmatpush.msra.mxu0 0.0
    %961 = vmatpush.msra.mxu0 0.0
    %962 = vmatpush.msra.mxu0 0.0
    %963 = vmatpush.msra.mxu0 %v785
    %964 = vmatpush.msra.mxu0 %v784
    %965 = vmatpush.msra.mxu0 %v783
    %966 = vmatpush.msra.mxu0 %v782
    %967 = vmatmul.f32.gmra.mxu0 %v949
    %v968 = vpop.f32.mrf.mxu0
    %v969 = vadd.f32 0.0, %v968
    %970 = vdwg.mxu0
    %v971 = vadd.f32 %v946, %v969
    %v972 = vxor.u32 %v971, 2147483648
    %v973 = vmul.f32 %v972, 1.442695
    %v974 = vpow.pop %v973
    %v975 = vadd.f32 %v974, 1.0
    %v976 = vrcp.pop %v975
    %v977 = vmul.f32 %v975, %v976
    %v978 = vsub.f32 1.0, %v977
    %v979 = vmul.f32 %v976, %v978
    %v980 = vadd.f32 %v976, %v979
    %vm981 = vweird.f32 %v975
    %vm982 = vweird.f32 %v976
    %vm983 = vmor %vm981, %vm982
    %v984 = vsel %vm983, %v976, %v980
    %v985 = vand.u32 2147483647, %v975
    %vm986 = vcmp.eq.f32.partialorder %v985, 8.507059e+37
    %v987 = vand.u32 %v975, 2147483648
    %v988 = vor.u32 1.1754944e-38, %v987
    %v989 = vsel %vm986, %v988, %v984
    %v990 = vmul.f32 1.0, %v989
    %v991 = vtanh.pop %v971
    %v992 = vld [vmem:[#allocation6] sm:$0x3]
    %994 = vrot.lane.b32.xlu0 %v992, 32
    %v995 = vpop.permute.xlu0 %994
    %v997 = vmul.f32 %v990, %v995
    %999 = vrot.lane.b32.xlu0 %v991, 64
    %v1000 = vpop.permute.xlu0 %999
    %v1002 = vmul.f32 %v990, %v1000
    %1004 = vrot.lane.b32.xlu0 %v1002, 32
    %v1005 = vpop.permute.xlu0 %1004
    %v1007 = vadd.f32 %v997, %v1005
    %v1008 = vtanh.pop %v1007
    %1010 = vrot.lane.b32.xlu0 %v1008, 64
    %v1011 = vpop.permute.xlu0 %1010
    %v1013 = vmul.f32 %v990, %v1011
    %1015 = vrot.lane.b32.xlu0 %v1007, 96
    %v1016 = vpop.permute.xlu0 %1015
    %1018 = vst.msk [vmem:[#allocation6] sm:$0x3] %vm103, %v1016
    %1020 = vrot.lane.b32.xlu0 %v1013, 32
    %v1021 = vpop.permute.xlu0 %1020
    %1023 = vst.msk [vmem:[#allocation5] sm:$0x3] %vm103, %v1021
    %1024 = vst.msk [vmem:[#allocation3 + $0x4] sm:$0x3] %vm103, %v1021
    %v1025 = vld [vmem:[#allocation2 + $0x6] sm:$0x3]
    %v1026 = vld [vmem:[#allocation5] sm:$0x3]
    %v1028 = vsel %vm108, %v1026, 0
    %1030 = vmatpush.msra.mxu0 0.0
    %1031 = vmatpush.msra.mxu0 0.0
    %1032 = vmatpush.msra.mxu0 0.0
    %1033 = vmatpush.msra.mxu0 0.0
    %1034 = vmatpush.msra.mxu0 0.0
    %1035 = vmatpush.msra.mxu0 0.0
    %1036 = vmatpush.msra.mxu0 0.0
    %1037 = vmatpush.msra.mxu0 0.0
    %1038 = vmatpush.msra.mxu0 0.0
    %1039 = vmatpush.msra.mxu0 0.0
    %1040 = vmatpush.msra.mxu0 0.0
    %1041 = vmatpush.msra.mxu0 0.0
    %1042 = vmatpush.msra.mxu0 %v785
    %1043 = vmatpush.msra.mxu0 %v784
    %1044 = vmatpush.msra.mxu0 %v783
    %1045 = vmatpush.msra.mxu0 %v782
    %1046 = vmatmul.f32.gmra.mxu0 %v1028
    %v1047 = vpop.f32.mrf.mxu0
    %v1048 = vadd.f32 0.0, %v1047
    %1049 = vdwg.mxu0
    %v1050 = vadd.f32 %v1025, %v1048
    %v1051 = vxor.u32 %v1050, 2147483648
    %v1052 = vmul.f32 %v1051, 1.442695
    %v1053 = vpow.pop %v1052
    %v1054 = vadd.f32 %v1053, 1.0
    %v1055 = vrcp.pop %v1054
    %v1056 = vmul.f32 %v1054, %v1055
    %v1057 = vsub.f32 1.0, %v1056
    %v1058 = vmul.f32 %v1055, %v1057
    %v1059 = vadd.f32 %v1055, %v1058
    %vm1060 = vweird.f32 %v1054
    %vm1061 = vweird.f32 %v1055
    %vm1062 = vmor %vm1060, %vm1061
    %v1063 = vsel %vm1062, %v1055, %v1059
    %v1064 = vand.u32 2147483647, %v1054
    %vm1065 = vcmp.eq.f32.partialorder %v1064, 8.507059e+37
    %v1066 = vand.u32 %v1054, 2147483648
    %v1067 = vor.u32 1.1754944e-38, %v1066
    %v1068 = vsel %vm1065, %v1067, %v1063
    %v1069 = vmul.f32 1.0, %v1068
    %v1070 = vtanh.pop %v1050
    %v1071 = vld [vmem:[#allocation6] sm:$0x3]
    %1073 = vrot.lane.b32.xlu0 %v1071, 32
    %v1074 = vpop.permute.xlu0 %1073
    %v1076 = vmul.f32 %v1069, %v1074
    %1078 = vrot.lane.b32.xlu0 %v1070, 64
    %v1079 = vpop.permute.xlu0 %1078
    %v1081 = vmul.f32 %v1069, %v1079
    %1083 = vrot.lane.b32.xlu0 %v1081, 32
    %v1084 = vpop.permute.xlu0 %1083
    %v1086 = vadd.f32 %v1076, %v1084
    %v1087 = vtanh.pop %v1086
    %1089 = vrot.lane.b32.xlu0 %v1087, 64
    %v1090 = vpop.permute.xlu0 %1089
    %v1092 = vmul.f32 %v1069, %v1090
    %1094 = vrot.lane.b32.xlu0 %v1086, 96
    %v1095 = vpop.permute.xlu0 %1094
    %1097 = vst.msk [vmem:[#allocation6] sm:$0x3] %vm103, %v1095
    %1099 = vrot.lane.b32.xlu0 %v1092, 32
    %v1100 = vpop.permute.xlu0 %1099
    %1102 = vst.msk [vmem:[#allocation5] sm:$0x3] %vm103, %v1100
    %1103 = vst.msk [vmem:[#allocation3 + $0x6] sm:$0x3] %vm103, %v1100
    %v1104 = vld [vmem:[#allocation2 + $0x8] sm:$0x3]
    %v1105 = vld [vmem:[#allocation5] sm:$0x3]
    %v1107 = vsel %vm108, %v1105, 0
    %1109 = vmatpush.msra.mxu0 0.0
    %1110 = vmatpush.msra.mxu0 0.0
    %1111 = vmatpush.msra.mxu0 0.0
    %1112 = vmatpush.msra.mxu0 0.0
    %1113 = vmatpush.msra.mxu0 0.0
    %1114 = vmatpush.msra.mxu0 0.0
    %1115 = vmatpush.msra.mxu0 0.0
    %1116 = vmatpush.msra.mxu0 0.0
    %1117 = vmatpush.msra.mxu0 0.0
    %1118 = vmatpush.msra.mxu0 0.0
    %1119 = vmatpush.msra.mxu0 0.0
    %1120 = vmatpush.msra.mxu0 0.0
    %1121 = vmatpush.msra.mxu0 %v785
    %1122 = vmatpush.msra.mxu0 %v784
    %1123 = vmatpush.msra.mxu0 %v783
    %1124 = vmatpush.msra.mxu0 %v782
    %1125 = vmatmul.f32.gmra.mxu0 %v1107
    %v1126 = vpop.f32.mrf.mxu0
    %v1127 = vadd.f32 0.0, %v1126
    %1128 = vdwg.mxu0
    %v1129 = vadd.f32 %v1104, %v1127
    %v1130 = vxor.u32 %v1129, 2147483648
    %v1131 = vmul.f32 %v1130, 1.442695
    %v1132 = vpow.pop %v1131
    %v1133 = vadd.f32 %v1132, 1.0
    %v1134 = vrcp.pop %v1133
    %v1135 = vmul.f32 %v1133, %v1134
    %v1136 = vsub.f32 1.0, %v1135
    %v1137 = vmul.f32 %v1134, %v1136
    %v1138 = vadd.f32 %v1134, %v1137
    %vm1139 = vweird.f32 %v1133
    %vm1140 = vweird.f32 %v1134
    %vm1141 = vmor %vm1139, %vm1140
    %v1142 = vsel %vm1141, %v1134, %v1138
    %v1143 = vand.u32 2147483647, %v1133
    %vm1144 = vcmp.eq.f32.partialorder %v1143, 8.507059e+37
    %v1145 = vand.u32 %v1133, 2147483648
    %v1146 = vor.u32 1.1754944e-38, %v1145
    %v1147 = vsel %vm1144, %v1146, %v1142
    %v1148 = vmul.f32 1.0, %v1147
    %v1149 = vtanh.pop %v1129
    %v1150 = vld [vmem:[#allocation6] sm:$0x3]
    %1152 = vrot.lane.b32.xlu0 %v1150, 32
    %v1153 = vpop.permute.xlu0 %1152
    %v1155 = vmul.f32 %v1148, %v1153
    %1157 = vrot.lane.b32.xlu0 %v1149, 64
    %v1158 = vpop.permute.xlu0 %1157
    %v1160 = vmul.f32 %v1148, %v1158
    %1162 = vrot.lane.b32.xlu0 %v1160, 32
    %v1163 = vpop.permute.xlu0 %1162
    %v1165 = vadd.f32 %v1155, %v1163
    %v1166 = vtanh.pop %v1165
    %1168 = vrot.lane.b32.xlu0 %v1166, 64
    %v1169 = vpop.permute.xlu0 %1168
    %v1171 = vmul.f32 %v1148, %v1169
    %1173 = vrot.lane.b32.xlu0 %v1165, 96
    %v1174 = vpop.permute.xlu0 %1173
    %1176 = vst.msk [vmem:[#allocation6] sm:$0x3] %vm103, %v1174
    %1178 = vrot.lane.b32.xlu0 %v1171, 32
    %v1179 = vpop.permute.xlu0 %1178
    %1181 = vst.msk [vmem:[#allocation5] sm:$0x3] %vm103, %v1179
    %1182 = vst.msk [vmem:[#allocation3 + $0x8] sm:$0x3] %vm103, %v1179
    %v1183 = vld [vmem:[#allocation2 + $0xa] sm:$0x3]
    %v1184 = vld [vmem:[#allocation5] sm:$0x3]
    %v1186 = vsel %vm108, %v1184, 0
    %1188 = vmatpush.msra.mxu0 0.0
    %1189 = vmatpush.msra.mxu0 0.0
    %1190 = vmatpush.msra.mxu0 0.0
    %1191 = vmatpush.msra.mxu0 0.0
    %1192 = vmatpush.msra.mxu0 0.0
    %1193 = vmatpush.msra.mxu0 0.0
    %1194 = vmatpush.msra.mxu0 0.0
    %1195 = vmatpush.msra.mxu0 0.0
    %1196 = vmatpush.msra.mxu0 0.0
    %1197 = vmatpush.msra.mxu0 0.0
    %1198 = vmatpush.msra.mxu0 0.0
    %1199 = vmatpush.msra.mxu0 0.0
    %1200 = vmatpush.msra.mxu0 %v785
    %1201 = vmatpush.msra.mxu0 %v784
    %1202 = vmatpush.msra.mxu0 %v783
    %1203 = vmatpush.msra.mxu0 %v782
    %1204 = vmatmul.f32.gmra.mxu0 %v1186
    %v1205 = vpop.f32.mrf.mxu0
    %v1206 = vadd.f32 0.0, %v1205
    %1207 = vdwg.mxu0
    %v1208 = vadd.f32 %v1183, %v1206
    %v1209 = vxor.u32 %v1208, 2147483648
    %v1210 = vmul.f32 %v1209, 1.442695
    %v1211 = vpow.pop %v1210
    %v1212 = vadd.f32 %v1211, 1.0
    %v1213 = vrcp.pop %v1212
    %v1214 = vmul.f32 %v1212, %v1213
    %v1215 = vsub.f32 1.0, %v1214
    %v1216 = vmul.f32 %v1213, %v1215
    %v1217 = vadd.f32 %v1213, %v1216
    %vm1218 = vweird.f32 %v1212
    %vm1219 = vweird.f32 %v1213
    %vm1220 = vmor %vm1218, %vm1219
    %v1221 = vsel %vm1220, %v1213, %v1217
    %v1222 = vand.u32 2147483647, %v1212
    %vm1223 = vcmp.eq.f32.partialorder %v1222, 8.507059e+37
    %v1224 = vand.u32 %v1212, 2147483648
    %v1225 = vor.u32 1.1754944e-38, %v1224
    %v1226 = vsel %vm1223, %v1225, %v1221
    %v1227 = vmul.f32 1.0, %v1226
    %v1228 = vtanh.pop %v1208
    %v1229 = vld [vmem:[#allocation6] sm:$0x3]
    %1231 = vrot.lane.b32.xlu0 %v1229, 32
    %v1232 = vpop.permute.xlu0 %1231
    %v1234 = vmul.f32 %v1227, %v1232
    %1236 = vrot.lane.b32.xlu0 %v1228, 64
    %v1237 = vpop.permute.xlu0 %1236
    %v1239 = vmul.f32 %v1227, %v1237
    %1241 = vrot.lane.b32.xlu0 %v1239, 32
    %v1242 = vpop.permute.xlu0 %1241
    %v1244 = vadd.f32 %v1234, %v1242
    %v1245 = vtanh.pop %v1244
    %1247 = vrot.lane.b32.xlu0 %v1245, 64
    %v1248 = vpop.permute.xlu0 %1247
    %v1250 = vmul.f32 %v1227, %v1248
    %1252 = vrot.lane.b32.xlu0 %v1244, 96
    %v1253 = vpop.permute.xlu0 %1252
    %1255 = vst.msk [vmem:[#allocation6] sm:$0x3] %vm103, %v1253
    %1257 = vrot.lane.b32.xlu0 %v1250, 32
    %v1258 = vpop.permute.xlu0 %1257
    %1260 = vst.msk [vmem:[#allocation5] sm:$0x3] %vm103, %v1258
    %1261 = vst.msk [vmem:[#allocation3 + $0xa] sm:$0x3] %vm103, %v1258
    %v1262 = vld [vmem:[#allocation2 + $0xc] sm:$0x3]
    %v1263 = vld [vmem:[#allocation5] sm:$0x3]
    %v1265 = vsel %vm108, %v1263, 0
    %1267 = vmatpush.msra.mxu0 0.0
    %1268 = vmatpush.msra.mxu0 0.0
    %1269 = vmatpush.msra.mxu0 0.0
    %1270 = vmatpush.msra.mxu0 0.0
    %1271 = vmatpush.msra.mxu0 0.0
    %1272 = vmatpush.msra.mxu0 0.0
    %1273 = vmatpush.msra.mxu0 0.0
    %1274 = vmatpush.msra.mxu0 0.0
    %1275 = vmatpush.msra.mxu0 0.0
    %1276 = vmatpush.msra.mxu0 0.0
    %1277 = vmatpush.msra.mxu0 0.0
    %1278 = vmatpush.msra.mxu0 0.0
    %1279 = vmatpush.msra.mxu0 %v785
    %1280 = vmatpush.msra.mxu0 %v784
    %1281 = vmatpush.msra.mxu0 %v783
    %1282 = vmatpush.msra.mxu0 %v782
    %1283 = vmatmul.f32.gmra.mxu0 %v1265
    %v1284 = vpop.f32.mrf.mxu0
    %v1285 = vadd.f32 0.0, %v1284
    %1286 = vdwg.mxu0
    %v1287 = vadd.f32 %v1262, %v1285
    %v1288 = vxor.u32 %v1287, 2147483648
    %v1289 = vmul.f32 %v1288, 1.442695
    %v1290 = vpow.pop %v1289
    %v1291 = vadd.f32 %v1290, 1.0
    %v1292 = vrcp.pop %v1291
    %v1293 = vmul.f32 %v1291, %v1292
    %v1294 = vsub.f32 1.0, %v1293
    %v1295 = vmul.f32 %v1292, %v1294
    %v1296 = vadd.f32 %v1292, %v1295
    %vm1297 = vweird.f32 %v1291
    %vm1298 = vweird.f32 %v1292
    %vm1299 = vmor %vm1297, %vm1298
    %v1300 = vsel %vm1299, %v1292, %v1296
    %v1301 = vand.u32 2147483647, %v1291
    %vm1302 = vcmp.eq.f32.partialorder %v1301, 8.507059e+37
    %v1303 = vand.u32 %v1291, 2147483648
    %v1304 = vor.u32 1.1754944e-38, %v1303
    %v1305 = vsel %vm1302, %v1304, %v1300
    %v1306 = vmul.f32 1.0, %v1305
    %v1307 = vtanh.pop %v1287
    %v1308 = vld [vmem:[#allocation6] sm:$0x3]
    %1310 = vrot.lane.b32.xlu0 %v1308, 32
    %v1311 = vpop.permute.xlu0 %1310
    %v1313 = vmul.f32 %v1306, %v1311
    %1315 = vrot.lane.b32.xlu0 %v1307, 64
    %v1316 = vpop.permute.xlu0 %1315
    %v1318 = vmul.f32 %v1306, %v1316
    %1320 = vrot.lane.b32.xlu0 %v1318, 32
    %v1321 = vpop.permute.xlu0 %1320
    %v1323 = vadd.f32 %v1313, %v1321
    %v1324 = vtanh.pop %v1323
    %1326 = vrot.lane.b32.xlu0 %v1324, 64
    %v1327 = vpop.permute.xlu0 %1326
    %v1329 = vmul.f32 %v1306, %v1327
    %1331 = vrot.lane.b32.xlu0 %v1323, 96
    %v1332 = vpop.permute.xlu0 %1331
    %1334 = vst.msk [vmem:[#allocation6] sm:$0x3] %vm103, %v1332
    %1336 = vrot.lane.b32.xlu0 %v1329, 32
    %v1337 = vpop.permute.xlu0 %1336
    %1339 = vst.msk [vmem:[#allocation5] sm:$0x3] %vm103, %v1337
    %1340 = vst.msk [vmem:[#allocation3 + $0xc] sm:$0x3] %vm103, %v1337
    %v1341 = vld [vmem:[#allocation2 + $0xe] sm:$0x3]
    %v1342 = vld [vmem:[#allocation5] sm:$0x3]
    %v1344 = vsel %vm108, %v1342, 0
    %1346 = vmatpush.msra.mxu0 0.0
    %1347 = vmatpush.msra.mxu0 0.0
    %1348 = vmatpush.msra.mxu0 0.0
    %1349 = vmatpush.msra.mxu0 0.0
    %1350 = vmatpush.msra.mxu0 0.0
    %1351 = vmatpush.msra.mxu0 0.0
    %1352 = vmatpush.msra.mxu0 0.0
    %1353 = vmatpush.msra.mxu0 0.0
    %1354 = vmatpush.msra.mxu0 0.0
    %1355 = vmatpush.msra.mxu0 0.0
    %1356 = vmatpush.msra.mxu0 0.0
    %1357 = vmatpush.msra.mxu0 0.0
    %1358 = vmatpush.msra.mxu0 %v785
    %1359 = vmatpush.msra.mxu0 %v784
    %1360 = vmatpush.msra.mxu0 %v783
    %1361 = vmatpush.msra.mxu0 %v782
    %1362 = vmatmul.f32.gmra.mxu0 %v1344
    %v1363 = vpop.f32.mrf.mxu0
    %v1364 = vadd.f32 0.0, %v1363
    %1365 = vdwg.mxu0
    %v1366 = vadd.f32 %v1341, %v1364
    %v1367 = vxor.u32 %v1366, 2147483648
    %v1368 = vmul.f32 %v1367, 1.442695
    %v1369 = vpow.pop %v1368
    %v1370 = vadd.f32 %v1369, 1.0
    %v1371 = vrcp.pop %v1370
    %v1372 = vmul.f32 %v1370, %v1371
    %v1373 = vsub.f32 1.0, %v1372
    %v1374 = vmul.f32 %v1371, %v1373
    %v1375 = vadd.f32 %v1371, %v1374
    %vm1376 = vweird.f32 %v1370
    %vm1377 = vweird.f32 %v1371
    %vm1378 = vmor %vm1376, %vm1377
    %v1379 = vsel %vm1378, %v1371, %v1375
    %v1380 = vand.u32 2147483647, %v1370
    %vm1381 = vcmp.eq.f32.partialorder %v1380, 8.507059e+37
    %v1382 = vand.u32 %v1370, 2147483648
    %v1383 = vor.u32 1.1754944e-38, %v1382
    %v1384 = vsel %vm1381, %v1383, %v1379
    %v1385 = vmul.f32 1.0, %v1384
    %v1386 = vtanh.pop %v1366
    %v1387 = vld [vmem:[#allocation6] sm:$0x3]
    %1389 = vrot.lane.b32.xlu0 %v1387, 32
    %v1390 = vpop.permute.xlu0 %1389
    %v1392 = vmul.f32 %v1385, %v1390
    %1394 = vrot.lane.b32.xlu0 %v1386, 64
    %v1395 = vpop.permute.xlu0 %1394
    %v1397 = vmul.f32 %v1385, %v1395
    %1399 = vrot.lane.b32.xlu0 %v1397, 32
    %v1400 = vpop.permute.xlu0 %1399
    %v1402 = vadd.f32 %v1392, %v1400
    %v1403 = vtanh.pop %v1402
    %1405 = vrot.lane.b32.xlu0 %v1403, 64
    %v1406 = vpop.permute.xlu0 %1405
    %v1408 = vmul.f32 %v1385, %v1406
    %1410 = vrot.lane.b32.xlu0 %v1402, 96
    %v1411 = vpop.permute.xlu0 %1410
    %1413 = vst.msk [vmem:[#allocation6] sm:$0x3] %vm103, %v1411
    %1415 = vrot.lane.b32.xlu0 %v1408, 32
    %v1416 = vpop.permute.xlu0 %1415
    %1418 = vst.msk [vmem:[#allocation5] sm:$0x3] %vm103, %v1416
    %1419 = vst.msk [vmem:[#allocation3 + $0xe] sm:$0x3] %vm103, %v1416
    %v1420 = vld [vmem:[#allocation3] sm:$0xff]
    %v1421 = vld [vmem:[#allocation3 + $0x8] sm:$0xff]
    %s1422 = scalar_lea.vmem [#allocation8], 32
    %v1423 = vld [vmem:[%s1422] sm:$0xff]
    %v1424 = vld [vmem:[%s1422 + $0x8] sm:$0xff]
    %v1425 = vld [vmem:[%s1422 + $0x10] sm:$0xff]
    %v1426 = vld [vmem:[%s1422 + $0x18] sm:$0xff]
    %s1427 = scalar_lea.vmem %s4, 2
    %v1428 = vld [vmem:[%s1427] sm:$0x1]
    %v1430 = vperm.slane %v1428, 0
    %v1433 = vsel %vm108, %v1420, 0
    %v1436 = vsel %vm108, %v1421, 0
    %1438 = vmatpush.msra.mxu0 0.0
    %1439 = vmatpush.msra.mxu0 0.0
    %1440 = vmatpush.msra.mxu0 0.0
    %1441 = vmatpush.msra.mxu0 0.0
    %1442 = vmatpush.msra.mxu0 0.0
    %1443 = vmatpush.msra.mxu0 0.0
    %1444 = vmatpush.msra.mxu0 0.0
    %1445 = vmatpush.msra.mxu0 0.0
    %1446 = vmatpush.msra.mxu0 0.0
    %1447 = vmatpush.msra.mxu0 0.0
    %1448 = vmatpush.msra.mxu0 0.0
    %1449 = vmatpush.msra.mxu0 0.0
    %1450 = vmatpush.msra.mxu0 %v1426
    %1451 = vmatpush.msra.mxu0 %v1425
    %1452 = vmatpush.msra.mxu0 %v1424
    %1453 = vmatpush.msra.mxu0 %v1423
    %1454 = vmatmul.f32.gmra.mxu0 %v1433
    %v1455 = vpop.f32.mrf.mxu0
    %v1456 = vadd.f32 %v1430, %v1455
    %1457 = vmatmul.f32.gmra.mxu0 %v1436
    %v1458 = vpop.f32.mrf.mxu0
    %v1459 = vadd.f32 %v1430, %v1458
    %1460 = vdwg.mxu0
    %1461 = vst [vmem:[#allocation2] sm:$0xff] %v1456
    %1462 = vst [vmem:[#allocation2 + $0x8] sm:$0xff] %v1459
    %s1463 = scalar_lea.vmem [#allocation10], 64
    %v1464 = vld [vmem:[%s1463] sm:$0xff]
    %v1465 = vld [vmem:[%s1463 + $0x8] sm:$0xff]
    %v1466 = vld [vmem:[%s1463 + $0x10] sm:$0xff]
    %v1467 = vld [vmem:[%s1463 + $0x18] sm:$0xff]
    %1468 = vst.msk [vmem:[#allocation5] sm:$0x3] %vm103, 0.0
    %1469 = vst.msk [vmem:[#allocation6] sm:$0x3] %vm103, 0.0
    %v1470 = vld [vmem:[#allocation2] sm:$0x3]
    %v1471 = vld [vmem:[#allocation5] sm:$0x3]
    %v1473 = vsel %vm108, %v1471, 0
    %1475 = vmatpush.msra.mxu0 0.0
    %1476 = vmatpush.msra.mxu0 0.0
    %1477 = vmatpush.msra.mxu0 0.0
    %1478 = vmatpush.msra.mxu0 0.0
    %1479 = vmatpush.msra.mxu0 0.0
    %1480 = vmatpush.msra.mxu0 0.0
    %1481 = vmatpush.msra.mxu0 0.0
    %1482 = vmatpush.msra.mxu0 0.0
    %1483 = vmatpush.msra.mxu0 0.0
    %1484 = vmatpush.msra.mxu0 0.0
    %1485 = vmatpush.msra.mxu0 0.0
    %1486 = vmatpush.msra.mxu0 0.0
    %1487 = vmatpush.msra.mxu0 %v1467
    %1488 = vmatpush.msra.mxu0 %v1466
    %1489 = vmatpush.msra.mxu0 %v1465
    %1490 = vmatpush.msra.mxu0 %v1464
    %1491 = vmatmul.f32.gmra.mxu0 %v1473
    %v1492 = vpop.f32.mrf.mxu0
    %v1493 = vadd.f32 0.0, %v1492
    %1494 = vdwg.mxu0
    %v1495 = vadd.f32 %v1470, %v1493
    %v1496 = vxor.u32 %v1495, 2147483648
    %v1497 = vmul.f32 %v1496, 1.442695
    %v1498 = vpow.pop %v1497
    %v1499 = vadd.f32 %v1498, 1.0
    %v1500 = vrcp.pop %v1499
    %v1501 = vmul.f32 %v1499, %v1500
    %v1502 = vsub.f32 1.0, %v1501
    %v1503 = vmul.f32 %v1500, %v1502
    %v1504 = vadd.f32 %v1500, %v1503
    %vm1505 = vweird.f32 %v1499
    %vm1506 = vweird.f32 %v1500
    %vm1507 = vmor %vm1505, %vm1506
    %v1508 = vsel %vm1507, %v1500, %v1504
    %v1509 = vand.u32 2147483647, %v1499
    %vm1510 = vcmp.eq.f32.partialorder %v1509, 8.507059e+37
    %v1511 = vand.u32 %v1499, 2147483648
    %v1512 = vor.u32 1.1754944e-38, %v1511
    %v1513 = vsel %vm1510, %v1512, %v1508
    %v1514 = vmul.f32 1.0, %v1513
    %v1515 = vtanh.pop %v1495
    %v1516 = vld [vmem:[#allocation6] sm:$0x3]
    %1518 = vrot.lane.b32.xlu0 %v1516, 32
    %v1519 = vpop.permute.xlu0 %1518
    %v1521 = vmul.f32 %v1514, %v1519
    %1523 = vrot.lane.b32.xlu0 %v1515, 64
    %v1524 = vpop.permute.xlu0 %1523
    %v1526 = vmul.f32 %v1514, %v1524
    %1528 = vrot.lane.b32.xlu0 %v1526, 32
    %v1529 = vpop.permute.xlu0 %1528
    %v1531 = vadd.f32 %v1521, %v1529
    %v1532 = vtanh.pop %v1531
    %1534 = vrot.lane.b32.xlu0 %v1532, 64
    %v1535 = vpop.permute.xlu0 %1534
    %v1537 = vmul.f32 %v1514, %v1535
    %1539 = vrot.lane.b32.xlu0 %v1531, 96
    %v1540 = vpop.permute.xlu0 %1539
    %1542 = vst.msk [vmem:[#allocation6] sm:$0x3] %vm103, %v1540
    %1544 = vrot.lane.b32.xlu0 %v1537, 32
    %v1545 = vpop.permute.xlu0 %1544
    %1547 = vst.msk [vmem:[#allocation5] sm:$0x3] %vm103, %v1545
    %vm1548 = vcmask 253952
    %1549 = vst.msk [vmem:[#allocation4] sm:$0x1] %vm1548, %v1545
    %vm1550 = vcmask 254977
    %1551 = vst.msk [vmem:[#allocation4 + $0x7] sm:$0x2] %vm1550, %v1545
    %v1552 = vld [vmem:[#allocation2 + $0x2] sm:$0x3]
    %v1553 = vld [vmem:[#allocation5] sm:$0x3]
    %v1555 = vsel %vm108, %v1553, 0
    %1557 = vmatpush.msra.mxu0 0.0
    %1558 = vmatpush.msra.mxu0 0.0
    %1559 = vmatpush.msra.mxu0 0.0
    %1560 = vmatpush.msra.mxu0 0.0
    %1561 = vmatpush.msra.mxu0 0.0
    %1562 = vmatpush.msra.mxu0 0.0
    %1563 = vmatpush.msra.mxu0 0.0
    %1564 = vmatpush.msra.mxu0 0.0
    %1565 = vmatpush.msra.mxu0 0.0
    %1566 = vmatpush.msra.mxu0 0.0
    %1567 = vmatpush.msra.mxu0 0.0
    %1568 = vmatpush.msra.mxu0 0.0
    %1569 = vmatpush.msra.mxu0 %v1467
    %1570 = vmatpush.msra.mxu0 %v1466
    %1571 = vmatpush.msra.mxu0 %v1465
    %1572 = vmatpush.msra.mxu0 %v1464
    %1573 = vmatmul.f32.gmra.mxu0 %v1555
    %v1574 = vpop.f32.mrf.mxu0
    %v1575 = vadd.f32 0.0, %v1574
    %1576 = vdwg.mxu0
    %v1577 = vadd.f32 %v1552, %v1575
    %v1578 = vxor.u32 %v1577, 2147483648
    %v1579 = vmul.f32 %v1578, 1.442695
    %v1580 = vpow.pop %v1579
    %v1581 = vadd.f32 %v1580, 1.0
    %v1582 = vrcp.pop %v1581
    %v1583 = vmul.f32 %v1581, %v1582
    %v1584 = vsub.f32 1.0, %v1583
    %v1585 = vmul.f32 %v1582, %v1584
    %v1586 = vadd.f32 %v1582, %v1585
    %vm1587 = vweird.f32 %v1581
    %vm1588 = vweird.f32 %v1582
    %vm1589 = vmor %vm1587, %vm1588
    %v1590 = vsel %vm1589, %v1582, %v1586
    %v1591 = vand.u32 2147483647, %v1581
    %vm1592 = vcmp.eq.f32.partialorder %v1591, 8.507059e+37
    %v1593 = vand.u32 %v1581, 2147483648
    %v1594 = vor.u32 1.1754944e-38, %v1593
    %v1595 = vsel %vm1592, %v1594, %v1590
    %v1596 = vmul.f32 1.0, %v1595
    %v1597 = vtanh.pop %v1577
    %v1598 = vld [vmem:[#allocation6] sm:$0x3]
    %1600 = vrot.lane.b32.xlu0 %v1598, 32
    %v1601 = vpop.permute.xlu0 %1600
    %v1603 = vmul.f32 %v1596, %v1601
    %1605 = vrot.lane.b32.xlu0 %v1597, 64
    %v1606 = vpop.permute.xlu0 %1605
    %v1608 = vmul.f32 %v1596, %v1606
    %1610 = vrot.lane.b32.xlu0 %v1608, 32
    %v1611 = vpop.permute.xlu0 %1610
    %v1613 = vadd.f32 %v1603, %v1611
    %v1614 = vtanh.pop %v1613
    %1616 = vrot.lane.b32.xlu0 %v1614, 64
    %v1617 = vpop.permute.xlu0 %1616
    %v1619 = vmul.f32 %v1596, %v1617
    %1621 = vrot.lane.b32.xlu0 %v1613, 96
    %v1622 = vpop.permute.xlu0 %1621
    %1624 = vst.msk [vmem:[#allocation6] sm:$0x3] %vm103, %v1622
    %1626 = vrot.lane.b32.xlu0 %v1619, 32
    %v1627 = vpop.permute.xlu0 %1626
    %1629 = vst.msk [vmem:[#allocation5] sm:$0x3] %vm103, %v1627
    %1630 = vst.msk [vmem:[#allocation4 + $0x1] sm:$0x1] %vm1548, %v1627
    %1631 = vst.msk [vmem:[#allocation4 + $0x8] sm:$0x2] %vm1550, %v1627
    %v1632 = vld [vmem:[#allocation2 + $0x4] sm:$0x3]
    %v1633 = vld [vmem:[#allocation5] sm:$0x3]
    %v1635 = vsel %vm108, %v1633, 0
    %1637 = vmatpush.msra.mxu0 0.0
    %1638 = vmatpush.msra.mxu0 0.0
    %1639 = vmatpush.msra.mxu0 0.0
    %1640 = vmatpush.msra.mxu0 0.0
    %1641 = vmatpush.msra.mxu0 0.0
    %1642 = vmatpush.msra.mxu0 0.0
    %1643 = vmatpush.msra.mxu0 0.0
    %1644 = vmatpush.msra.mxu0 0.0
    %1645 = vmatpush.msra.mxu0 0.0
    %1646 = vmatpush.msra.mxu0 0.0
    %1647 = vmatpush.msra.mxu0 0.0
    %1648 = vmatpush.msra.mxu0 0.0
    %1649 = vmatpush.msra.mxu0 %v1467
    %1650 = vmatpush.msra.mxu0 %v1466
    %1651 = vmatpush.msra.mxu0 %v1465
    %1652 = vmatpush.msra.mxu0 %v1464
    %1653 = vmatmul.f32.gmra.mxu0 %v1635
    %v1654 = vpop.f32.mrf.mxu0
    %v1655 = vadd.f32 0.0, %v1654
    %1656 = vdwg.mxu0
    %v1657 = vadd.f32 %v1632, %v1655
    %v1658 = vxor.u32 %v1657, 2147483648
    %v1659 = vmul.f32 %v1658, 1.442695
    %v1660 = vpow.pop %v1659
    %v1661 = vadd.f32 %v1660, 1.0
    %v1662 = vrcp.pop %v1661
    %v1663 = vmul.f32 %v1661, %v1662
    %v1664 = vsub.f32 1.0, %v1663
    %v1665 = vmul.f32 %v1662, %v1664
    %v1666 = vadd.f32 %v1662, %v1665
    %vm1667 = vweird.f32 %v1661
    %vm1668 = vweird.f32 %v1662
    %vm1669 = vmor %vm1667, %vm1668
    %v1670 = vsel %vm1669, %v1662, %v1666
    %v1671 = vand.u32 2147483647, %v1661
    %vm1672 = vcmp.eq.f32.partialorder %v1671, 8.507059e+37
    %v1673 = vand.u32 %v1661, 2147483648
    %v1674 = vor.u32 1.1754944e-38, %v1673
    %v1675 = vsel %vm1672, %v1674, %v1670
    %v1676 = vmul.f32 1.0, %v1675
    %v1677 = vtanh.pop %v1657
    %v1678 = vld [vmem:[#allocation6] sm:$0x3]
    %1680 = vrot.lane.b32.xlu0 %v1678, 32
    %v1681 = vpop.permute.xlu0 %1680
    %v1683 = vmul.f32 %v1676, %v1681
    %1685 = vrot.lane.b32.xlu0 %v1677, 64
    %v1686 = vpop.permute.xlu0 %1685
    %v1688 = vmul.f32 %v1676, %v1686
    %1690 = vrot.lane.b32.xlu0 %v1688, 32
    %v1691 = vpop.permute.xlu0 %1690
    %v1693 = vadd.f32 %v1683, %v1691
    %v1694 = vtanh.pop %v1693
    %1696 = vrot.lane.b32.xlu0 %v1694, 64
    %v1697 = vpop.permute.xlu0 %1696
    %v1699 = vmul.f32 %v1676, %v1697
    %1701 = vrot.lane.b32.xlu0 %v1693, 96
    %v1702 = vpop.permute.xlu0 %1701
    %1704 = vst.msk [vmem:[#allocation6] sm:$0x3] %vm103, %v1702
    %1706 = vrot.lane.b32.xlu0 %v1699, 32
    %v1707 = vpop.permute.xlu0 %1706
    %1709 = vst.msk [vmem:[#allocation5] sm:$0x3] %vm103, %v1707
    %1710 = vst.msk [vmem:[#allocation4 + $0x2] sm:$0x1] %vm1548, %v1707
    %1711 = vst.msk [vmem:[#allocation4 + $0x9] sm:$0x2] %vm1550, %v1707
    %v1712 = vld [vmem:[#allocation2 + $0x6] sm:$0x3]
    %v1713 = vld [vmem:[#allocation5] sm:$0x3]
    %v1715 = vsel %vm108, %v1713, 0
    %1717 = vmatpush.msra.mxu0 0.0
    %1718 = vmatpush.msra.mxu0 0.0
    %1719 = vmatpush.msra.mxu0 0.0
    %1720 = vmatpush.msra.mxu0 0.0
    %1721 = vmatpush.msra.mxu0 0.0
    %1722 = vmatpush.msra.mxu0 0.0
    %1723 = vmatpush.msra.mxu0 0.0
    %1724 = vmatpush.msra.mxu0 0.0
    %1725 = vmatpush.msra.mxu0 0.0
    %1726 = vmatpush.msra.mxu0 0.0
    %1727 = vmatpush.msra.mxu0 0.0
    %1728 = vmatpush.msra.mxu0 0.0
    %1729 = vmatpush.msra.mxu0 %v1467
    %1730 = vmatpush.msra.mxu0 %v1466
    %1731 = vmatpush.msra.mxu0 %v1465
    %1732 = vmatpush.msra.mxu0 %v1464
    %1733 = vmatmul.f32.gmra.mxu0 %v1715
    %v1734 = vpop.f32.mrf.mxu0
    %v1735 = vadd.f32 0.0, %v1734
    %1736 = vdwg.mxu0
    %v1737 = vadd.f32 %v1712, %v1735
    %v1738 = vxor.u32 %v1737, 2147483648
    %v1739 = vmul.f32 %v1738, 1.442695
    %v1740 = vpow.pop %v1739
    %v1741 = vadd.f32 %v1740, 1.0
    %v1742 = vrcp.pop %v1741
    %v1743 = vmul.f32 %v1741, %v1742
    %v1744 = vsub.f32 1.0, %v1743
    %v1745 = vmul.f32 %v1742, %v1744
    %v1746 = vadd.f32 %v1742, %v1745
    %vm1747 = vweird.f32 %v1741
    %vm1748 = vweird.f32 %v1742
    %vm1749 = vmor %vm1747, %vm1748
    %v1750 = vsel %vm1749, %v1742, %v1746
    %v1751 = vand.u32 2147483647, %v1741
    %vm1752 = vcmp.eq.f32.partialorder %v1751, 8.507059e+37
    %v1753 = vand.u32 %v1741, 2147483648
    %v1754 = vor.u32 1.1754944e-38, %v1753
    %v1755 = vsel %vm1752, %v1754, %v1750
    %v1756 = vmul.f32 1.0, %v1755
    %v1757 = vtanh.pop %v1737
    %v1758 = vld [vmem:[#allocation6] sm:$0x3]
    %1760 = vrot.lane.b32.xlu0 %v1758, 32
    %v1761 = vpop.permute.xlu0 %1760
    %v1763 = vmul.f32 %v1756, %v1761
    %1765 = vrot.lane.b32.xlu0 %v1757, 64
    %v1766 = vpop.permute.xlu0 %1765
    %v1768 = vmul.f32 %v1756, %v1766
    %1770 = vrot.lane.b32.xlu0 %v1768, 32
    %v1771 = vpop.permute.xlu0 %1770
    %v1773 = vadd.f32 %v1763, %v1771
    %v1774 = vtanh.pop %v1773
    %1776 = vrot.lane.b32.xlu0 %v1774, 64
    %v1777 = vpop.permute.xlu0 %1776
    %v1779 = vmul.f32 %v1756, %v1777
    %1781 = vrot.lane.b32.xlu0 %v1773, 96
    %v1782 = vpop.permute.xlu0 %1781
    %1784 = vst.msk [vmem:[#allocation6] sm:$0x3] %vm103, %v1782
    %1786 = vrot.lane.b32.xlu0 %v1779, 32
    %v1787 = vpop.permute.xlu0 %1786
    %1789 = vst.msk [vmem:[#allocation5] sm:$0x3] %vm103, %v1787
    %1790 = vst.msk [vmem:[#allocation4 + $0x3] sm:$0x1] %vm1548, %v1787
    %1791 = vst.msk [vmem:[#allocation4 + $0xa] sm:$0x2] %vm1550, %v1787
    %v1792 = vld [vmem:[#allocation2 + $0x8] sm:$0x3]
    %v1793 = vld [vmem:[#allocation5] sm:$0x3]
    %v1795 = vsel %vm108, %v1793, 0
    %1797 = vmatpush.msra.mxu0 0.0
    %1798 = vmatpush.msra.mxu0 0.0
    %1799 = vmatpush.msra.mxu0 0.0
    %1800 = vmatpush.msra.mxu0 0.0
    %1801 = vmatpush.msra.mxu0 0.0
    %1802 = vmatpush.msra.mxu0 0.0
    %1803 = vmatpush.msra.mxu0 0.0
    %1804 = vmatpush.msra.mxu0 0.0
    %1805 = vmatpush.msra.mxu0 0.0
    %1806 = vmatpush.msra.mxu0 0.0
    %1807 = vmatpush.msra.mxu0 0.0
    %1808 = vmatpush.msra.mxu0 0.0
    %1809 = vmatpush.msra.mxu0 %v1467
    %1810 = vmatpush.msra.mxu0 %v1466
    %1811 = vmatpush.msra.mxu0 %v1465
    %1812 = vmatpush.msra.mxu0 %v1464
    %1813 = vmatmul.f32.gmra.mxu0 %v1795
    %v1814 = vpop.f32.mrf.mxu0
    %v1815 = vadd.f32 0.0, %v1814
    %1816 = vdwg.mxu0
    %v1817 = vadd.f32 %v1792, %v1815
    %v1818 = vxor.u32 %v1817, 2147483648
    %v1819 = vmul.f32 %v1818, 1.442695
    %v1820 = vpow.pop %v1819
    %v1821 = vadd.f32 %v1820, 1.0
    %v1822 = vrcp.pop %v1821
    %v1823 = vmul.f32 %v1821, %v1822
    %v1824 = vsub.f32 1.0, %v1823
    %v1825 = vmul.f32 %v1822, %v1824
    %v1826 = vadd.f32 %v1822, %v1825
    %vm1827 = vweird.f32 %v1821
    %vm1828 = vweird.f32 %v1822
    %vm1829 = vmor %vm1827, %vm1828
    %v1830 = vsel %vm1829, %v1822, %v1826
    %v1831 = vand.u32 2147483647, %v1821
    %vm1832 = vcmp.eq.f32.partialorder %v1831, 8.507059e+37
    %v1833 = vand.u32 %v1821, 2147483648
    %v1834 = vor.u32 1.1754944e-38, %v1833
    %v1835 = vsel %vm1832, %v1834, %v1830
    %v1836 = vmul.f32 1.0, %v1835
    %v1837 = vtanh.pop %v1817
    %v1838 = vld [vmem:[#allocation6] sm:$0x3]
    %1840 = vrot.lane.b32.xlu0 %v1838, 32
    %v1841 = vpop.permute.xlu0 %1840
    %v1843 = vmul.f32 %v1836, %v1841
    %1845 = vrot.lane.b32.xlu0 %v1837, 64
    %v1846 = vpop.permute.xlu0 %1845
    %v1848 = vmul.f32 %v1836, %v1846
    %1850 = vrot.lane.b32.xlu0 %v1848, 32
    %v1851 = vpop.permute.xlu0 %1850
    %v1853 = vadd.f32 %v1843, %v1851
    %v1854 = vtanh.pop %v1853
    %1856 = vrot.lane.b32.xlu0 %v1854, 64
    %v1857 = vpop.permute.xlu0 %1856
    %v1859 = vmul.f32 %v1836, %v1857
    %1861 = vrot.lane.b32.xlu0 %v1853, 96
    %v1862 = vpop.permute.xlu0 %1861
    %1864 = vst.msk [vmem:[#allocation6] sm:$0x3] %vm103, %v1862
    %1866 = vrot.lane.b32.xlu0 %v1859, 32
    %v1867 = vpop.permute.xlu0 %1866
    %1869 = vst.msk [vmem:[#allocation5] sm:$0x3] %vm103, %v1867
    %1870 = vst.msk [vmem:[#allocation4 + $0x4] sm:$0x1] %vm1548, %v1867
    %1871 = vst.msk [vmem:[#allocation4 + $0xb] sm:$0x2] %vm1550, %v1867
    %v1872 = vld [vmem:[#allocation2 + $0xa] sm:$0x3]
    %v1873 = vld [vmem:[#allocation5] sm:$0x3]
    %v1875 = vsel %vm108, %v1873, 0
    %1877 = vmatpush.msra.mxu0 0.0
    %1878 = vmatpush.msra.mxu0 0.0
    %1879 = vmatpush.msra.mxu0 0.0
    %1880 = vmatpush.msra.mxu0 0.0
    %1881 = vmatpush.msra.mxu0 0.0
    %1882 = vmatpush.msra.mxu0 0.0
    %1883 = vmatpush.msra.mxu0 0.0
    %1884 = vmatpush.msra.mxu0 0.0
    %1885 = vmatpush.msra.mxu0 0.0
    %1886 = vmatpush.msra.mxu0 0.0
    %1887 = vmatpush.msra.mxu0 0.0
    %1888 = vmatpush.msra.mxu0 0.0
    %1889 = vmatpush.msra.mxu0 %v1467
    %1890 = vmatpush.msra.mxu0 %v1466
    %1891 = vmatpush.msra.mxu0 %v1465
    %1892 = vmatpush.msra.mxu0 %v1464
    %1893 = vmatmul.f32.gmra.mxu0 %v1875
    %v1894 = vpop.f32.mrf.mxu0
    %v1895 = vadd.f32 0.0, %v1894
    %1896 = vdwg.mxu0
    %v1897 = vadd.f32 %v1872, %v1895
    %v1898 = vxor.u32 %v1897, 2147483648
    %v1899 = vmul.f32 %v1898, 1.442695
    %v1900 = vpow.pop %v1899
    %v1901 = vadd.f32 %v1900, 1.0
    %v1902 = vrcp.pop %v1901
    %v1903 = vmul.f32 %v1901, %v1902
    %v1904 = vsub.f32 1.0, %v1903
    %v1905 = vmul.f32 %v1902, %v1904
    %v1906 = vadd.f32 %v1902, %v1905
    %vm1907 = vweird.f32 %v1901
    %vm1908 = vweird.f32 %v1902
    %vm1909 = vmor %vm1907, %vm1908
    %v1910 = vsel %vm1909, %v1902, %v1906
    %v1911 = vand.u32 2147483647, %v1901
    %vm1912 = vcmp.eq.f32.partialorder %v1911, 8.507059e+37
    %v1913 = vand.u32 %v1901, 2147483648
    %v1914 = vor.u32 1.1754944e-38, %v1913
    %v1915 = vsel %vm1912, %v1914, %v1910
    %v1916 = vmul.f32 1.0, %v1915
    %v1917 = vtanh.pop %v1897
    %v1918 = vld [vmem:[#allocation6] sm:$0x3]
    %1920 = vrot.lane.b32.xlu0 %v1918, 32
    %v1921 = vpop.permute.xlu0 %1920
    %v1923 = vmul.f32 %v1916, %v1921
    %1925 = vrot.lane.b32.xlu0 %v1917, 64
    %v1926 = vpop.permute.xlu0 %1925
    %v1928 = vmul.f32 %v1916, %v1926
    %1930 = vrot.lane.b32.xlu0 %v1928, 32
    %v1931 = vpop.permute.xlu0 %1930
    %v1933 = vadd.f32 %v1923, %v1931
    %v1934 = vtanh.pop %v1933
    %1936 = vrot.lane.b32.xlu0 %v1934, 64
    %v1937 = vpop.permute.xlu0 %1936
    %v1939 = vmul.f32 %v1916, %v1937
    %1941 = vrot.lane.b32.xlu0 %v1933, 96
    %v1942 = vpop.permute.xlu0 %1941
    %1944 = vst.msk [vmem:[#allocation6] sm:$0x3] %vm103, %v1942
    %1946 = vrot.lane.b32.xlu0 %v1939, 32
    %v1947 = vpop.permute.xlu0 %1946
    %1949 = vst.msk [vmem:[#allocation5] sm:$0x3] %vm103, %v1947
    %1950 = vst.msk [vmem:[#allocation4 + $0x5] sm:$0x1] %vm1548, %v1947
    %1951 = vst.msk [vmem:[#allocation4 + $0xc] sm:$0x2] %vm1550, %v1947
    %v1952 = vld [vmem:[#allocation2 + $0xc] sm:$0x3]
    %v1953 = vld [vmem:[#allocation5] sm:$0x3]
    %v1955 = vsel %vm108, %v1953, 0
    %1957 = vmatpush.msra.mxu0 0.0
    %1958 = vmatpush.msra.mxu0 0.0
    %1959 = vmatpush.msra.mxu0 0.0
    %1960 = vmatpush.msra.mxu0 0.0
    %1961 = vmatpush.msra.mxu0 0.0
    %1962 = vmatpush.msra.mxu0 0.0
    %1963 = vmatpush.msra.mxu0 0.0
    %1964 = vmatpush.msra.mxu0 0.0
    %1965 = vmatpush.msra.mxu0 0.0
    %1966 = vmatpush.msra.mxu0 0.0
    %1967 = vmatpush.msra.mxu0 0.0
    %1968 = vmatpush.msra.mxu0 0.0
    %1969 = vmatpush.msra.mxu0 %v1467
    %1970 = vmatpush.msra.mxu0 %v1466
    %1971 = vmatpush.msra.mxu0 %v1465
    %1972 = vmatpush.msra.mxu0 %v1464
    %1973 = vmatmul.f32.gmra.mxu0 %v1955
    %v1974 = vpop.f32.mrf.mxu0
    %v1975 = vadd.f32 0.0, %v1974
    %1976 = vdwg.mxu0
    %v1977 = vadd.f32 %v1952, %v1975
    %v1978 = vxor.u32 %v1977, 2147483648
    %v1979 = vmul.f32 %v1978, 1.442695
    %v1980 = vpow.pop %v1979
    %v1981 = vadd.f32 %v1980, 1.0
    %v1982 = vrcp.pop %v1981
    %v1983 = vmul.f32 %v1981, %v1982
    %v1984 = vsub.f32 1.0, %v1983
    %v1985 = vmul.f32 %v1982, %v1984
    %v1986 = vadd.f32 %v1982, %v1985
    %vm1987 = vweird.f32 %v1981
    %vm1988 = vweird.f32 %v1982
    %vm1989 = vmor %vm1987, %vm1988
    %v1990 = vsel %vm1989, %v1982, %v1986
    %v1991 = vand.u32 2147483647, %v1981
    %vm1992 = vcmp.eq.f32.partialorder %v1991, 8.507059e+37
    %v1993 = vand.u32 %v1981, 2147483648
    %v1994 = vor.u32 1.1754944e-38, %v1993
    %v1995 = vsel %vm1992, %v1994, %v1990
    %v1996 = vmul.f32 1.0, %v1995
    %v1997 = vtanh.pop %v1977
    %v1998 = vld [vmem:[#allocation6] sm:$0x3]
    %2000 = vrot.lane.b32.xlu0 %v1998, 32
    %v2001 = vpop.permute.xlu0 %2000
    %v2003 = vmul.f32 %v1996, %v2001
    %2005 = vrot.lane.b32.xlu0 %v1997, 64
    %v2006 = vpop.permute.xlu0 %2005
    %v2008 = vmul.f32 %v1996, %v2006
    %2010 = vrot.lane.b32.xlu0 %v2008, 32
    %v2011 = vpop.permute.xlu0 %2010
    %v2013 = vadd.f32 %v2003, %v2011
    %v2014 = vtanh.pop %v2013
    %2016 = vrot.lane.b32.xlu0 %v2014, 64
    %v2017 = vpop.permute.xlu0 %2016
    %v2019 = vmul.f32 %v1996, %v2017
    %2021 = vrot.lane.b32.xlu0 %v2013, 96
    %v2022 = vpop.permute.xlu0 %2021
    %2024 = vst.msk [vmem:[#allocation6] sm:$0x3] %vm103, %v2022
    %2026 = vrot.lane.b32.xlu0 %v2019, 32
    %v2027 = vpop.permute.xlu0 %2026
    %2029 = vst.msk [vmem:[#allocation5] sm:$0x3] %vm103, %v2027
    %2030 = vst.msk [vmem:[#allocation4 + $0x6] sm:$0x1] %vm1548, %v2027
    %2031 = vst.msk [vmem:[#allocation4 + $0xd] sm:$0x2] %vm1550, %v2027
    %v2032 = vld [vmem:[#allocation2 + $0xe] sm:$0x3]
    %v2033 = vld [vmem:[#allocation5] sm:$0x3]
    %v2035 = vsel %vm108, %v2033, 0
    %2037 = vmatpush.msra.mxu0 0.0
    %2038 = vmatpush.msra.mxu0 0.0
    %2039 = vmatpush.msra.mxu0 0.0
    %2040 = vmatpush.msra.mxu0 0.0
    %2041 = vmatpush.msra.mxu0 0.0
    %2042 = vmatpush.msra.mxu0 0.0
    %2043 = vmatpush.msra.mxu0 0.0
    %2044 = vmatpush.msra.mxu0 0.0
    %2045 = vmatpush.msra.mxu0 0.0
    %2046 = vmatpush.msra.mxu0 0.0
    %2047 = vmatpush.msra.mxu0 0.0
    %2048 = vmatpush.msra.mxu0 0.0
    %2049 = vmatpush.msra.mxu0 %v1467
    %2050 = vmatpush.msra.mxu0 %v1466
    %2051 = vmatpush.msra.mxu0 %v1465
    %2052 = vmatpush.msra.mxu0 %v1464
    %2053 = vmatmul.f32.gmra.mxu0 %v2035
    %v2054 = vpop.f32.mrf.mxu0
    %v2055 = vadd.f32 0.0, %v2054
    %2056 = vdwg.mxu0
    %v2057 = vadd.f32 %v2032, %v2055
    %v2058 = vxor.u32 %v2057, 2147483648
    %v2059 = vmul.f32 %v2058, 1.442695
    %v2060 = vpow.pop %v2059
    %v2061 = vadd.f32 %v2060, 1.0
    %v2062 = vrcp.pop %v2061
    %v2063 = vmul.f32 %v2061, %v2062
    %v2064 = vsub.f32 1.0, %v2063
    %v2065 = vmul.f32 %v2062, %v2064
    %v2066 = vadd.f32 %v2062, %v2065
    %vm2067 = vweird.f32 %v2061
    %vm2068 = vweird.f32 %v2062
    %vm2069 = vmor %vm2067, %vm2068
    %v2070 = vsel %vm2069, %v2062, %v2066
    %v2071 = vand.u32 2147483647, %v2061
    %vm2072 = vcmp.eq.f32.partialorder %v2071, 8.507059e+37
    %v2073 = vand.u32 %v2061, 2147483648
    %v2074 = vor.u32 1.1754944e-38, %v2073
    %v2075 = vsel %vm2072, %v2074, %v2070
    %v2076 = vmul.f32 1.0, %v2075
    %v2077 = vtanh.pop %v2057
    %v2078 = vld [vmem:[#allocation6] sm:$0x3]
    %2080 = vrot.lane.b32.xlu0 %v2078, 32
    %v2081 = vpop.permute.xlu0 %2080
    %v2083 = vmul.f32 %v2076, %v2081
    %2085 = vrot.lane.b32.xlu0 %v2077, 64
    %v2086 = vpop.permute.xlu0 %2085
    %v2088 = vmul.f32 %v2076, %v2086
    %2090 = vrot.lane.b32.xlu0 %v2088, 32
    %v2091 = vpop.permute.xlu0 %2090
    %v2093 = vadd.f32 %v2083, %v2091
    %v2094 = vtanh.pop %v2093
    %2096 = vrot.lane.b32.xlu0 %v2094, 64
    %v2097 = vpop.permute.xlu0 %2096
    %v2099 = vmul.f32 %v2076, %v2097
    %2101 = vrot.lane.b32.xlu0 %v2093, 96
    %v2102 = vpop.permute.xlu0 %2101
    %2104 = vst.msk [vmem:[#allocation6] sm:$0x3] %vm103, %v2102
    %2106 = vrot.lane.b32.xlu0 %v2099, 32
    %v2107 = vpop.permute.xlu0 %2106
    %2109 = vst.msk [vmem:[#allocation5] sm:$0x3] %vm103, %v2107
    %2110 = vst.msk [vmem:[#allocation4 + $0x7] sm:$0x1] %vm1548, %v2107
    %2111 = vst.msk [vmem:[#allocation4 + $0xe] sm:$0x2] %vm1550, %v2107
    %v2112 = vld [vmem:[%s5] sm:$0x1]
    %s2113 = sld [smem:[#allocation7]]
    %v2114 = vld [vmem:[#allocation4] sm:$0xff]
    %v2116 = vsel %vm108, %v2114, 0
    %2118 = vmatpush.xpose.msra.mxu0 0.0
    %2119 = vmatpush.xpose.msra.mxu0 0.0
    %2120 = vmatpush.xpose.msra.mxu0 0.0
    %2121 = vmatpush.xpose.msra.mxu0 0.0
    %2122 = vmatpush.xpose.msra.mxu0 0.0
    %2123 = vmatpush.xpose.msra.mxu0 0.0
    %2124 = vmatpush.xpose.msra.mxu0 0.0
    %2125 = vmatpush.xpose.msra.mxu0 0.0
    %2126 = vmatpush.xpose.msra.mxu0 0.0
    %2127 = vmatpush.xpose.msra.mxu0 0.0
    %2128 = vmatpush.xpose.msra.mxu0 0.0
    %2129 = vmatpush.xpose.msra.mxu0 0.0
    %2130 = vmatpush.xpose.msra.mxu0 0.0
    %2131 = vmatpush.xpose.msra.mxu0 0.0
    %2132 = vmatpush.xpose.msra.mxu0 0.0
    %2133 = vmatpush.xpose.msra.mxu0 %v2116
    %2134 = vmatmul.f32.gmra.mxu0 %v2116
    %v2135 = vpop.f32.mrf.mxu0
    %v2136 = vadd.f32 0.0, %v2135
    %2137 = vdwg.mxu0
    %v2138 = vmul.f32 %v2136, 0.17677669
    %vm2139 = vcmask 64512
    %v2140 = vsel %vm2139, %v2138, -inf
    %2141 = vmax.xlane.f32.xlu0 %v2140
    %v2142 = vpop.xlane.xlu0 %2141
    %v2143 = vsub.f32 %v2138, %v2142
    %v2144 = vmul.f32 %v2143, 1.442695
    %v2145 = vpow.pop %v2144
    %v2146 = vsel %vm2139, %v2145, 0.0
    %2147 = vadd.xlane.f32.xlu0 %v2146
    %v2148 = vpop.xlane.xlu0 %2147
    %v2149 = vrcp.pop %v2148
    %v2150 = vmul.f32 %v2145, %v2149
    %v2151 = vsel %vm108, %v2114, 0.0
    %2152 = vadd.xlane.f32.xlu0 %v2151
    %v2153 = vpop.xlane.xlu0 %2152
    %v2155 = vsel %vm2139, %v2112, 0
    %2157 = vmatpush.msra.mxu0 0.0
    %2158 = vmatpush.msra.mxu0 0.0
    %2159 = vmatpush.msra.mxu0 0.0
    %2160 = vmatpush.msra.mxu0 0.0
    %2161 = vmatpush.msra.mxu0 0.0
    %2162 = vmatpush.msra.mxu0 0.0
    %2163 = vmatpush.msra.mxu0 0.0
    %2164 = vmatpush.msra.mxu0 0.0
    %2165 = vmatpush.msra.mxu0 0.0
    %2166 = vmatpush.msra.mxu0 0.0
    %2167 = vmatpush.msra.mxu0 0.0
    %2168 = vmatpush.msra.mxu0 0.0
    %2169 = vmatpush.msra.mxu0 0.0
    %2170 = vmatpush.msra.mxu0 0.0
    %2171 = vmatpush.msra.mxu0 0.0
    %2172 = vmatpush.msra.mxu0 %v2150
    %2173 = vmatmul.f32.gmra.mxu0 %v2155
    %v2174 = vpop.f32.mrf.mxu0
    %v2175 = vadd.f32 0.0, %v2174
    %2176 = vdwg.mxu0
    %v2177 = vstv %s2113
    %v2179 = vsel %vm2139, %v2175, 0
    %2181 = vmatpush.msra.mxu0 0.0
    %2182 = vmatpush.msra.mxu0 0.0
    %2183 = vmatpush.msra.mxu0 0.0
    %2184 = vmatpush.msra.mxu0 0.0
    %2185 = vmatpush.msra.mxu0 0.0
    %2186 = vmatpush.msra.mxu0 0.0
    %2187 = vmatpush.msra.mxu0 0.0
    %2188 = vmatpush.msra.mxu0 0.0
    %2189 = vmatpush.msra.mxu0 0.0
    %2190 = vmatpush.msra.mxu0 0.0
    %2191 = vmatpush.msra.mxu0 0.0
    %2192 = vmatpush.msra.mxu0 0.0
    %2193 = vmatpush.msra.mxu0 0.0
    %2194 = vmatpush.msra.mxu0 0.0
    %2195 = vmatpush.msra.mxu0 0.0
    %2196 = vmatpush.msra.mxu0 %v2153
    %2197 = vmatmul.f32.gmra.mxu0 %v2179
    %v2198 = vpop.f32.mrf.mxu0
    %v2199 = vadd.f32 %v2177, %v2198
    %2200 = vdwg.mxu0
    %vm2201 = vcmask 0
    %2202 = vst.msk [vmem:[%s7] sm:$0x1] %vm2201, %v2199
    %v2203 = vld [vmem:[#allocation4 + $0x8] sm:$0xff]
    %v2205 = vsel %vm108, %v2203, 0
    %2207 = vmatpush.xpose.msra.mxu0 0.0
    %2208 = vmatpush.xpose.msra.mxu0 0.0
    %2209 = vmatpush.xpose.msra.mxu0 0.0
    %2210 = vmatpush.xpose.msra.mxu0 0.0
    %2211 = vmatpush.xpose.msra.mxu0 0.0
    %2212 = vmatpush.xpose.msra.mxu0 0.0
    %2213 = vmatpush.xpose.msra.mxu0 0.0
    %2214 = vmatpush.xpose.msra.mxu0 0.0
    %2215 = vmatpush.xpose.msra.mxu0 0.0
    %2216 = vmatpush.xpose.msra.mxu0 0.0
    %2217 = vmatpush.xpose.msra.mxu0 0.0
    %2218 = vmatpush.xpose.msra.mxu0 0.0
    %2219 = vmatpush.xpose.msra.mxu0 0.0
    %2220 = vmatpush.xpose.msra.mxu0 0.0
    %2221 = vmatpush.xpose.msra.mxu0 0.0
    %2222 = vmatpush.xpose.msra.mxu0 %v2205
    %2223 = vmatmul.f32.gmra.mxu0 %v2205
    %v2224 = vpop.f32.mrf.mxu0
    %v2225 = vadd.f32 0.0, %v2224
    %2226 = vdwg.mxu0
    %v2227 = vmul.f32 %v2225, 0.17677669
    %v2228 = vsel %vm2139, %v2227, -inf
    %2229 = vmax.xlane.f32.xlu0 %v2228
    %v2230 = vpop.xlane.xlu0 %2229
    %v2231 = vsub.f32 %v2227, %v2230
    %v2232 = vmul.f32 %v2231, 1.442695
    %v2233 = vpow.pop %v2232
    %v2234 = vsel %vm2139, %v2233, 0.0
    %2235 = vadd.xlane.f32.xlu0 %v2234
    %v2236 = vpop.xlane.xlu0 %2235
    %v2237 = vrcp.pop %v2236
    %v2238 = vmul.f32 %v2233, %v2237
    %v2239 = vsel %vm108, %v2203, 0.0
    %2240 = vadd.xlane.f32.xlu0 %v2239
    %v2241 = vpop.xlane.xlu0 %2240
    %2242 = vmatpush.msra.mxu0 0.0
    %2243 = vmatpush.msra.mxu0 0.0
    %2244 = vmatpush.msra.mxu0 0.0
    %2245 = vmatpush.msra.mxu0 0.0
    %2246 = vmatpush.msra.mxu0 0.0
    %2247 = vmatpush.msra.mxu0 0.0
    %2248 = vmatpush.msra.mxu0 0.0
    %2249 = vmatpush.msra.mxu0 0.0
    %2250 = vmatpush.msra.mxu0 0.0
    %2251 = vmatpush.msra.mxu0 0.0
    %2252 = vmatpush.msra.mxu0 0.0
    %2253 = vmatpush.msra.mxu0 0.0
    %2254 = vmatpush.msra.mxu0 0.0
    %2255 = vmatpush.msra.mxu0 0.0
    %2256 = vmatpush.msra.mxu0 0.0
    %2257 = vmatpush.msra.mxu0 %v2238
    %2258 = vmatmul.f32.gmra.mxu0 %v2155
    %v2259 = vpop.f32.mrf.mxu0
    %v2260 = vadd.f32 0.0, %v2259
    %2261 = vdwg.mxu0
    %v2263 = vsel %vm2139, %v2260, 0
    %2265 = vmatpush.msra.mxu0 0.0
    %2266 = vmatpush.msra.mxu0 0.0
    %2267 = vmatpush.msra.mxu0 0.0
    %2268 = vmatpush.msra.mxu0 0.0
    %2269 = vmatpush.msra.mxu0 0.0
    %2270 = vmatpush.msra.mxu0 0.0
    %2271 = vmatpush.msra.mxu0 0.0
    %2272 = vmatpush.msra.mxu0 0.0
    %2273 = vmatpush.msra.mxu0 0.0
    %2274 = vmatpush.msra.mxu0 0.0
    %2275 = vmatpush.msra.mxu0 0.0
    %2276 = vmatpush.msra.mxu0 0.0
    %2277 = vmatpush.msra.mxu0 0.0
    %2278 = vmatpush.msra.mxu0 0.0
    %2279 = vmatpush.msra.mxu0 0.0
    %2280 = vmatpush.msra.mxu0 %v2241
    %2281 = vmatmul.f32.gmra.mxu0 %v2263
    %v2282 = vpop.f32.mrf.mxu0
    %v2283 = vadd.f32 %v2177, %v2282
    %2284 = vdwg.mxu0
    %2285 = vst.msk [vmem:[%s7 + $0x1] sm:$0x1] %vm2201, %v2283
    // Predicated region
    $region38: #{talstm_forward.1} parent=1 // pred_check
      _
    $region39: #{talstm_forward.1} parent=1 // pred_check_branch
      %2287 = sbr.rel (0) target = $region41
    $region40: #{talstm_forward.1} parent=1 // pred_region
      _
    $region41: #{talstm_forward.1} parent=1 // pred_fallthru
      _
    // Predicated region
    $region42: #{talstm_forward.1} parent=1 // pred_check
      _
    $region43: #{talstm_forward.1} parent=1 // pred_check_branch
      %2289 = sbr.rel (0) target = $region45
    $region44: #{talstm_forward.1} parent=1 // pred_region
      _
    $region45: #{talstm_forward.1} parent=1 // pred_fallthru
      _
    %2290 = vsyncpa [#allocation9], 1
    %2291 = vsyncpa [#allocation11], 1

</llo_original>
